<compile_context>
chip_gen: v5e
topology: v5e:2x2
jax: 0.10.0
libtpu: 0.0.40
codegen_flags: <defaults>
</compile_context>

<pallas_src>
import math

import numpy as np
import jax
import jax.numpy as jnp
from jax.experimental import pallas as pl
from jax.experimental.pallas import tpu as pltpu


# ----------------------------------------------------------------------------
# In-kernel math helpers
# ----------------------------------------------------------------------------
def _erf_f32(x):
    """float32 erf via the XLA/Eigen rational approximation (VPU mul/add plus
    one EUP reciprocal), matches lax.erf to ~1e-4 with approx reciprocal."""
    x = jnp.clip(x, -4.0, 4.0)
    x2 = x * x
    alpha = jnp.float32(-2.72614225801306e-10)
    alpha = alpha * x2 + jnp.float32(2.77068142495902e-08)
    alpha = alpha * x2 + jnp.float32(-2.10102402082508e-06)
    alpha = alpha * x2 + jnp.float32(-5.69250639462346e-05)
    alpha = alpha * x2 + jnp.float32(-7.34990630326855e-04)
    alpha = alpha * x2 + jnp.float32(-2.95459980854025e-03)
    alpha = alpha * x2 + jnp.float32(-1.60960333262415e-02)
    beta = jnp.float32(-1.45660718464996e-05)
    beta = beta * x2 + jnp.float32(-2.13374055278905e-04)
    beta = beta * x2 + jnp.float32(-1.68282697438203e-03)
    beta = beta * x2 + jnp.float32(-7.37332916720468e-03)
    beta = beta * x2 + jnp.float32(-1.42647390514189e-02)
    # approx=True -> single EUP op in its own VLIW slot (no VALU Newton steps).
    return x * alpha * pl.reciprocal(beta, approx=True)


def _gelu_exact(x):
    """Exact (erf-based) GELU, matching torch.nn.GELU() default."""
    return 0.5 * x * (1.0 + _erf_f32(x * jnp.float32(1.0 / math.sqrt(2.0))))


# ----------------------------------------------------------------------------
# Fused encoder kernel: B_blk images per grid step, 6 dense matmuls in VMEM
# ----------------------------------------------------------------------------
def _encoder_kernel(x_ref,
                    d1, b1, d2, b2, d3, b3, d4, b4, d5, b5,
                    wl, bl, o_ref):
    # x_ref block: (B_blk, C_in*H*W), NCHW-flattened rows.
    x = x_ref[...].astype(jnp.float32)
    for d_ref, b_ref in ((d1, b1), (d2, b2), (d3, b3), (d4, b4), (d5, b5)):
        y = jnp.dot(x.astype(d_ref.dtype), d_ref[...],
                    preferred_element_type=jnp.float32) + b_ref[...]
        x = _gelu_exact(y)
    # Final Linear (flatten order already folded into wl); lane-dense 128 store.
    z = jnp.dot(x.astype(wl.dtype), wl[...],
                preferred_element_type=jnp.float32) + bl[...]
    o_ref[...] = z.astype(o_ref.dtype)


def encoder_forward(x_nchw, prep, *, latent_dim, b_blk=8):
    """Equivalent of HyraxAutoencoderV2.forward(batch). prep = prepare_encoder()."""
    B = x_nchw.shape[0]
    feat = int(np.prod(x_nchw.shape[1:]))
    latent_pad = prep["bl"].shape[-1]

    # NCHW flatten is layout-free: no transpose, the ordering lives in D_l / wl.
    x_flat = x_nchw.reshape(B, feat)

    # Batch blocking: B_blk images per grid step (amortizes per-step overhead,
    # sublane-dense output store).  On v7x pick B so the grid length is even to
    # keep both TensorCores busy.
    b_blk = max(1, min(b_blk, B))
    b_pad = pl.cdiv(B, b_blk) * b_blk
    if b_pad != B:
        x_flat = jnp.pad(x_flat, ((0, b_pad - B), (0, 0)))
    grid = (b_pad // b_blk,)

    names = ("d1", "b1", "d2", "b2", "d3", "b3", "d4", "b4", "d5", "b5",
             "wl", "bl")
    operands = [x_flat] + [prep[n] for n in names]
    in_specs = [pl.BlockSpec((b_blk, feat), lambda i: (i, 0))]
    for n in names:
        arr = prep[n]
        # Constant (VMEM-resident) operands: whole-array block, same index every step.
        in_specs.append(pl.BlockSpec(arr.shape, lambda i: (0, 0)))

    out = pl.pallas_call(
        _encoder_kernel,
        out_shape=jax.ShapeDtypeStruct((b_pad, latent_pad), jnp.float32),
        grid=grid,
        in_specs=in_specs,
        out_specs=pl.BlockSpec((b_blk, latent_pad), lambda i: (i, 0)),
        compiler_params=pltpu.CompilerParams(
            dimension_semantics=("parallel",),
            vmem_limit_bytes=32 * 1024 * 1024),
    )(*operands)

    return out[:B, :latent_dim]


# ----------------------------------------------------------------------------
# One-time parameter preparation (all folding / reshapes hoisted here)
# ----------------------------------------------------------------------------
def conv_out_size(s, stride):
    # kernel=3, padding=1, dilation=1 -> floor((s - 1)/stride) + 1
    return (s - 1) // stride + 1


def _dense_conv_operator(w_oihw, h_in, w_in, stride):
    """Fold a k=3, p=1 conv (zero padding, stride, taps, NCHW flatten) into one
    dense operator D with  y_nchw_flat = x_nchw_flat @ D."""
    c_out, c_in = w_oihw.shape[0], w_oihw.shape[1]
    h_out, w_out = conv_out_size(h_in, stride), conv_out_size(w_in, stride)
    p_in, p_out = h_in * w_in, h_out * w_out
    # 0/1 tap selection matrices S[t, p_out, p_in].
    S = np.zeros((9, p_out, p_in), np.float32)
    for kh in range(3):
        for kw in range(3):
            t = kh * 3 + kw
            for ho in range(h_out):
                hi = ho * stride + kh - 1
                if not (0 <= hi < h_in):
                    continue
                for wo in range(w_out):
                    wi = wo * stride + kw - 1
                    if not (0 <= wi < w_in):
                        continue
                    S[t, ho * w_out + wo, hi * w_in + wi] = 1.0
    # w_taps[t, ci, co] = weight[co, ci, kh, kw]
    w_taps = np.transpose(w_oihw, (2, 3, 1, 0)).reshape(9, c_in, c_out)
    # D4[ci, pi, co, po] = sum_t w_taps[t, ci, co] * S[t, po, pi]
    d4 = np.einsum("tio,tqp->ipoq", w_taps, S)
    return d4.reshape(c_in * p_in, c_out * p_out), h_out, w_out


def prepare_encoder(params, in_shape, *, mxu_dtype=jnp.float32):
    """Build kernel-ready operands once.  mxu_dtype=jnp.bfloat16 is the native-rate
    MXU toggle for v6e/v7x (halves weight VMEM); default f32 preserves reference
    numerics."""
    C_in, H, W = in_shape
    strides = (2, 1, 2, 1, 2)
    prep = {}
    h, w = H, W
    for i, st in enumerate(strides, start=1):
        w_np = np.asarray(jax.device_get(params[f"w{i}"]), np.float32)
        b_np = np.asarray(jax.device_get(params[f"b{i}"]), np.float32)
        D, h, w = _dense_conv_operator(w_np, h, w, st)
        p_out = h * w
        prep[f"d{i}"] = jnp.asarray(D, dtype=mxu_dtype)
        prep[f"b{i}"] = jnp.asarray(np.repeat(b_np, p_out)[None, :], jnp.float32)

    # Flatten + Linear: x after layer 5 is already NCHW-flat, so wl = W_lin.T,
    # zero-padded to a lane-dense 128-wide output.
    w_lin = np.asarray(jax.device_get(params["w_lin"]), np.float32)  # (latent, c5*p5)
    b_lin = np.asarray(jax.device_get(params["b_lin"]), np.float32)  # (latent,)
    latent = w_lin.shape[0]
    latent_pad = ((latent + 127) // 128) * 128
    wl = np.zeros((w_lin.shape[1], latent_pad), np.float32)
    wl[:, :latent] = w_lin.T
    bl = np.zeros((1, latent_pad), np.float32)
    bl[0, :latent] = b_lin
    prep["wl"] = jnp.asarray(wl, dtype=mxu_dtype)
    prep["bl"] = jnp.asarray(bl, jnp.float32)
    return prep


# ----------------------------------------------------------------------------
# Deterministic parameter init (shapes from the module's __init__)
# ----------------------------------------------------------------------------
def init_params(key, in_ch, c_hid, latent_dim, conv_end_h, conv_end_w):
    ks = jax.random.split(key, 12)

    def cw(k, co, ci):
        return jax.random.normal(k, (co, ci, 3, 3), jnp.float32) * 0.05

    def bias(k, co):
        return jax.random.normal(k, (co,), jnp.float32) * 0.05

    lin_in = 2 * conv_end_h * conv_end_w * c_hid
    return {
        "w1": cw(ks[0], c_hid, in_ch),          "b1": bias(ks[1], c_hid),
        "w2": cw(ks[2], c_hid, c_hid),          "b2": bias(ks[3], c_hid),
        "w3": cw(ks[4], 2 * c_hid, c_hid),      "b3": bias(ks[5], 2 * c_hid),
        "w4": cw(ks[6], 2 * c_hid, 2 * c_hid),  "b4": bias(ks[7], 2 * c_hid),
        "w5": cw(ks[8], 2 * c_hid, 2 * c_hid),  "b5": bias(ks[9], 2 * c_hid),
        "w_lin": jax.random.normal(ks[10], (latent_dim, lin_in), jnp.float32) * 0.05,
        "b_lin": bias(ks[11], latent_dim),
    }


# ----------------------------------------------------------------------------
# Plain-JAX reference (sanity check against the Pallas path)
# ----------------------------------------------------------------------------
def ref_encoder(x_nchw, params):
    def conv(x, w, b, stride):
        y = jax.lax.conv_general_dilated(
            x, w, window_strides=(stride, stride), padding=((1, 1), (1, 1)),
            dimension_numbers=("NCHW", "OIHW", "NCHW"),
            precision=jax.lax.Precision.HIGHEST)
        return y + b.reshape(1, -1, 1, 1)

    act = lambda t: jax.nn.gelu(t, approximate=False)
    x = act(conv(x_nchw, params["w1"], params["b1"], 2))
    x = act(conv(x, params["w2"], params["b2"], 1))
    x = act(conv(x, params["w3"], params["b3"], 2))
    x = act(conv(x, params["w4"], params["b4"], 1))
    x = act(conv(x, params["w5"], params["b5"], 2))
    flat = x.reshape(x.shape[0], -1)
    return jnp.dot(flat, params["w_lin"].T,
                   precision=jax.lax.Precision.HIGHEST) + params["b_lin"]


# ----------------------------------------------------------------------------
if __name__ == "__main__":
    # Small config consistent with the module: shape=(C, H, W)=(4, 16, 16)
    B, C_IN, H, W = 2, 4, 16, 16
    C_HID, LATENT_DIM = 8, 16

    def multi(s, n):          # three stride-2 convs (k=3, p=1): 16 -> 8 -> 4 -> 2
        for _ in range(n):
            s = conv_out_size(s, 2)
        return s
    conv_end_h, conv_end_w = multi(H, 3), multi(W, 3)

    key = jax.random.PRNGKey(0)
    kp, kx = jax.random.split(key)
    params = init_params(kp, C_IN, C_HID, LATENT_DIM, conv_end_h, conv_end_w)
    x = jax.random.normal(kx, (B, C_IN, H, W), jnp.float32)

    prep = prepare_encoder(params, (C_IN, H, W))        # hoisted, one-time
    fwd = jax.jit(encoder_forward, static_argnames=("latent_dim", "b_blk"))
    z = jax.block_until_ready(fwd(x, prep, latent_dim=LATENT_DIM))
    assert z.shape == (B, LATENT_DIM), z.shape

    z_ref = jax.block_until_ready(ref_encoder(x, params))
    # Tolerance budget is dominated by the approx EUP reciprocal in erf (~1e-4);
    # matmuls are f32 with f32 accumulation.
    err = float(jnp.max(jnp.abs(z - z_ref)))
    assert jnp.allclose(z, z_ref, atol=2e-3, rtol=2e-3), err

    print("KERNEL_OK")
</pallas_src>

<mosaic_0001>
module attributes {stable_mosaic.version = 11 : i64} {
  func.func @_encoder_kernel(%arg0: i32, %arg1: memref<2x1024xf32, #tpu.memory_space<vmem>>, %arg2: memref<1024x512xf32, #tpu.memory_space<vmem>>, %arg3: memref<1x512xf32, #tpu.memory_space<vmem>>, %arg4: memref<512x512xf32, #tpu.memory_space<vmem>>, %arg5: memref<1x512xf32, #tpu.memory_space<vmem>>, %arg6: memref<512x256xf32, #tpu.memory_space<vmem>>, %arg7: memref<1x256xf32, #tpu.memory_space<vmem>>, %arg8: memref<256x256xf32, #tpu.memory_space<vmem>>, %arg9: memref<1x256xf32, #tpu.memory_space<vmem>>, %arg10: memref<256x64xf32, #tpu.memory_space<vmem>>, %arg11: memref<1x64xf32, #tpu.memory_space<vmem>>, %arg12: memref<64x128xf32, #tpu.memory_space<vmem>>, %arg13: memref<1x128xf32, #tpu.memory_space<vmem>>, %arg14: memref<2x128xf32, #tpu.memory_space<vmem>>) attributes {dimension_semantics = [#tpu.dimension_semantics<parallel>], iteration_bounds = array<i64: 1>, scalar_prefetch = 0 : i64, scratch_operands = 0 : i64, tpu.core_type = #tpu.core_type<tc>, window_params = [{transform_indices = @transform_0, window_bounds = array<i64: 2, 1024>}, {pipeline_mode = #tpu.pipeline_mode<synchronous>, transform_indices = @transform_1, window_bounds = array<i64: 1024, 512>}, {pipeline_mode = #tpu.pipeline_mode<synchronous>, transform_indices = @transform_2, window_bounds = array<i64: 1, 512>}, {pipeline_mode = #tpu.pipeline_mode<synchronous>, transform_indices = @transform_3, window_bounds = array<i64: 512, 512>}, {pipeline_mode = #tpu.pipeline_mode<synchronous>, transform_indices = @transform_4, window_bounds = array<i64: 1, 512>}, {pipeline_mode = #tpu.pipeline_mode<synchronous>, transform_indices = @transform_5, window_bounds = array<i64: 512, 256>}, {pipeline_mode = #tpu.pipeline_mode<synchronous>, transform_indices = @transform_6, window_bounds = array<i64: 1, 256>}, {pipeline_mode = #tpu.pipeline_mode<synchronous>, transform_indices = @transform_7, window_bounds = array<i64: 256, 256>}, {pipeline_mode = #tpu.pipeline_mode<synchronous>, transform_indices = @transform_8, window_bounds = array<i64: 1, 256>}, {pipeline_mode = #tpu.pipeline_mode<synchronous>, transform_indices = @transform_9, window_bounds = array<i64: 256, 64>}, {pipeline_mode = #tpu.pipeline_mode<synchronous>, transform_indices = @transform_10, window_bounds = array<i64: 1, 64>}, {pipeline_mode = #tpu.pipeline_mode<synchronous>, transform_indices = @transform_11, window_bounds = array<i64: 64, 128>}, {pipeline_mode = #tpu.pipeline_mode<synchronous>, transform_indices = @transform_12, window_bounds = array<i64: 1, 128>}, {transform_indices = @transform_13, window_bounds = array<i64: 2, 128>}]} {
    %c0 = arith.constant 0 : index
    %c0_0 = arith.constant 0 : index
    %0 = vector.load %arg1[%c0, %c0_0] : memref<2x1024xf32, #tpu.memory_space<vmem>>, vector<2x1024xf32>
    %c0_1 = arith.constant 0 : index
    %c0_2 = arith.constant 0 : index
    %1 = vector.load %arg2[%c0_1, %c0_2] : memref<1024x512xf32, #tpu.memory_space<vmem>>, vector<1024x512xf32>
    %cst = arith.constant dense<0.000000e+00> : vector<2x512xf32>
    %2 = tpu.matmul %0, %1, %cst {dimension_numbers = #tpu.dot_dimension_numbers<[1], [0], [0], [1], [0, 0, 1, 1], [], []>} : vector<2x1024xf32>, vector<1024x512xf32>, vector<2x512xf32> -> vector<2x512xf32>
    %c0_3 = arith.constant 0 : index
    %c0_4 = arith.constant 0 : index
    %3 = vector.load %arg3[%c0_3, %c0_4] : memref<1x512xf32, #tpu.memory_space<vmem>>, vector<1x512xf32>
    %4 = vector.broadcast %3 : vector<1x512xf32> to vector<2x512xf32>
    %5 = arith.addf %2, %4 : vector<2x512xf32>
    %cst_5 = arith.constant 5.000000e-01 : f32
    %6 = vector.broadcast %cst_5 : f32 to vector<2x512xf32>
    %7 = arith.mulf %6, %5 : vector<2x512xf32>
    %cst_6 = arith.constant 0.707106769 : f32
    %8 = vector.broadcast %cst_6 : f32 to vector<2x512xf32>
    %9 = arith.mulf %5, %8 : vector<2x512xf32>
    %cst_7 = arith.constant -4.000000e+00 : f32
    %cst_8 = arith.constant 4.000000e+00 : f32
    %10 = vector.broadcast %cst_7 : f32 to vector<2x512xf32>
    %11 = arith.maximumf %10, %9 : vector<2x512xf32>
    %12 = vector.broadcast %cst_8 : f32 to vector<2x512xf32>
    %13 = arith.minimumf %12, %11 : vector<2x512xf32>
    %14 = arith.mulf %13, %13 : vector<2x512xf32>
    %cst_9 = arith.constant -2.72614237E-10 : f32
    %15 = vector.broadcast %cst_9 : f32 to vector<2x512xf32>
    %16 = arith.mulf %15, %14 : vector<2x512xf32>
    %cst_10 = arith.constant 2.77068146E-8 : f32
    %17 = vector.broadcast %cst_10 : f32 to vector<2x512xf32>
    %18 = arith.addf %16, %17 : vector<2x512xf32>
    %19 = arith.mulf %18, %14 : vector<2x512xf32>
    %cst_11 = arith.constant -2.10102394E-6 : f32
    %20 = vector.broadcast %cst_11 : f32 to vector<2x512xf32>
    %21 = arith.addf %19, %20 : vector<2x512xf32>
    %22 = arith.mulf %21, %14 : vector<2x512xf32>
    %cst_12 = arith.constant -5.69250624E-5 : f32
    %23 = vector.broadcast %cst_12 : f32 to vector<2x512xf32>
    %24 = arith.addf %22, %23 : vector<2x512xf32>
    %25 = arith.mulf %24, %14 : vector<2x512xf32>
    %cst_13 = arith.constant -7.34990637E-4 : f32
    %26 = vector.broadcast %cst_13 : f32 to vector<2x512xf32>
    %27 = arith.addf %25, %26 : vector<2x512xf32>
    %28 = arith.mulf %27, %14 : vector<2x512xf32>
    %cst_14 = arith.constant -2.954600e-03 : f32
    %29 = vector.broadcast %cst_14 : f32 to vector<2x512xf32>
    %30 = arith.addf %28, %29 : vector<2x512xf32>
    %31 = arith.mulf %30, %14 : vector<2x512xf32>
    %cst_15 = arith.constant -0.0160960332 : f32
    %32 = vector.broadcast %cst_15 : f32 to vector<2x512xf32>
    %33 = arith.addf %31, %32 : vector<2x512xf32>
    %cst_16 = arith.constant -1.45660715E-5 : f32
    %34 = vector.broadcast %cst_16 : f32 to vector<2x512xf32>
    %35 = arith.mulf %34, %14 : vector<2x512xf32>
    %cst_17 = arith.constant -2.13374049E-4 : f32
    %36 = vector.broadcast %cst_17 : f32 to vector<2x512xf32>
    %37 = arith.addf %35, %36 : vector<2x512xf32>
    %38 = arith.mulf %37, %14 : vector<2x512xf32>
    %cst_18 = arith.constant -0.00168282702 : f32
    %39 = vector.broadcast %cst_18 : f32 to vector<2x512xf32>
    %40 = arith.addf %38, %39 : vector<2x512xf32>
    %41 = arith.mulf %40, %14 : vector<2x512xf32>
    %cst_19 = arith.constant -0.00737332925 : f32
    %42 = vector.broadcast %cst_19 : f32 to vector<2x512xf32>
    %43 = arith.addf %41, %42 : vector<2x512xf32>
    %44 = arith.mulf %43, %14 : vector<2x512xf32>
    %cst_20 = arith.constant -0.0142647391 : f32
    %45 = vector.broadcast %cst_20 : f32 to vector<2x512xf32>
    %46 = arith.addf %44, %45 : vector<2x512xf32>
    %47 = arith.mulf %13, %33 : vector<2x512xf32>
    %48 = tpu.reciprocal %46 {approx = true} : vector<2x512xf32> -> vector<2x512xf32>
    %49 = arith.mulf %47, %48 : vector<2x512xf32>
    %cst_21 = arith.constant 1.000000e+00 : f32
    %50 = vector.broadcast %cst_21 : f32 to vector<2x512xf32>
    %51 = arith.addf %50, %49 : vector<2x512xf32>
    %52 = arith.mulf %7, %51 : vector<2x512xf32>
    %c0_22 = arith.constant 0 : index
    %c0_23 = arith.constant 0 : index
    %53 = vector.load %arg4[%c0_22, %c0_23] : memref<512x512xf32, #tpu.memory_space<vmem>>, vector<512x512xf32>
    %cst_24 = arith.constant dense<0.000000e+00> : vector<2x512xf32>
    %54 = tpu.matmul %52, %53, %cst_24 {dimension_numbers = #tpu.dot_dimension_numbers<[1], [0], [0], [1], [0, 0, 1, 1], [], []>} : vector<2x512xf32>, vector<512x512xf32>, vector<2x512xf32> -> vector<2x512xf32>
    %c0_25 = arith.constant 0 : index
    %c0_26 = arith.constant 0 : index
    %55 = vector.load %arg5[%c0_25, %c0_26] : memref<1x512xf32, #tpu.memory_space<vmem>>, vector<1x512xf32>
    %56 = vector.broadcast %55 : vector<1x512xf32> to vector<2x512xf32>
    %57 = arith.addf %54, %56 : vector<2x512xf32>
    %cst_27 = arith.constant 5.000000e-01 : f32
    %58 = vector.broadcast %cst_27 : f32 to vector<2x512xf32>
    %59 = arith.mulf %58, %57 : vector<2x512xf32>
    %cst_28 = arith.constant 0.707106769 : f32
    %60 = vector.broadcast %cst_28 : f32 to vector<2x512xf32>
    %61 = arith.mulf %57, %60 : vector<2x512xf32>
    %cst_29 = arith.constant -4.000000e+00 : f32
    %cst_30 = arith.constant 4.000000e+00 : f32
    %62 = vector.broadcast %cst_29 : f32 to vector<2x512xf32>
    %63 = arith.maximumf %62, %61 : vector<2x512xf32>
    %64 = vector.broadcast %cst_30 : f32 to vector<2x512xf32>
    %65 = arith.minimumf %64, %63 : vector<2x512xf32>
    %66 = arith.mulf %65, %65 : vector<2x512xf32>
    %cst_31 = arith.constant -2.72614237E-10 : f32
    %67 = vector.broadcast %cst_31 : f32 to vector<2x512xf32>
    %68 = arith.mulf %67, %66 : vector<2x512xf32>
    %cst_32 = arith.constant 2.77068146E-8 : f32
    %69 = vector.broadcast %cst_32 : f32 to vector<2x512xf32>
    %70 = arith.addf %68, %69 : vector<2x512xf32>
    %71 = arith.mulf %70, %66 : vector<2x512xf32>
    %cst_33 = arith.constant -2.10102394E-6 : f32
    %72 = vector.broadcast %cst_33 : f32 to vector<2x512xf32>
    %73 = arith.addf %71, %72 : vector<2x512xf32>
    %74 = arith.mulf %73, %66 : vector<2x512xf32>
    %cst_34 = arith.constant -5.69250624E-5 : f32
    %75 = vector.broadcast %cst_34 : f32 to vector<2x512xf32>
    %76 = arith.addf %74, %75 : vector<2x512xf32>
    %77 = arith.mulf %76, %66 : vector<2x512xf32>
    %cst_35 = arith.constant -7.34990637E-4 : f32
    %78 = vector.broadcast %cst_35 : f32 to vector<2x512xf32>
    %79 = arith.addf %77, %78 : vector<2x512xf32>
    %80 = arith.mulf %79, %66 : vector<2x512xf32>
    %cst_36 = arith.constant -2.954600e-03 : f32
    %81 = vector.broadcast %cst_36 : f32 to vector<2x512xf32>
    %82 = arith.addf %80, %81 : vector<2x512xf32>
    %83 = arith.mulf %82, %66 : vector<2x512xf32>
    %cst_37 = arith.constant -0.0160960332 : f32
    %84 = vector.broadcast %cst_37 : f32 to vector<2x512xf32>
    %85 = arith.addf %83, %84 : vector<2x512xf32>
    %cst_38 = arith.constant -1.45660715E-5 : f32
    %86 = vector.broadcast %cst_38 : f32 to vector<2x512xf32>
    %87 = arith.mulf %86, %66 : vector<2x512xf32>
    %cst_39 = arith.constant -2.13374049E-4 : f32
    %88 = vector.broadcast %cst_39 : f32 to vector<2x512xf32>
    %89 = arith.addf %87, %88 : vector<2x512xf32>
    %90 = arith.mulf %89, %66 : vector<2x512xf32>
    %cst_40 = arith.constant -0.00168282702 : f32
    %91 = vector.broadcast %cst_40 : f32 to vector<2x512xf32>
    %92 = arith.addf %90, %91 : vector<2x512xf32>
    %93 = arith.mulf %92, %66 : vector<2x512xf32>
    %cst_41 = arith.constant -0.00737332925 : f32
    %94 = vector.broadcast %cst_41 : f32 to vector<2x512xf32>
    %95 = arith.addf %93, %94 : vector<2x512xf32>
    %96 = arith.mulf %95, %66 : vector<2x512xf32>
    %cst_42 = arith.constant -0.0142647391 : f32
    %97 = vector.broadcast %cst_42 : f32 to vector<2x512xf32>
    %98 = arith.addf %96, %97 : vector<2x512xf32>
    %99 = arith.mulf %65, %85 : vector<2x512xf32>
    %100 = tpu.reciprocal %98 {approx = true} : vector<2x512xf32> -> vector<2x512xf32>
    %101 = arith.mulf %99, %100 : vector<2x512xf32>
    %cst_43 = arith.constant 1.000000e+00 : f32
    %102 = vector.broadcast %cst_43 : f32 to vector<2x512xf32>
    %103 = arith.addf %102, %101 : vector<2x512xf32>
    %104 = arith.mulf %59, %103 : vector<2x512xf32>
    %c0_44 = arith.constant 0 : index
    %c0_45 = arith.constant 0 : index
    %105 = vector.load %arg6[%c0_44, %c0_45] : memref<512x256xf32, #tpu.memory_space<vmem>>, vector<512x256xf32>
    %cst_46 = arith.constant dense<0.000000e+00> : vector<2x256xf32>
    %106 = tpu.matmul %104, %105, %cst_46 {dimension_numbers = #tpu.dot_dimension_numbers<[1], [0], [0], [1], [0, 0, 1, 1], [], []>} : vector<2x512xf32>, vector<512x256xf32>, vector<2x256xf32> -> vector<2x256xf32>
    %c0_47 = arith.constant 0 : index
    %c0_48 = arith.constant 0 : index
    %107 = vector.load %arg7[%c0_47, %c0_48] : memref<1x256xf32, #tpu.memory_space<vmem>>, vector<1x256xf32>
    %108 = vector.broadcast %107 : vector<1x256xf32> to vector<2x256xf32>
    %109 = arith.addf %106, %108 : vector<2x256xf32>
    %cst_49 = arith.constant 5.000000e-01 : f32
    %110 = vector.broadcast %cst_49 : f32 to vector<2x256xf32>
    %111 = arith.mulf %110, %109 : vector<2x256xf32>
    %cst_50 = arith.constant 0.707106769 : f32
    %112 = vector.broadcast %cst_50 : f32 to vector<2x256xf32>
    %113 = arith.mulf %109, %112 : vector<2x256xf32>
    %cst_51 = arith.constant -4.000000e+00 : f32
    %cst_52 = arith.constant 4.000000e+00 : f32
    %114 = vector.broadcast %cst_51 : f32 to vector<2x256xf32>
    %115 = arith.maximumf %114, %113 : vector<2x256xf32>
    %116 = vector.broadcast %cst_52 : f32 to vector<2x256xf32>
    %117 = arith.minimumf %116, %115 : vector<2x256xf32>
    %118 = arith.mulf %117, %117 : vector<2x256xf32>
    %cst_53 = arith.constant -2.72614237E-10 : f32
    %119 = vector.broadcast %cst_53 : f32 to vector<2x256xf32>
    %120 = arith.mulf %119, %118 : vector<2x256xf32>
    %cst_54 = arith.constant 2.77068146E-8 : f32
    %121 = vector.broadcast %cst_54 : f32 to vector<2x256xf32>
    %122 = arith.addf %120, %121 : vector<2x256xf32>
    %123 = arith.mulf %122, %118 : vector<2x256xf32>
    %cst_55 = arith.constant -2.10102394E-6 : f32
    %124 = vector.broadcast %cst_55 : f32 to vector<2x256xf32>
    %125 = arith.addf %123, %124 : vector<2x256xf32>
    %126 = arith.mulf %125, %118 : vector<2x256xf32>
    %cst_56 = arith.constant -5.69250624E-5 : f32
    %127 = vector.broadcast %cst_56 : f32 to vector<2x256xf32>
    %128 = arith.addf %126, %127 : vector<2x256xf32>
    %129 = arith.mulf %128, %118 : vector<2x256xf32>
    %cst_57 = arith.constant -7.34990637E-4 : f32
    %130 = vector.broadcast %cst_57 : f32 to vector<2x256xf32>
    %131 = arith.addf %129, %130 : vector<2x256xf32>
    %132 = arith.mulf %131, %118 : vector<2x256xf32>
    %cst_58 = arith.constant -2.954600e-03 : f32
    %133 = vector.broadcast %cst_58 : f32 to vector<2x256xf32>
    %134 = arith.addf %132, %133 : vector<2x256xf32>
    %135 = arith.mulf %134, %118 : vector<2x256xf32>
    %cst_59 = arith.constant -0.0160960332 : f32
    %136 = vector.broadcast %cst_59 : f32 to vector<2x256xf32>
    %137 = arith.addf %135, %136 : vector<2x256xf32>
    %cst_60 = arith.constant -1.45660715E-5 : f32
    %138 = vector.broadcast %cst_60 : f32 to vector<2x256xf32>
    %139 = arith.mulf %138, %118 : vector<2x256xf32>
    %cst_61 = arith.constant -2.13374049E-4 : f32
    %140 = vector.broadcast %cst_61 : f32 to vector<2x256xf32>
    %141 = arith.addf %139, %140 : vector<2x256xf32>
    %142 = arith.mulf %141, %118 : vector<2x256xf32>
    %cst_62 = arith.constant -0.00168282702 : f32
    %143 = vector.broadcast %cst_62 : f32 to vector<2x256xf32>
    %144 = arith.addf %142, %143 : vector<2x256xf32>
    %145 = arith.mulf %144, %118 : vector<2x256xf32>
    %cst_63 = arith.constant -0.00737332925 : f32
    %146 = vector.broadcast %cst_63 : f32 to vector<2x256xf32>
    %147 = arith.addf %145, %146 : vector<2x256xf32>
    %148 = arith.mulf %147, %118 : vector<2x256xf32>
    %cst_64 = arith.constant -0.0142647391 : f32
    %149 = vector.broadcast %cst_64 : f32 to vector<2x256xf32>
    %150 = arith.addf %148, %149 : vector<2x256xf32>
    %151 = arith.mulf %117, %137 : vector<2x256xf32>
    %152 = tpu.reciprocal %150 {approx = true} : vector<2x256xf32> -> vector<2x256xf32>
    %153 = arith.mulf %151, %152 : vector<2x256xf32>
    %cst_65 = arith.constant 1.000000e+00 : f32
    %154 = vector.broadcast %cst_65 : f32 to vector<2x256xf32>
    %155 = arith.addf %154, %153 : vector<2x256xf32>
    %156 = arith.mulf %111, %155 : vector<2x256xf32>
    %c0_66 = arith.constant 0 : index
    %c0_67 = arith.constant 0 : index
    %157 = vector.load %arg8[%c0_66, %c0_67] : memref<256x256xf32, #tpu.memory_space<vmem>>, vector<256x256xf32>
    %cst_68 = arith.constant dense<0.000000e+00> : vector<2x256xf32>
    %158 = tpu.matmul %156, %157, %cst_68 {dimension_numbers = #tpu.dot_dimension_numbers<[1], [0], [0], [1], [0, 0, 1, 1], [], []>} : vector<2x256xf32>, vector<256x256xf32>, vector<2x256xf32> -> vector<2x256xf32>
    %c0_69 = arith.constant 0 : index
    %c0_70 = arith.constant 0 : index
    %159 = vector.load %arg9[%c0_69, %c0_70] : memref<1x256xf32, #tpu.memory_space<vmem>>, vector<1x256xf32>
    %160 = vector.broadcast %159 : vector<1x256xf32> to vector<2x256xf32>
    %161 = arith.addf %158, %160 : vector<2x256xf32>
    %cst_71 = arith.constant 5.000000e-01 : f32
    %162 = vector.broadcast %cst_71 : f32 to vector<2x256xf32>
    %163 = arith.mulf %162, %161 : vector<2x256xf32>
    %cst_72 = arith.constant 0.707106769 : f32
    %164 = vector.broadcast %cst_72 : f32 to vector<2x256xf32>
    %165 = arith.mulf %161, %164 : vector<2x256xf32>
    %cst_73 = arith.constant -4.000000e+00 : f32
    %cst_74 = arith.constant 4.000000e+00 : f32
    %166 = vector.broadcast %cst_73 : f32 to vector<2x256xf32>
    %167 = arith.maximumf %166, %165 : vector<2x256xf32>
    %168 = vector.broadcast %cst_74 : f32 to vector<2x256xf32>
    %169 = arith.minimumf %168, %167 : vector<2x256xf32>
    %170 = arith.mulf %169, %169 : vector<2x256xf32>
    %cst_75 = arith.constant -2.72614237E-10 : f32
    %171 = vector.broadcast %cst_75 : f32 to vector<2x256xf32>
    %172 = arith.mulf %171, %170 : vector<2x256xf32>
    %cst_76 = arith.constant 2.77068146E-8 : f32
    %173 = vector.broadcast %cst_76 : f32 to vector<2x256xf32>
    %174 = arith.addf %172, %173 : vector<2x256xf32>
    %175 = arith.mulf %174, %170 : vector<2x256xf32>
    %cst_77 = arith.constant -2.10102394E-6 : f32
    %176 = vector.broadcast %cst_77 : f32 to vector<2x256xf32>
    %177 = arith.addf %175, %176 : vector<2x256xf32>
    %178 = arith.mulf %177, %170 : vector<2x256xf32>
    %cst_78 = arith.constant -5.69250624E-5 : f32
    %179 = vector.broadcast %cst_78 : f32 to vector<2x256xf32>
    %180 = arith.addf %178, %179 : vector<2x256xf32>
    %181 = arith.mulf %180, %170 : vector<2x256xf32>
    %cst_79 = arith.constant -7.34990637E-4 : f32
    %182 = vector.broadcast %cst_79 : f32 to vector<2x256xf32>
    %183 = arith.addf %181, %182 : vector<2x256xf32>
    %184 = arith.mulf %183, %170 : vector<2x256xf32>
    %cst_80 = arith.constant -2.954600e-03 : f32
    %185 = vector.broadcast %cst_80 : f32 to vector<2x256xf32>
    %186 = arith.addf %184, %185 : vector<2x256xf32>
    %187 = arith.mulf %186, %170 : vector<2x256xf32>
    %cst_81 = arith.constant -0.0160960332 : f32
    %188 = vector.broadcast %cst_81 : f32 to vector<2x256xf32>
    %189 = arith.addf %187, %188 : vector<2x256xf32>
    %cst_82 = arith.constant -1.45660715E-5 : f32
    %190 = vector.broadcast %cst_82 : f32 to vector<2x256xf32>
    %191 = arith.mulf %190, %170 : vector<2x256xf32>
    %cst_83 = arith.constant -2.13374049E-4 : f32
    %192 = vector.broadcast %cst_83 : f32 to vector<2x256xf32>
    %193 = arith.addf %191, %192 : vector<2x256xf32>
    %194 = arith.mulf %193, %170 : vector<2x256xf32>
    %cst_84 = arith.constant -0.00168282702 : f32
    %195 = vector.broadcast %cst_84 : f32 to vector<2x256xf32>
    %196 = arith.addf %194, %195 : vector<2x256xf32>
    %197 = arith.mulf %196, %170 : vector<2x256xf32>
    %cst_85 = arith.constant -0.00737332925 : f32
    %198 = vector.broadcast %cst_85 : f32 to vector<2x256xf32>
    %199 = arith.addf %197, %198 : vector<2x256xf32>
    %200 = arith.mulf %199, %170 : vector<2x256xf32>
    %cst_86 = arith.constant -0.0142647391 : f32
    %201 = vector.broadcast %cst_86 : f32 to vector<2x256xf32>
    %202 = arith.addf %200, %201 : vector<2x256xf32>
    %203 = arith.mulf %169, %189 : vector<2x256xf32>
    %204 = tpu.reciprocal %202 {approx = true} : vector<2x256xf32> -> vector<2x256xf32>
    %205 = arith.mulf %203, %204 : vector<2x256xf32>
    %cst_87 = arith.constant 1.000000e+00 : f32
    %206 = vector.broadcast %cst_87 : f32 to vector<2x256xf32>
    %207 = arith.addf %206, %205 : vector<2x256xf32>
    %208 = arith.mulf %163, %207 : vector<2x256xf32>
    %c0_88 = arith.constant 0 : index
    %c0_89 = arith.constant 0 : index
    %209 = vector.load %arg10[%c0_88, %c0_89] : memref<256x64xf32, #tpu.memory_space<vmem>>, vector<256x64xf32>
    %cst_90 = arith.constant dense<0.000000e+00> : vector<2x64xf32>
    %210 = tpu.matmul %208, %209, %cst_90 {dimension_numbers = #tpu.dot_dimension_numbers<[1], [0], [0], [1], [0, 0, 1, 1], [], []>} : vector<2x256xf32>, vector<256x64xf32>, vector<2x64xf32> -> vector<2x64xf32>
    %c0_91 = arith.constant 0 : index
    %c0_92 = arith.constant 0 : index
    %211 = vector.load %arg11[%c0_91, %c0_92] : memref<1x64xf32, #tpu.memory_space<vmem>>, vector<1x64xf32>
    %212 = vector.broadcast %211 : vector<1x64xf32> to vector<2x64xf32>
    %213 = arith.addf %210, %212 : vector<2x64xf32>
    %cst_93 = arith.constant 5.000000e-01 : f32
    %214 = vector.broadcast %cst_93 : f32 to vector<2x64xf32>
    %215 = arith.mulf %214, %213 : vector<2x64xf32>
    %cst_94 = arith.constant 0.707106769 : f32
    %216 = vector.broadcast %cst_94 : f32 to vector<2x64xf32>
    %217 = arith.mulf %213, %216 : vector<2x64xf32>
    %cst_95 = arith.constant -4.000000e+00 : f32
    %cst_96 = arith.constant 4.000000e+00 : f32
    %218 = vector.broadcast %cst_95 : f32 to vector<2x64xf32>
    %219 = arith.maximumf %218, %217 : vector<2x64xf32>
    %220 = vector.broadcast %cst_96 : f32 to vector<2x64xf32>
    %221 = arith.minimumf %220, %219 : vector<2x64xf32>
    %222 = arith.mulf %221, %221 : vector<2x64xf32>
    %cst_97 = arith.constant -2.72614237E-10 : f32
    %223 = vector.broadcast %cst_97 : f32 to vector<2x64xf32>
    %224 = arith.mulf %223, %222 : vector<2x64xf32>
    %cst_98 = arith.constant 2.77068146E-8 : f32
    %225 = vector.broadcast %cst_98 : f32 to vector<2x64xf32>
    %226 = arith.addf %224, %225 : vector<2x64xf32>
    %227 = arith.mulf %226, %222 : vector<2x64xf32>
    %cst_99 = arith.constant -2.10102394E-6 : f32
    %228 = vector.broadcast %cst_99 : f32 to vector<2x64xf32>
    %229 = arith.addf %227, %228 : vector<2x64xf32>
    %230 = arith.mulf %229, %222 : vector<2x64xf32>
    %cst_100 = arith.constant -5.69250624E-5 : f32
    %231 = vector.broadcast %cst_100 : f32 to vector<2x64xf32>
    %232 = arith.addf %230, %231 : vector<2x64xf32>
    %233 = arith.mulf %232, %222 : vector<2x64xf32>
    %cst_101 = arith.constant -7.34990637E-4 : f32
    %234 = vector.broadcast %cst_101 : f32 to vector<2x64xf32>
    %235 = arith.addf %233, %234 : vector<2x64xf32>
    %236 = arith.mulf %235, %222 : vector<2x64xf32>
    %cst_102 = arith.constant -2.954600e-03 : f32
    %237 = vector.broadcast %cst_102 : f32 to vector<2x64xf32>
    %238 = arith.addf %236, %237 : vector<2x64xf32>
    %239 = arith.mulf %238, %222 : vector<2x64xf32>
    %cst_103 = arith.constant -0.0160960332 : f32
    %240 = vector.broadcast %cst_103 : f32 to vector<2x64xf32>
    %241 = arith.addf %239, %240 : vector<2x64xf32>
    %cst_104 = arith.constant -1.45660715E-5 : f32
    %242 = vector.broadcast %cst_104 : f32 to vector<2x64xf32>
    %243 = arith.mulf %242, %222 : vector<2x64xf32>
    %cst_105 = arith.constant -2.13374049E-4 : f32
    %244 = vector.broadcast %cst_105 : f32 to vector<2x64xf32>
    %245 = arith.addf %243, %244 : vector<2x64xf32>
    %246 = arith.mulf %245, %222 : vector<2x64xf32>
    %cst_106 = arith.constant -0.00168282702 : f32
    %247 = vector.broadcast %cst_106 : f32 to vector<2x64xf32>
    %248 = arith.addf %246, %247 : vector<2x64xf32>
    %249 = arith.mulf %248, %222 : vector<2x64xf32>
    %cst_107 = arith.constant -0.00737332925 : f32
    %250 = vector.broadcast %cst_107 : f32 to vector<2x64xf32>
    %251 = arith.addf %249, %250 : vector<2x64xf32>
    %252 = arith.mulf %251, %222 : vector<2x64xf32>
    %cst_108 = arith.constant -0.0142647391 : f32
    %253 = vector.broadcast %cst_108 : f32 to vector<2x64xf32>
    %254 = arith.addf %252, %253 : vector<2x64xf32>
    %255 = arith.mulf %221, %241 : vector<2x64xf32>
    %256 = tpu.reciprocal %254 {approx = true} : vector<2x64xf32> -> vector<2x64xf32>
    %257 = arith.mulf %255, %256 : vector<2x64xf32>
    %cst_109 = arith.constant 1.000000e+00 : f32
    %258 = vector.broadcast %cst_109 : f32 to vector<2x64xf32>
    %259 = arith.addf %258, %257 : vector<2x64xf32>
    %260 = arith.mulf %215, %259 : vector<2x64xf32>
    %c0_110 = arith.constant 0 : index
    %c0_111 = arith.constant 0 : index
    %261 = vector.load %arg12[%c0_110, %c0_111] : memref<64x128xf32, #tpu.memory_space<vmem>>, vector<64x128xf32>
    %cst_112 = arith.constant dense<0.000000e+00> : vector<2x128xf32>
    %262 = tpu.matmul %260, %261, %cst_112 {dimension_numbers = #tpu.dot_dimension_numbers<[1], [0], [0], [1], [0, 0, 1, 1], [], []>} : vector<2x64xf32>, vector<64x128xf32>, vector<2x128xf32> -> vector<2x128xf32>
    %c0_113 = arith.constant 0 : index
    %c0_114 = arith.constant 0 : index
    %263 = vector.load %arg13[%c0_113, %c0_114] : memref<1x128xf32, #tpu.memory_space<vmem>>, vector<1x128xf32>
    %264 = vector.broadcast %263 : vector<1x128xf32> to vector<2x128xf32>
    %265 = arith.addf %262, %264 : vector<2x128xf32>
    %c0_115 = arith.constant 0 : index
    %c0_116 = arith.constant 0 : index
    %266 = vector.load %arg14[%c0_115, %c0_116] : memref<2x128xf32, #tpu.memory_space<vmem>>, vector<2x128xf32>
    tpu.vector_store %arg14[%c0_115, %c0_116], %265 {strides = array<i32>} : memref<2x128xf32, #tpu.memory_space<vmem>>, vector<2x128xf32>,
    return
  }
  func.func @transform_0(%arg0: i32) -> (i32, i32) {
    %c0_i32 = arith.constant 0 : i32
    %c0_i32_0 = arith.constant 0 : i32
    return %arg0, %c0_i32 : i32, i32
  }
  func.func @transform_1(%arg0: i32) -> (i32, i32) {
    %c0_i32 = arith.constant 0 : i32
    %c0_i32_0 = arith.constant 0 : i32
    %c0_i32_1 = arith.constant 0 : i32
    return %c0_i32, %c0_i32_0 : i32, i32
  }
  func.func @transform_2(%arg0: i32) -> (i32, i32) {
    %c0_i32 = arith.constant 0 : i32
    %c0_i32_0 = arith.constant 0 : i32
    %c0_i32_1 = arith.constant 0 : i32
    return %c0_i32, %c0_i32_0 : i32, i32
  }
  func.func @transform_3(%arg0: i32) -> (i32, i32) {
    %c0_i32 = arith.constant 0 : i32
    %c0_i32_0 = arith.constant 0 : i32
    %c0_i32_1 = arith.constant 0 : i32
    return %c0_i32, %c0_i32_0 : i32, i32
  }
  func.func @transform_4(%arg0: i32) -> (i32, i32) {
    %c0_i32 = arith.constant 0 : i32
    %c0_i32_0 = arith.constant 0 : i32
    %c0_i32_1 = arith.constant 0 : i32
    return %c0_i32, %c0_i32_0 : i32, i32
  }
  func.func @transform_5(%arg0: i32) -> (i32, i32) {
    %c0_i32 = arith.constant 0 : i32
    %c0_i32_0 = arith.constant 0 : i32
    %c0_i32_1 = arith.constant 0 : i32
    return %c0_i32, %c0_i32_0 : i32, i32
  }
  func.func @transform_6(%arg0: i32) -> (i32, i32) {
    %c0_i32 = arith.constant 0 : i32
    %c0_i32_0 = arith.constant 0 : i32
    %c0_i32_1 = arith.constant 0 : i32
    return %c0_i32, %c0_i32_0 : i32, i32
  }
  func.func @transform_7(%arg0: i32) -> (i32, i32) {
    %c0_i32 = arith.constant 0 : i32
    %c0_i32_0 = arith.constant 0 : i32
    %c0_i32_1 = arith.constant 0 : i32
    return %c0_i32, %c0_i32_0 : i32, i32
  }
  func.func @transform_8(%arg0: i32) -> (i32, i32) {
    %c0_i32 = arith.constant 0 : i32
    %c0_i32_0 = arith.constant 0 : i32
    %c0_i32_1 = arith.constant 0 : i32
    return %c0_i32, %c0_i32_0 : i32, i32
  }
  func.func @transform_9(%arg0: i32) -> (i32, i32) {
    %c0_i32 = arith.constant 0 : i32
    %c0_i32_0 = arith.constant 0 : i32
    %c0_i32_1 = arith.constant 0 : i32
    return %c0_i32, %c0_i32_0 : i32, i32
  }
  func.func @transform_10(%arg0: i32) -> (i32, i32) {
    %c0_i32 = arith.constant 0 : i32
    %c0_i32_0 = arith.constant 0 : i32
    %c0_i32_1 = arith.constant 0 : i32
    return %c0_i32, %c0_i32_0 : i32, i32
  }
  func.func @transform_11(%arg0: i32) -> (i32, i32) {
    %c0_i32 = arith.constant 0 : i32
    %c0_i32_0 = arith.constant 0 : i32
    %c0_i32_1 = arith.constant 0 : i32
    return %c0_i32, %c0_i32_0 : i32, i32
  }
  func.func @transform_12(%arg0: i32) -> (i32, i32) {
    %c0_i32 = arith.constant 0 : i32
    %c0_i32_0 = arith.constant 0 : i32
    %c0_i32_1 = arith.constant 0 : i32
    return %c0_i32, %c0_i32_0 : i32, i32
  }
  func.func @transform_13(%arg0: i32) -> (i32, i32) {
    %c0_i32 = arith.constant 0 : i32
    %c0_i32_0 = arith.constant 0 : i32
    return %arg0, %c0_i32 : i32, i32
  }
}

</mosaic_0001>

<llo_original>
// kernel: encoder_forward.1
$region0: #{encoder_forward.1}
  #allocation0 [shape = 'u32[]', space=smem, size = 0x4, offset = 0x4, fixed_abs, tag = 'smem constant byte address 0x4 - core index']
  #allocation1 [shape = 'u32[72,128]{1,0:T(1,128)}', space=vmem, size = 0x9000, scoped, tag = 'internal scratch']
  %s0 = inlined_call_operand.vmem [shape: f32[2,1024], index: 0, kind: input, shape index: {}]
  %s1 = inlined_call_operand.hbm [shape: f32[1024,512], index: 1, kind: input, shape index: {}]
  %s2 = inlined_call_operand.hbm [shape: f32[1,512], index: 2, kind: input, shape index: {}]
  %s3 = inlined_call_operand.hbm [shape: f32[512,512], index: 3, kind: input, shape index: {}]
  %s4 = inlined_call_operand.hbm [shape: f32[1,512], index: 4, kind: input, shape index: {}]
  %s5 = inlined_call_operand.hbm [shape: f32[512,256], index: 5, kind: input, shape index: {}]
  %s6 = inlined_call_operand.hbm [shape: f32[1,256], index: 6, kind: input, shape index: {}]
  %s7 = inlined_call_operand.hbm [shape: f32[256,256], index: 7, kind: input, shape index: {}]
  %s8 = inlined_call_operand.hbm [shape: f32[1,256], index: 8, kind: input, shape index: {}]
  %s9 = inlined_call_operand.vmem [shape: f32[256,64], index: 9, kind: input, shape index: {}]
  %s10 = inlined_call_operand.hbm [shape: f32[1,64], index: 10, kind: input, shape index: {}]
  %s11 = inlined_call_operand.hbm [shape: f32[64,128], index: 11, kind: input, shape index: {}]
  %s12 = inlined_call_operand.hbm [shape: f32[1,128], index: 12, kind: input, shape index: {}]
  %s13 = inlined_call_operand.hbm [shape: f32[2,128], index: 13, kind: output, shape index: {}]
  %s14 = sld [smem:[#allocation0]]
  $region106: #{encoder_forward.1} parent=0
    _
  %s16 = ssub.s32 1, %s14
  %s17 = scalar_select 0, %s16, %s14
  $region1: #{encoder_forward.1} parent=0
    #allocation2 [shape = 'u8[2097152]{0}', space=vmem, size = 0x200000, scoped, tag = 'input window, operand 1, single buffered']
    #allocation3 [shape = 's32[1]{0}', space=sflag, size = 0x4, scoped, tag = 'scoped memory for encoder_forward.1']
    #allocation4 [shape = 's32[1]{0}', space=sflag, size = 0x4, scoped, tag = 'scoped memory for encoder_forward.1']
    #allocation5 [shape = 'u8[2048]{0}', space=vmem, size = 0x800, scoped, tag = 'input window, operand 2, single buffered']
    #allocation6 [shape = 's32[1]{0}', space=sflag, size = 0x4, scoped, tag = 'scoped memory for encoder_forward.1']
    #allocation7 [shape = 'u8[1048576]{0}', space=vmem, size = 0x100000, scoped, tag = 'input window, operand 3, single buffered']
    #allocation8 [shape = 'u8[2048]{0}', space=vmem, size = 0x800, scoped, tag = 'input window, operand 4, single buffered']
    #allocation9 [shape = 's32[1]{0}', space=sflag, size = 0x4, scoped, tag = 'scoped memory for encoder_forward.1']
    #allocation10 [shape = 'u8[524288]{0}', space=vmem, size = 0x80000, scoped, tag = 'input window, operand 5, single buffered']
    #allocation11 [shape = 'u8[1024]{0}', space=vmem, size = 0x400, scoped, tag = 'input window, operand 6, single buffered']
    #allocation12 [shape = 's32[1]{0}', space=sflag, size = 0x4, scoped, tag = 'scoped memory for encoder_forward.1']
    #allocation13 [shape = 'u8[262144]{0}', space=vmem, size = 0x40000, scoped, tag = 'input window, operand 7, single buffered']
    #allocation14 [shape = 'u8[1024]{0}', space=vmem, size = 0x400, scoped, tag = 'input window, operand 8, single buffered']
    #allocation15 [shape = 's32[1]{0}', space=sflag, size = 0x4, scoped, tag = 'scoped memory for encoder_forward.1']
    #allocation16 [shape = 'u8[512]{0}', space=vmem, size = 0x400, scoped, tag = 'input window, operand 10, single buffered']
    #allocation17 [shape = 'u8[32768]{0}', space=vmem, size = 0x8000, scoped, tag = 'input window, operand 11, single buffered']
    #allocation18 [shape = 's32[1]{0}', space=sflag, size = 0x4, scoped, tag = 'scoped memory for encoder_forward.1']
    #allocation19 [shape = 'u8[512]{0}', space=vmem, size = 0x400, scoped, tag = 'input window, operand 12, single buffered']
    #allocation20 [shape = 'u8[1024]{0}', space=vmem, size = 0x400, scoped, tag = 'output window, operand 0, single buffered']
    %18 = vsyncpa [#allocation3], 0
    %19 = vsyncpa [#allocation6], 0
    %20 = vsyncpa [#allocation9], 0
    %21 = vsyncpa [#allocation12], 0
    %22 = vsyncpa [#allocation15], 0
    %23 = vsyncpa [#allocation18], 0
    %24 = vsyncpa [#allocation4], 0
    // Predicated region
    $region2: #{encoder_forward.1} parent=1 // pred_check
      _
    $region3: #{encoder_forward.1} parent=1 // pred_check_branch
      %26 = sbr.rel (0) target = $region5
    $region4: #{encoder_forward.1} parent=1 // pred_region
      _
    $region5: #{encoder_forward.1} parent=1 // pred_fallthru
      _
    // Predicated region
    $region6: #{encoder_forward.1} parent=1 // pred_check
      _
    $region7: #{encoder_forward.1} parent=1 // pred_check_branch
      %28 = sbr.rel (0) target = $region9
    $region8: #{encoder_forward.1} parent=1 // pred_region
      %30 = vsyncadd [#allocation3], 0
      %s31 = sshll.u32 %s1, 4
      %s32 = int_to_ptr.hbm [resolvable:$true] %s31
      %s33 = sshll.u32 [#allocation2], 4
      %s34 = int_to_ptr.vmem [resolvable:$true] %s33
      %39 = dma.hbm_to_vmem [thread:$0]  %s32, 65536, %s34, [#allocation3], 512, 512, 32
    $region9: #{encoder_forward.1} parent=1 // pred_fallthru
      _
    // Predicated region
    $region10: #{encoder_forward.1} parent=1 // pred_check
      _
    $region11: #{encoder_forward.1} parent=1 // pred_check_branch
      %41 = sbr.rel (0) target = $region13
    $region12: #{encoder_forward.1} parent=1 // pred_region
      %43 = vsyncadd [#allocation6], 0
      %s45 = sshll.u32 %s2, 4
      %s46 = int_to_ptr.hbm [resolvable:$true] %s45
      %s47 = sshll.u32 [#allocation5], 4
      %s48 = int_to_ptr.vmem [resolvable:$true] %s47
      %50 = dma.hbm_to_vmem [thread:$0]  %s46, 64, %s48, [#allocation6]
    $region13: #{encoder_forward.1} parent=1 // pred_fallthru
      _
    // Predicated region
    $region14: #{encoder_forward.1} parent=1 // pred_check
      _
    $region15: #{encoder_forward.1} parent=1 // pred_check_branch
      %52 = sbr.rel (0) target = $region17
    $region16: #{encoder_forward.1} parent=1 // pred_region
      %54 = vsyncadd [#allocation6], 0
      %s55 = sshll.u32 %s3, 4
      %s56 = int_to_ptr.hbm [resolvable:$true] %s55
      %s57 = sshll.u32 [#allocation7], 4
      %s58 = int_to_ptr.vmem [resolvable:$true] %s57
      %63 = dma.hbm_to_vmem [thread:$0]  %s56, 32768, %s58, [#allocation6], 512, 512, 32
    $region17: #{encoder_forward.1} parent=1 // pred_fallthru
      _
    // Predicated region
    $region18: #{encoder_forward.1} parent=1 // pred_check
      _
    $region19: #{encoder_forward.1} parent=1 // pred_check_branch
      %65 = sbr.rel (0) target = $region21
    $region20: #{encoder_forward.1} parent=1 // pred_region
      %67 = vsyncadd [#allocation9], 0
      %s69 = sshll.u32 %s4, 4
      %s70 = int_to_ptr.hbm [resolvable:$true] %s69
      %s71 = sshll.u32 [#allocation8], 4
      %s72 = int_to_ptr.vmem [resolvable:$true] %s71
      %74 = dma.hbm_to_vmem [thread:$0]  %s70, 64, %s72, [#allocation9]
    $region21: #{encoder_forward.1} parent=1 // pred_fallthru
      _
    // Predicated region
    $region22: #{encoder_forward.1} parent=1 // pred_check
      _
    $region23: #{encoder_forward.1} parent=1 // pred_check_branch
      %76 = sbr.rel (0) target = $region25
    $region24: #{encoder_forward.1} parent=1 // pred_region
      %78 = vsyncadd [#allocation9], 0
      %s79 = sshll.u32 %s5, 4
      %s80 = int_to_ptr.hbm [resolvable:$true] %s79
      %s81 = sshll.u32 [#allocation10], 4
      %s82 = int_to_ptr.vmem [resolvable:$true] %s81
      %87 = dma.hbm_to_vmem [thread:$0]  %s80, 16384, %s82, [#allocation9], 256, 256, 16
    $region25: #{encoder_forward.1} parent=1 // pred_fallthru
      _
    // Predicated region
    $region26: #{encoder_forward.1} parent=1 // pred_check
      _
    $region27: #{encoder_forward.1} parent=1 // pred_check_branch
      %89 = sbr.rel (0) target = $region29
    $region28: #{encoder_forward.1} parent=1 // pred_region
      %91 = vsyncadd [#allocation12], 0
      %s93 = sshll.u32 %s6, 4
      %s94 = int_to_ptr.hbm [resolvable:$true] %s93
      %s95 = sshll.u32 [#allocation11], 4
      %s96 = int_to_ptr.vmem [resolvable:$true] %s95
      %98 = dma.hbm_to_vmem [thread:$0]  %s94, 32, %s96, [#allocation12]
    $region29: #{encoder_forward.1} parent=1 // pred_fallthru
      _
    // Predicated region
    $region30: #{encoder_forward.1} parent=1 // pred_check
      _
    $region31: #{encoder_forward.1} parent=1 // pred_check_branch
      %100 = sbr.rel (0) target = $region33
    $region32: #{encoder_forward.1} parent=1 // pred_region
      %102 = vsyncadd [#allocation12], 0
      %s103 = sshll.u32 %s7, 4
      %s104 = int_to_ptr.hbm [resolvable:$true] %s103
      %s105 = sshll.u32 [#allocation13], 4
      %s106 = int_to_ptr.vmem [resolvable:$true] %s105
      %111 = dma.hbm_to_vmem [thread:$0]  %s104, 8192, %s106, [#allocation12], 256, 256, 16
    $region33: #{encoder_forward.1} parent=1 // pred_fallthru
      _
    // Predicated region
    $region34: #{encoder_forward.1} parent=1 // pred_check
      _
    $region35: #{encoder_forward.1} parent=1 // pred_check_branch
      %113 = sbr.rel (0) target = $region37
    $region36: #{encoder_forward.1} parent=1 // pred_region
      %115 = vsyncadd [#allocation15], 0
      %s117 = sshll.u32 %s8, 4
      %s118 = int_to_ptr.hbm [resolvable:$true] %s117
      %s119 = sshll.u32 [#allocation14], 4
      %s120 = int_to_ptr.vmem [resolvable:$true] %s119
      %122 = dma.hbm_to_vmem [thread:$0]  %s118, 32, %s120, [#allocation15]
    $region37: #{encoder_forward.1} parent=1 // pred_fallthru
      _
    // Predicated region
    $region38: #{encoder_forward.1} parent=1 // pred_check
      _
    $region39: #{encoder_forward.1} parent=1 // pred_check_branch
      %124 = sbr.rel (0) target = $region41
    $region40: #{encoder_forward.1} parent=1 // pred_region
      _
    $region41: #{encoder_forward.1} parent=1 // pred_fallthru
      _
    // Predicated region
    $region42: #{encoder_forward.1} parent=1 // pred_check
      _
    $region43: #{encoder_forward.1} parent=1 // pred_check_branch
      %126 = sbr.rel (0) target = $region45
    $region44: #{encoder_forward.1} parent=1 // pred_region
      %128 = vsyncadd [#allocation15], 0
      %s130 = sshll.u32 %s10, 4
      %s131 = int_to_ptr.hbm [resolvable:$true] %s130
      %s132 = sshll.u32 [#allocation16], 4
      %s133 = int_to_ptr.vmem [resolvable:$true] %s132
      %135 = dma.hbm_to_vmem [thread:$0]  %s131, 16, %s133, [#allocation15]
    $region45: #{encoder_forward.1} parent=1 // pred_fallthru
      _
    // Predicated region
    $region46: #{encoder_forward.1} parent=1 // pred_check
      _
    $region47: #{encoder_forward.1} parent=1 // pred_check_branch
      %137 = sbr.rel (0) target = $region49
    $region48: #{encoder_forward.1} parent=1 // pred_region
      %139 = vsyncadd [#allocation18], 0
      %s140 = sshll.u32 %s11, 4
      %s141 = int_to_ptr.hbm [resolvable:$true] %s140
      %s142 = sshll.u32 [#allocation17], 4
      %s143 = int_to_ptr.vmem [resolvable:$true] %s142
      %148 = dma.hbm_to_vmem [thread:$0]  %s141, 1024, %s143, [#allocation18], 128, 128, 8
    $region49: #{encoder_forward.1} parent=1 // pred_fallthru
      _
    // Predicated region
    $region50: #{encoder_forward.1} parent=1 // pred_check
      _
    $region51: #{encoder_forward.1} parent=1 // pred_check_branch
      %150 = sbr.rel (0) target = $region53
    $region52: #{encoder_forward.1} parent=1 // pred_region
      %152 = vsyncadd [#allocation18], 0
      %s154 = sshll.u32 %s12, 4
      %s155 = int_to_ptr.hbm [resolvable:$true] %s154
      %s156 = sshll.u32 [#allocation19], 4
      %s157 = int_to_ptr.vmem [resolvable:$true] %s156
      %159 = dma.hbm_to_vmem [thread:$0]  %s155, 16, %s157, [#allocation18]
    $region53: #{encoder_forward.1} parent=1 // pred_fallthru
      _
    // Predicated region
    $region54: #{encoder_forward.1} parent=1 // pred_check
      _
    $region55: #{encoder_forward.1} parent=1 // pred_check_branch
      %161 = sbr.rel (0) target = $region57
    $region56: #{encoder_forward.1} parent=1 // pred_region
      %163 = dma.done [#allocation3], 65536
    $region57: #{encoder_forward.1} parent=1 // pred_fallthru
      _
    // Predicated region
    $region58: #{encoder_forward.1} parent=1 // pred_check
      _
    $region59: #{encoder_forward.1} parent=1 // pred_check_branch
      %165 = sbr.rel (0) target = $region61
    $region60: #{encoder_forward.1} parent=1 // pred_region
      %167 = dma.done [#allocation6], 64
    $region61: #{encoder_forward.1} parent=1 // pred_fallthru
      _
    // Predicated region
    $region62: #{encoder_forward.1} parent=1 // pred_check
      _
    $region63: #{encoder_forward.1} parent=1 // pred_check_branch
      %169 = sbr.rel (0) target = $region65
    $region64: #{encoder_forward.1} parent=1 // pred_region
      %171 = dma.done [#allocation6], 32768
    $region65: #{encoder_forward.1} parent=1 // pred_fallthru
      _
    // Predicated region
    $region66: #{encoder_forward.1} parent=1 // pred_check
      _
    $region67: #{encoder_forward.1} parent=1 // pred_check_branch
      %173 = sbr.rel (0) target = $region69
    $region68: #{encoder_forward.1} parent=1 // pred_region
      %175 = dma.done [#allocation9], 64
    $region69: #{encoder_forward.1} parent=1 // pred_fallthru
      _
    // Predicated region
    $region70: #{encoder_forward.1} parent=1 // pred_check
      _
    $region71: #{encoder_forward.1} parent=1 // pred_check_branch
      %177 = sbr.rel (0) target = $region73
    $region72: #{encoder_forward.1} parent=1 // pred_region
      %179 = dma.done [#allocation9], 16384
    $region73: #{encoder_forward.1} parent=1 // pred_fallthru
      _
    // Predicated region
    $region74: #{encoder_forward.1} parent=1 // pred_check
      _
    $region75: #{encoder_forward.1} parent=1 // pred_check_branch
      %181 = sbr.rel (0) target = $region77
    $region76: #{encoder_forward.1} parent=1 // pred_region
      %183 = dma.done [#allocation12], 32
    $region77: #{encoder_forward.1} parent=1 // pred_fallthru
      _
    // Predicated region
    $region78: #{encoder_forward.1} parent=1 // pred_check
      _
    $region79: #{encoder_forward.1} parent=1 // pred_check_branch
      %185 = sbr.rel (0) target = $region81
    $region80: #{encoder_forward.1} parent=1 // pred_region
      %187 = dma.done [#allocation12], 8192
    $region81: #{encoder_forward.1} parent=1 // pred_fallthru
      _
    // Predicated region
    $region82: #{encoder_forward.1} parent=1 // pred_check
      _
    $region83: #{encoder_forward.1} parent=1 // pred_check_branch
      %189 = sbr.rel (0) target = $region85
    $region84: #{encoder_forward.1} parent=1 // pred_region
      %191 = dma.done [#allocation15], 32
    $region85: #{encoder_forward.1} parent=1 // pred_fallthru
      _
    // Predicated region
    $region86: #{encoder_forward.1} parent=1 // pred_check
      _
    $region87: #{encoder_forward.1} parent=1 // pred_check_branch
      %193 = sbr.rel (0) target = $region89
    $region88: #{encoder_forward.1} parent=1 // pred_region
      %195 = dma.done [#allocation15], 16
    $region89: #{encoder_forward.1} parent=1 // pred_fallthru
      _
    // Predicated region
    $region90: #{encoder_forward.1} parent=1 // pred_check
      _
    $region91: #{encoder_forward.1} parent=1 // pred_check_branch
      %197 = sbr.rel (0) target = $region93
    $region92: #{encoder_forward.1} parent=1 // pred_region
      %199 = dma.done [#allocation18], 1024
    $region93: #{encoder_forward.1} parent=1 // pred_fallthru
      _
    // Predicated region
    $region94: #{encoder_forward.1} parent=1 // pred_check
      _
    $region95: #{encoder_forward.1} parent=1 // pred_check_branch
      %201 = sbr.rel (0) target = $region97
    $region96: #{encoder_forward.1} parent=1 // pred_region
      %203 = dma.done [#allocation18], 16
    $region97: #{encoder_forward.1} parent=1 // pred_fallthru
      _
    %v204 = vld [vmem:[%s0] sm:$0xff]
    %v205 = vld [vmem:[%s0 + $0x8] sm:$0xff]
    %v206 = vld [vmem:[#allocation2] sm:$0xff]
    %v207 = vld [vmem:[#allocation2 + $0x8] sm:$0xff]
    %v208 = vld [vmem:[#allocation2 + $0x10] sm:$0xff]
    %v209 = vld [vmem:[#allocation2 + $0x18] sm:$0xff]
    %v210 = vld [vmem:[#allocation2 + $0x20] sm:$0xff]
    %v211 = vld [vmem:[#allocation2 + $0x28] sm:$0xff]
    %v212 = vld [vmem:[#allocation2 + $0x30] sm:$0xff]
    %v213 = vld [vmem:[#allocation2 + $0x38] sm:$0xff]
    %v214 = vld [vmem:[#allocation2 + $0x40] sm:$0xff]
    %v215 = vld [vmem:[#allocation2 + $0x48] sm:$0xff]
    %v216 = vld [vmem:[#allocation2 + $0x50] sm:$0xff]
    %v217 = vld [vmem:[#allocation2 + $0x58] sm:$0xff]
    %v218 = vld [vmem:[#allocation2 + $0x60] sm:$0xff]
    %v219 = vld [vmem:[#allocation2 + $0x68] sm:$0xff]
    %v220 = vld [vmem:[#allocation2 + $0x70] sm:$0xff]
    %v221 = vld [vmem:[#allocation2 + $0x78] sm:$0xff]
    %v222 = vld [vmem:[#allocation2 + $0x80] sm:$0xff]
    %v223 = vld [vmem:[#allocation2 + $0x88] sm:$0xff]
    %v224 = vld [vmem:[#allocation2 + $0x90] sm:$0xff]
    %v225 = vld [vmem:[#allocation2 + $0x98] sm:$0xff]
    %v226 = vld [vmem:[#allocation2 + $0xa0] sm:$0xff]
    %v227 = vld [vmem:[#allocation2 + $0xa8] sm:$0xff]
    %v228 = vld [vmem:[#allocation2 + $0xb0] sm:$0xff]
    %v229 = vld [vmem:[#allocation2 + $0xb8] sm:$0xff]
    %v230 = vld [vmem:[#allocation2 + $0xc0] sm:$0xff]
    %v231 = vld [vmem:[#allocation2 + $0xc8] sm:$0xff]
    %v232 = vld [vmem:[#allocation2 + $0xd0] sm:$0xff]
    %v233 = vld [vmem:[#allocation2 + $0xd8] sm:$0xff]
    %v234 = vld [vmem:[#allocation2 + $0xe0] sm:$0xff]
    %v235 = vld [vmem:[#allocation2 + $0xe8] sm:$0xff]
    %v236 = vld [vmem:[#allocation2 + $0xf0] sm:$0xff]
    %v237 = vld [vmem:[#allocation2 + $0xf8] sm:$0xff]
    %v238 = vld [vmem:[#allocation2 + $0x100] sm:$0xff]
    %v239 = vld [vmem:[#allocation2 + $0x108] sm:$0xff]
    %v240 = vld [vmem:[#allocation2 + $0x110] sm:$0xff]
    %v241 = vld [vmem:[#allocation2 + $0x118] sm:$0xff]
    %v242 = vld [vmem:[#allocation2 + $0x120] sm:$0xff]
    %v243 = vld [vmem:[#allocation2 + $0x128] sm:$0xff]
    %v244 = vld [vmem:[#allocation2 + $0x130] sm:$0xff]
    %v245 = vld [vmem:[#allocation2 + $0x138] sm:$0xff]
    %v246 = vld [vmem:[#allocation2 + $0x140] sm:$0xff]
    %v247 = vld [vmem:[#allocation2 + $0x148] sm:$0xff]
    %v248 = vld [vmem:[#allocation2 + $0x150] sm:$0xff]
    %v249 = vld [vmem:[#allocation2 + $0x158] sm:$0xff]
    %v250 = vld [vmem:[#allocation2 + $0x160] sm:$0xff]
    %v251 = vld [vmem:[#allocation2 + $0x168] sm:$0xff]
    %v252 = vld [vmem:[#allocation2 + $0x170] sm:$0xff]
    %v253 = vld [vmem:[#allocation2 + $0x178] sm:$0xff]
    %v254 = vld [vmem:[#allocation2 + $0x180] sm:$0xff]
    %v255 = vld [vmem:[#allocation2 + $0x188] sm:$0xff]
    %v256 = vld [vmem:[#allocation2 + $0x190] sm:$0xff]
    %v257 = vld [vmem:[#allocation2 + $0x198] sm:$0xff]
    %v258 = vld [vmem:[#allocation2 + $0x1a0] sm:$0xff]
    %v259 = vld [vmem:[#allocation2 + $0x1a8] sm:$0xff]
    %v260 = vld [vmem:[#allocation2 + $0x1b0] sm:$0xff]
    %v261 = vld [vmem:[#allocation2 + $0x1b8] sm:$0xff]
    %v262 = vld [vmem:[#allocation2 + $0x1c0] sm:$0xff]
    %v263 = vld [vmem:[#allocation2 + $0x1c8] sm:$0xff]
    %v264 = vld [vmem:[#allocation2 + $0x1d0] sm:$0xff]
    %v265 = vld [vmem:[#allocation2 + $0x1d8] sm:$0xff]
    %v266 = vld [vmem:[#allocation2 + $0x1e0] sm:$0xff]
    %v267 = vld [vmem:[#allocation2 + $0x1e8] sm:$0xff]
    %v268 = vld [vmem:[#allocation2 + $0x1f0] sm:$0xff]
    %v269 = vld [vmem:[#allocation2 + $0x1f8] sm:$0xff]
    %v270 = vld [vmem:[#allocation2 + $0x200] sm:$0xff]
    %v271 = vld [vmem:[#allocation2 + $0x208] sm:$0xff]
    %v272 = vld [vmem:[#allocation2 + $0x210] sm:$0xff]
    %v273 = vld [vmem:[#allocation2 + $0x218] sm:$0xff]
    %v274 = vld [vmem:[#allocation2 + $0x220] sm:$0xff]
    %v275 = vld [vmem:[#allocation2 + $0x228] sm:$0xff]
    %v276 = vld [vmem:[#allocation2 + $0x230] sm:$0xff]
    %v277 = vld [vmem:[#allocation2 + $0x238] sm:$0xff]
    %v278 = vld [vmem:[#allocation2 + $0x240] sm:$0xff]
    %v279 = vld [vmem:[#allocation2 + $0x248] sm:$0xff]
    %v280 = vld [vmem:[#allocation2 + $0x250] sm:$0xff]
    %v281 = vld [vmem:[#allocation2 + $0x258] sm:$0xff]
    %v282 = vld [vmem:[#allocation2 + $0x260] sm:$0xff]
    %v283 = vld [vmem:[#allocation2 + $0x268] sm:$0xff]
    %v284 = vld [vmem:[#allocation2 + $0x270] sm:$0xff]
    %v285 = vld [vmem:[#allocation2 + $0x278] sm:$0xff]
    %v286 = vld [vmem:[#allocation2 + $0x280] sm:$0xff]
    %v287 = vld [vmem:[#allocation2 + $0x288] sm:$0xff]
    %v288 = vld [vmem:[#allocation2 + $0x290] sm:$0xff]
    %v289 = vld [vmem:[#allocation2 + $0x298] sm:$0xff]
    %v290 = vld [vmem:[#allocation2 + $0x2a0] sm:$0xff]
    %v291 = vld [vmem:[#allocation2 + $0x2a8] sm:$0xff]
    %v292 = vld [vmem:[#allocation2 + $0x2b0] sm:$0xff]
    %v293 = vld [vmem:[#allocation2 + $0x2b8] sm:$0xff]
    %v294 = vld [vmem:[#allocation2 + $0x2c0] sm:$0xff]
    %v295 = vld [vmem:[#allocation2 + $0x2c8] sm:$0xff]
    %v296 = vld [vmem:[#allocation2 + $0x2d0] sm:$0xff]
    %v297 = vld [vmem:[#allocation2 + $0x2d8] sm:$0xff]
    %v298 = vld [vmem:[#allocation2 + $0x2e0] sm:$0xff]
    %v299 = vld [vmem:[#allocation2 + $0x2e8] sm:$0xff]
    %v300 = vld [vmem:[#allocation2 + $0x2f0] sm:$0xff]
    %v301 = vld [vmem:[#allocation2 + $0x2f8] sm:$0xff]
    %v302 = vld [vmem:[#allocation2 + $0x300] sm:$0xff]
    %v303 = vld [vmem:[#allocation2 + $0x308] sm:$0xff]
    %v304 = vld [vmem:[#allocation2 + $0x310] sm:$0xff]
    %v305 = vld [vmem:[#allocation2 + $0x318] sm:$0xff]
    %v306 = vld [vmem:[#allocation2 + $0x320] sm:$0xff]
    %v307 = vld [vmem:[#allocation2 + $0x328] sm:$0xff]
    %v308 = vld [vmem:[#allocation2 + $0x330] sm:$0xff]
    %v309 = vld [vmem:[#allocation2 + $0x338] sm:$0xff]
    %v310 = vld [vmem:[#allocation2 + $0x340] sm:$0xff]
    %v311 = vld [vmem:[#allocation2 + $0x348] sm:$0xff]
    %v312 = vld [vmem:[#allocation2 + $0x350] sm:$0xff]
    %v313 = vld [vmem:[#allocation2 + $0x358] sm:$0xff]
    %v314 = vld [vmem:[#allocation2 + $0x360] sm:$0xff]
    %v315 = vld [vmem:[#allocation2 + $0x368] sm:$0xff]
    %v316 = vld [vmem:[#allocation2 + $0x370] sm:$0xff]
    %v317 = vld [vmem:[#allocation2 + $0x378] sm:$0xff]
    %v318 = vld [vmem:[#allocation2 + $0x380] sm:$0xff]
    %v319 = vld [vmem:[#allocation2 + $0x388] sm:$0xff]
    %v320 = vld [vmem:[#allocation2 + $0x390] sm:$0xff]
    %v321 = vld [vmem:[#allocation2 + $0x398] sm:$0xff]
    %v322 = vld [vmem:[#allocation2 + $0x3a0] sm:$0xff]
    %v323 = vld [vmem:[#allocation2 + $0x3a8] sm:$0xff]
    %v324 = vld [vmem:[#allocation2 + $0x3b0] sm:$0xff]
    %v325 = vld [vmem:[#allocation2 + $0x3b8] sm:$0xff]
    %v326 = vld [vmem:[#allocation2 + $0x3c0] sm:$0xff]
    %v327 = vld [vmem:[#allocation2 + $0x3c8] sm:$0xff]
    %v328 = vld [vmem:[#allocation2 + $0x3d0] sm:$0xff]
    %v329 = vld [vmem:[#allocation2 + $0x3d8] sm:$0xff]
    %v330 = vld [vmem:[#allocation2 + $0x3e0] sm:$0xff]
    %v331 = vld [vmem:[#allocation2 + $0x3e8] sm:$0xff]
    %v332 = vld [vmem:[#allocation2 + $0x3f0] sm:$0xff]
    %v333 = vld [vmem:[#allocation2 + $0x3f8] sm:$0xff]
    %v334 = vld [vmem:[#allocation2 + $0x400] sm:$0xff]
    %v335 = vld [vmem:[#allocation2 + $0x408] sm:$0xff]
    %v336 = vld [vmem:[#allocation2 + $0x410] sm:$0xff]
    %v337 = vld [vmem:[#allocation2 + $0x418] sm:$0xff]
    %v338 = vld [vmem:[#allocation2 + $0x420] sm:$0xff]
    %v339 = vld [vmem:[#allocation2 + $0x428] sm:$0xff]
    %v340 = vld [vmem:[#allocation2 + $0x430] sm:$0xff]
    %v341 = vld [vmem:[#allocation2 + $0x438] sm:$0xff]
    %v342 = vld [vmem:[#allocation2 + $0x440] sm:$0xff]
    %v343 = vld [vmem:[#allocation2 + $0x448] sm:$0xff]
    %v344 = vld [vmem:[#allocation2 + $0x450] sm:$0xff]
    %v345 = vld [vmem:[#allocation2 + $0x458] sm:$0xff]
    %v346 = vld [vmem:[#allocation2 + $0x460] sm:$0xff]
    %v347 = vld [vmem:[#allocation2 + $0x468] sm:$0xff]
    %v348 = vld [vmem:[#allocation2 + $0x470] sm:$0xff]
    %v349 = vld [vmem:[#allocation2 + $0x478] sm:$0xff]
    %v350 = vld [vmem:[#allocation2 + $0x480] sm:$0xff]
    %v351 = vld [vmem:[#allocation2 + $0x488] sm:$0xff]
    %v352 = vld [vmem:[#allocation2 + $0x490] sm:$0xff]
    %v353 = vld [vmem:[#allocation2 + $0x498] sm:$0xff]
    %v354 = vld [vmem:[#allocation2 + $0x4a0] sm:$0xff]
    %v355 = vld [vmem:[#allocation2 + $0x4a8] sm:$0xff]
    %v356 = vld [vmem:[#allocation2 + $0x4b0] sm:$0xff]
    %v357 = vld [vmem:[#allocation2 + $0x4b8] sm:$0xff]
    %v358 = vld [vmem:[#allocation2 + $0x4c0] sm:$0xff]
    %v359 = vld [vmem:[#allocation2 + $0x4c8] sm:$0xff]
    %v360 = vld [vmem:[#allocation2 + $0x4d0] sm:$0xff]
    %v361 = vld [vmem:[#allocation2 + $0x4d8] sm:$0xff]
    %v362 = vld [vmem:[#allocation2 + $0x4e0] sm:$0xff]
    %v363 = vld [vmem:[#allocation2 + $0x4e8] sm:$0xff]
    %v364 = vld [vmem:[#allocation2 + $0x4f0] sm:$0xff]
    %v365 = vld [vmem:[#allocation2 + $0x4f8] sm:$0xff]
    %v366 = vld [vmem:[#allocation2 + $0x500] sm:$0xff]
    %v367 = vld [vmem:[#allocation2 + $0x508] sm:$0xff]
    %v368 = vld [vmem:[#allocation2 + $0x510] sm:$0xff]
    %v369 = vld [vmem:[#allocation2 + $0x518] sm:$0xff]
    %v370 = vld [vmem:[#allocation2 + $0x520] sm:$0xff]
    %v371 = vld [vmem:[#allocation2 + $0x528] sm:$0xff]
    %v372 = vld [vmem:[#allocation2 + $0x530] sm:$0xff]
    %v373 = vld [vmem:[#allocation2 + $0x538] sm:$0xff]
    %v374 = vld [vmem:[#allocation2 + $0x540] sm:$0xff]
    %v375 = vld [vmem:[#allocation2 + $0x548] sm:$0xff]
    %v376 = vld [vmem:[#allocation2 + $0x550] sm:$0xff]
    %v377 = vld [vmem:[#allocation2 + $0x558] sm:$0xff]
    %v378 = vld [vmem:[#allocation2 + $0x560] sm:$0xff]
    %v379 = vld [vmem:[#allocation2 + $0x568] sm:$0xff]
    %v380 = vld [vmem:[#allocation2 + $0x570] sm:$0xff]
    %v381 = vld [vmem:[#allocation2 + $0x578] sm:$0xff]
    %v382 = vld [vmem:[#allocation2 + $0x580] sm:$0xff]
    %v383 = vld [vmem:[#allocation2 + $0x588] sm:$0xff]
    %v384 = vld [vmem:[#allocation2 + $0x590] sm:$0xff]
    %v385 = vld [vmem:[#allocation2 + $0x598] sm:$0xff]
    %v386 = vld [vmem:[#allocation2 + $0x5a0] sm:$0xff]
    %v387 = vld [vmem:[#allocation2 + $0x5a8] sm:$0xff]
    %v388 = vld [vmem:[#allocation2 + $0x5b0] sm:$0xff]
    %v389 = vld [vmem:[#allocation2 + $0x5b8] sm:$0xff]
    %v390 = vld [vmem:[#allocation2 + $0x5c0] sm:$0xff]
    %v391 = vld [vmem:[#allocation2 + $0x5c8] sm:$0xff]
    %v392 = vld [vmem:[#allocation2 + $0x5d0] sm:$0xff]
    %v393 = vld [vmem:[#allocation2 + $0x5d8] sm:$0xff]
    %v394 = vld [vmem:[#allocation2 + $0x5e0] sm:$0xff]
    %v395 = vld [vmem:[#allocation2 + $0x5e8] sm:$0xff]
    %v396 = vld [vmem:[#allocation2 + $0x5f0] sm:$0xff]
    %v397 = vld [vmem:[#allocation2 + $0x5f8] sm:$0xff]
    %v398 = vld [vmem:[#allocation2 + $0x600] sm:$0xff]
    %v399 = vld [vmem:[#allocation2 + $0x608] sm:$0xff]
    %v400 = vld [vmem:[#allocation2 + $0x610] sm:$0xff]
    %v401 = vld [vmem:[#allocation2 + $0x618] sm:$0xff]
    %v402 = vld [vmem:[#allocation2 + $0x620] sm:$0xff]
    %v403 = vld [vmem:[#allocation2 + $0x628] sm:$0xff]
    %v404 = vld [vmem:[#allocation2 + $0x630] sm:$0xff]
    %v405 = vld [vmem:[#allocation2 + $0x638] sm:$0xff]
    %v406 = vld [vmem:[#allocation2 + $0x640] sm:$0xff]
    %v407 = vld [vmem:[#allocation2 + $0x648] sm:$0xff]
    %v408 = vld [vmem:[#allocation2 + $0x650] sm:$0xff]
    %v409 = vld [vmem:[#allocation2 + $0x658] sm:$0xff]
    %v410 = vld [vmem:[#allocation2 + $0x660] sm:$0xff]
    %v411 = vld [vmem:[#allocation2 + $0x668] sm:$0xff]
    %v412 = vld [vmem:[#allocation2 + $0x670] sm:$0xff]
    %v413 = vld [vmem:[#allocation2 + $0x678] sm:$0xff]
    %v414 = vld [vmem:[#allocation2 + $0x680] sm:$0xff]
    %v415 = vld [vmem:[#allocation2 + $0x688] sm:$0xff]
    %v416 = vld [vmem:[#allocation2 + $0x690] sm:$0xff]
    %v417 = vld [vmem:[#allocation2 + $0x698] sm:$0xff]
    %v418 = vld [vmem:[#allocation2 + $0x6a0] sm:$0xff]
    %v419 = vld [vmem:[#allocation2 + $0x6a8] sm:$0xff]
    %v420 = vld [vmem:[#allocation2 + $0x6b0] sm:$0xff]
    %v421 = vld [vmem:[#allocation2 + $0x6b8] sm:$0xff]
    %v422 = vld [vmem:[#allocation2 + $0x6c0] sm:$0xff]
    %v423 = vld [vmem:[#allocation2 + $0x6c8] sm:$0xff]
    %v424 = vld [vmem:[#allocation2 + $0x6d0] sm:$0xff]
    %v425 = vld [vmem:[#allocation2 + $0x6d8] sm:$0xff]
    %v426 = vld [vmem:[#allocation2 + $0x6e0] sm:$0xff]
    %v427 = vld [vmem:[#allocation2 + $0x6e8] sm:$0xff]
    %v428 = vld [vmem:[#allocation2 + $0x6f0] sm:$0xff]
    %v429 = vld [vmem:[#allocation2 + $0x6f8] sm:$0xff]
    %v430 = vld [vmem:[#allocation2 + $0x700] sm:$0xff]
    %v431 = vld [vmem:[#allocation2 + $0x708] sm:$0xff]
    %v432 = vld [vmem:[#allocation2 + $0x710] sm:$0xff]
    %v433 = vld [vmem:[#allocation2 + $0x718] sm:$0xff]
    %v434 = vld [vmem:[#allocation2 + $0x720] sm:$0xff]
    %v435 = vld [vmem:[#allocation2 + $0x728] sm:$0xff]
    %v436 = vld [vmem:[#allocation2 + $0x730] sm:$0xff]
    %v437 = vld [vmem:[#allocation2 + $0x738] sm:$0xff]
    %v438 = vld [vmem:[#allocation2 + $0x740] sm:$0xff]
    %v439 = vld [vmem:[#allocation2 + $0x748] sm:$0xff]
    %v440 = vld [vmem:[#allocation2 + $0x750] sm:$0xff]
    %v441 = vld [vmem:[#allocation2 + $0x758] sm:$0xff]
    %v442 = vld [vmem:[#allocation2 + $0x760] sm:$0xff]
    %v443 = vld [vmem:[#allocation2 + $0x768] sm:$0xff]
    %v444 = vld [vmem:[#allocation2 + $0x770] sm:$0xff]
    %v445 = vld [vmem:[#allocation2 + $0x778] sm:$0xff]
    %v446 = vld [vmem:[#allocation2 + $0x780] sm:$0xff]
    %v447 = vld [vmem:[#allocation2 + $0x788] sm:$0xff]
    %v448 = vld [vmem:[#allocation2 + $0x790] sm:$0xff]
    %v449 = vld [vmem:[#allocation2 + $0x798] sm:$0xff]
    %v450 = vld [vmem:[#allocation2 + $0x7a0] sm:$0xff]
    %v451 = vld [vmem:[#allocation2 + $0x7a8] sm:$0xff]
    %v452 = vld [vmem:[#allocation2 + $0x7b0] sm:$0xff]
    %v453 = vld [vmem:[#allocation2 + $0x7b8] sm:$0xff]
    %v454 = vld [vmem:[#allocation2 + $0x7c0] sm:$0xff]
    %v455 = vld [vmem:[#allocation2 + $0x7c8] sm:$0xff]
    %v456 = vld [vmem:[#allocation2 + $0x7d0] sm:$0xff]
    %v457 = vld [vmem:[#allocation2 + $0x7d8] sm:$0xff]
    %v458 = vld [vmem:[#allocation2 + $0x7e0] sm:$0xff]
    %v459 = vld [vmem:[#allocation2 + $0x7e8] sm:$0xff]
    %v460 = vld [vmem:[#allocation2 + $0x7f0] sm:$0xff]
    %v461 = vld [vmem:[#allocation2 + $0x7f8] sm:$0xff]
    %v462 = vld [vmem:[#allocation2 + $0x800] sm:$0xff]
    %v463 = vld [vmem:[#allocation2 + $0x808] sm:$0xff]
    %v464 = vld [vmem:[#allocation2 + $0x810] sm:$0xff]
    %v465 = vld [vmem:[#allocation2 + $0x818] sm:$0xff]
    %v466 = vld [vmem:[#allocation2 + $0x820] sm:$0xff]
    %v467 = vld [vmem:[#allocation2 + $0x828] sm:$0xff]
    %v468 = vld [vmem:[#allocation2 + $0x830] sm:$0xff]
    %v469 = vld [vmem:[#allocation2 + $0x838] sm:$0xff]
    %v470 = vld [vmem:[#allocation2 + $0x840] sm:$0xff]
    %v471 = vld [vmem:[#allocation2 + $0x848] sm:$0xff]
    %v472 = vld [vmem:[#allocation2 + $0x850] sm:$0xff]
    %v473 = vld [vmem:[#allocation2 + $0x858] sm:$0xff]
    %v474 = vld [vmem:[#allocation2 + $0x860] sm:$0xff]
    %v475 = vld [vmem:[#allocation2 + $0x868] sm:$0xff]
    %v476 = vld [vmem:[#allocation2 + $0x870] sm:$0xff]
    %v477 = vld [vmem:[#allocation2 + $0x878] sm:$0xff]
    %v478 = vld [vmem:[#allocation2 + $0x880] sm:$0xff]
    %v479 = vld [vmem:[#allocation2 + $0x888] sm:$0xff]
    %v480 = vld [vmem:[#allocation2 + $0x890] sm:$0xff]
    %v481 = vld [vmem:[#allocation2 + $0x898] sm:$0xff]
    %v482 = vld [vmem:[#allocation2 + $0x8a0] sm:$0xff]
    %v483 = vld [vmem:[#allocation2 + $0x8a8] sm:$0xff]
    %v484 = vld [vmem:[#allocation2 + $0x8b0] sm:$0xff]
    %v485 = vld [vmem:[#allocation2 + $0x8b8] sm:$0xff]
    %v486 = vld [vmem:[#allocation2 + $0x8c0] sm:$0xff]
    %v487 = vld [vmem:[#allocation2 + $0x8c8] sm:$0xff]
    %v488 = vld [vmem:[#allocation2 + $0x8d0] sm:$0xff]
    %v489 = vld [vmem:[#allocation2 + $0x8d8] sm:$0xff]
    %v490 = vld [vmem:[#allocation2 + $0x8e0] sm:$0xff]
    %v491 = vld [vmem:[#allocation2 + $0x8e8] sm:$0xff]
    %v492 = vld [vmem:[#allocation2 + $0x8f0] sm:$0xff]
    %v493 = vld [vmem:[#allocation2 + $0x8f8] sm:$0xff]
    %v494 = vld [vmem:[#allocation2 + $0x900] sm:$0xff]
    %v495 = vld [vmem:[#allocation2 + $0x908] sm:$0xff]
    %v496 = vld [vmem:[#allocation2 + $0x910] sm:$0xff]
    %v497 = vld [vmem:[#allocation2 + $0x918] sm:$0xff]
    %v498 = vld [vmem:[#allocation2 + $0x920] sm:$0xff]
    %v499 = vld [vmem:[#allocation2 + $0x928] sm:$0xff]
    %v500 = vld [vmem:[#allocation2 + $0x930] sm:$0xff]
    %v501 = vld [vmem:[#allocation2 + $0x938] sm:$0xff]
    %v502 = vld [vmem:[#allocation2 + $0x940] sm:$0xff]
    %v503 = vld [vmem:[#allocation2 + $0x948] sm:$0xff]
    %v504 = vld [vmem:[#allocation2 + $0x950] sm:$0xff]
    %v505 = vld [vmem:[#allocation2 + $0x958] sm:$0xff]
    %v506 = vld [vmem:[#allocation2 + $0x960] sm:$0xff]
    %v507 = vld [vmem:[#allocation2 + $0x968] sm:$0xff]
    %v508 = vld [vmem:[#allocation2 + $0x970] sm:$0xff]
    %v509 = vld [vmem:[#allocation2 + $0x978] sm:$0xff]
    %v510 = vld [vmem:[#allocation2 + $0x980] sm:$0xff]
    %v511 = vld [vmem:[#allocation2 + $0x988] sm:$0xff]
    %v512 = vld [vmem:[#allocation2 + $0x990] sm:$0xff]
    %v513 = vld [vmem:[#allocation2 + $0x998] sm:$0xff]
    %v514 = vld [vmem:[#allocation2 + $0x9a0] sm:$0xff]
    %v515 = vld [vmem:[#allocation2 + $0x9a8] sm:$0xff]
    %v516 = vld [vmem:[#allocation2 + $0x9b0] sm:$0xff]
    %v517 = vld [vmem:[#allocation2 + $0x9b8] sm:$0xff]
    %v518 = vld [vmem:[#allocation2 + $0x9c0] sm:$0xff]
    %v519 = vld [vmem:[#allocation2 + $0x9c8] sm:$0xff]
    %v520 = vld [vmem:[#allocation2 + $0x9d0] sm:$0xff]
    %v521 = vld [vmem:[#allocation2 + $0x9d8] sm:$0xff]
    %v522 = vld [vmem:[#allocation2 + $0x9e0] sm:$0xff]
    %v523 = vld [vmem:[#allocation2 + $0x9e8] sm:$0xff]
    %v524 = vld [vmem:[#allocation2 + $0x9f0] sm:$0xff]
    %v525 = vld [vmem:[#allocation2 + $0x9f8] sm:$0xff]
    %v526 = vld [vmem:[#allocation2 + $0xa00] sm:$0xff]
    %v527 = vld [vmem:[#allocation2 + $0xa08] sm:$0xff]
    %v528 = vld [vmem:[#allocation2 + $0xa10] sm:$0xff]
    %v529 = vld [vmem:[#allocation2 + $0xa18] sm:$0xff]
    %v530 = vld [vmem:[#allocation2 + $0xa20] sm:$0xff]
    %v531 = vld [vmem:[#allocation2 + $0xa28] sm:$0xff]
    %v532 = vld [vmem:[#allocation2 + $0xa30] sm:$0xff]
    %v533 = vld [vmem:[#allocation2 + $0xa38] sm:$0xff]
    %v534 = vld [vmem:[#allocation2 + $0xa40] sm:$0xff]
    %v535 = vld [vmem:[#allocation2 + $0xa48] sm:$0xff]
    %v536 = vld [vmem:[#allocation2 + $0xa50] sm:$0xff]
    %v537 = vld [vmem:[#allocation2 + $0xa58] sm:$0xff]
    %v538 = vld [vmem:[#allocation2 + $0xa60] sm:$0xff]
    %v539 = vld [vmem:[#allocation2 + $0xa68] sm:$0xff]
    %v540 = vld [vmem:[#allocation2 + $0xa70] sm:$0xff]
    %v541 = vld [vmem:[#allocation2 + $0xa78] sm:$0xff]
    %v542 = vld [vmem:[#allocation2 + $0xa80] sm:$0xff]
    %v543 = vld [vmem:[#allocation2 + $0xa88] sm:$0xff]
    %v544 = vld [vmem:[#allocation2 + $0xa90] sm:$0xff]
    %v545 = vld [vmem:[#allocation2 + $0xa98] sm:$0xff]
    %v546 = vld [vmem:[#allocation2 + $0xaa0] sm:$0xff]
    %v547 = vld [vmem:[#allocation2 + $0xaa8] sm:$0xff]
    %v548 = vld [vmem:[#allocation2 + $0xab0] sm:$0xff]
    %v549 = vld [vmem:[#allocation2 + $0xab8] sm:$0xff]
    %v550 = vld [vmem:[#allocation2 + $0xac0] sm:$0xff]
    %v551 = vld [vmem:[#allocation2 + $0xac8] sm:$0xff]
    %v552 = vld [vmem:[#allocation2 + $0xad0] sm:$0xff]
    %v553 = vld [vmem:[#allocation2 + $0xad8] sm:$0xff]
    %v554 = vld [vmem:[#allocation2 + $0xae0] sm:$0xff]
    %v555 = vld [vmem:[#allocation2 + $0xae8] sm:$0xff]
    %v556 = vld [vmem:[#allocation2 + $0xaf0] sm:$0xff]
    %v557 = vld [vmem:[#allocation2 + $0xaf8] sm:$0xff]
    %v558 = vld [vmem:[#allocation2 + $0xb00] sm:$0xff]
    %v559 = vld [vmem:[#allocation2 + $0xb08] sm:$0xff]
    %v560 = vld [vmem:[#allocation2 + $0xb10] sm:$0xff]
    %v561 = vld [vmem:[#allocation2 + $0xb18] sm:$0xff]
    %v562 = vld [vmem:[#allocation2 + $0xb20] sm:$0xff]
    %v563 = vld [vmem:[#allocation2 + $0xb28] sm:$0xff]
    %v564 = vld [vmem:[#allocation2 + $0xb30] sm:$0xff]
    %v565 = vld [vmem:[#allocation2 + $0xb38] sm:$0xff]
    %v566 = vld [vmem:[#allocation2 + $0xb40] sm:$0xff]
    %v567 = vld [vmem:[#allocation2 + $0xb48] sm:$0xff]
    %v568 = vld [vmem:[#allocation2 + $0xb50] sm:$0xff]
    %v569 = vld [vmem:[#allocation2 + $0xb58] sm:$0xff]
    %v570 = vld [vmem:[#allocation2 + $0xb60] sm:$0xff]
    %v571 = vld [vmem:[#allocation2 + $0xb68] sm:$0xff]
    %v572 = vld [vmem:[#allocation2 + $0xb70] sm:$0xff]
    %v573 = vld [vmem:[#allocation2 + $0xb78] sm:$0xff]
    %v574 = vld [vmem:[#allocation2 + $0xb80] sm:$0xff]
    %v575 = vld [vmem:[#allocation2 + $0xb88] sm:$0xff]
    %v576 = vld [vmem:[#allocation2 + $0xb90] sm:$0xff]
    %v577 = vld [vmem:[#allocation2 + $0xb98] sm:$0xff]
    %v578 = vld [vmem:[#allocation2 + $0xba0] sm:$0xff]
    %v579 = vld [vmem:[#allocation2 + $0xba8] sm:$0xff]
    %v580 = vld [vmem:[#allocation2 + $0xbb0] sm:$0xff]
    %v581 = vld [vmem:[#allocation2 + $0xbb8] sm:$0xff]
    %v582 = vld [vmem:[#allocation2 + $0xbc0] sm:$0xff]
    %v583 = vld [vmem:[#allocation2 + $0xbc8] sm:$0xff]
    %v584 = vld [vmem:[#allocation2 + $0xbd0] sm:$0xff]
    %v585 = vld [vmem:[#allocation2 + $0xbd8] sm:$0xff]
    %v586 = vld [vmem:[#allocation2 + $0xbe0] sm:$0xff]
    %v587 = vld [vmem:[#allocation2 + $0xbe8] sm:$0xff]
    %v588 = vld [vmem:[#allocation2 + $0xbf0] sm:$0xff]
    %v589 = vld [vmem:[#allocation2 + $0xbf8] sm:$0xff]
    %v590 = vld [vmem:[#allocation2 + $0xc00] sm:$0xff]
    %v591 = vld [vmem:[#allocation2 + $0xc08] sm:$0xff]
    %v592 = vld [vmem:[#allocation2 + $0xc10] sm:$0xff]
    %v593 = vld [vmem:[#allocation2 + $0xc18] sm:$0xff]
    %v594 = vld [vmem:[#allocation2 + $0xc20] sm:$0xff]
    %v595 = vld [vmem:[#allocation2 + $0xc28] sm:$0xff]
    %v596 = vld [vmem:[#allocation2 + $0xc30] sm:$0xff]
    %v597 = vld [vmem:[#allocation2 + $0xc38] sm:$0xff]
    %v598 = vld [vmem:[#allocation2 + $0xc40] sm:$0xff]
    %v599 = vld [vmem:[#allocation2 + $0xc48] sm:$0xff]
    %v600 = vld [vmem:[#allocation2 + $0xc50] sm:$0xff]
    %v601 = vld [vmem:[#allocation2 + $0xc58] sm:$0xff]
    %v602 = vld [vmem:[#allocation2 + $0xc60] sm:$0xff]
    %v603 = vld [vmem:[#allocation2 + $0xc68] sm:$0xff]
    %v604 = vld [vmem:[#allocation2 + $0xc70] sm:$0xff]
    %v605 = vld [vmem:[#allocation2 + $0xc78] sm:$0xff]
    %v606 = vld [vmem:[#allocation2 + $0xc80] sm:$0xff]
    %v607 = vld [vmem:[#allocation2 + $0xc88] sm:$0xff]
    %v608 = vld [vmem:[#allocation2 + $0xc90] sm:$0xff]
    %v609 = vld [vmem:[#allocation2 + $0xc98] sm:$0xff]
    %v610 = vld [vmem:[#allocation2 + $0xca0] sm:$0xff]
    %v611 = vld [vmem:[#allocation2 + $0xca8] sm:$0xff]
    %v612 = vld [vmem:[#allocation2 + $0xcb0] sm:$0xff]
    %v613 = vld [vmem:[#allocation2 + $0xcb8] sm:$0xff]
    %v614 = vld [vmem:[#allocation2 + $0xcc0] sm:$0xff]
    %v615 = vld [vmem:[#allocation2 + $0xcc8] sm:$0xff]
    %v616 = vld [vmem:[#allocation2 + $0xcd0] sm:$0xff]
    %v617 = vld [vmem:[#allocation2 + $0xcd8] sm:$0xff]
    %v618 = vld [vmem:[#allocation2 + $0xce0] sm:$0xff]
    %v619 = vld [vmem:[#allocation2 + $0xce8] sm:$0xff]
    %v620 = vld [vmem:[#allocation2 + $0xcf0] sm:$0xff]
    %v621 = vld [vmem:[#allocation2 + $0xcf8] sm:$0xff]
    %v622 = vld [vmem:[#allocation2 + $0xd00] sm:$0xff]
    %v623 = vld [vmem:[#allocation2 + $0xd08] sm:$0xff]
    %v624 = vld [vmem:[#allocation2 + $0xd10] sm:$0xff]
    %v625 = vld [vmem:[#allocation2 + $0xd18] sm:$0xff]
    %v626 = vld [vmem:[#allocation2 + $0xd20] sm:$0xff]
    %v627 = vld [vmem:[#allocation2 + $0xd28] sm:$0xff]
    %v628 = vld [vmem:[#allocation2 + $0xd30] sm:$0xff]
    %v629 = vld [vmem:[#allocation2 + $0xd38] sm:$0xff]
    %v630 = vld [vmem:[#allocation2 + $0xd40] sm:$0xff]
    %v631 = vld [vmem:[#allocation2 + $0xd48] sm:$0xff]
    %v632 = vld [vmem:[#allocation2 + $0xd50] sm:$0xff]
    %v633 = vld [vmem:[#allocation2 + $0xd58] sm:$0xff]
    %v634 = vld [vmem:[#allocation2 + $0xd60] sm:$0xff]
    %v635 = vld [vmem:[#allocation2 + $0xd68] sm:$0xff]
    %v636 = vld [vmem:[#allocation2 + $0xd70] sm:$0xff]
    %v637 = vld [vmem:[#allocation2 + $0xd78] sm:$0xff]
    %v638 = vld [vmem:[#allocation2 + $0xd80] sm:$0xff]
    %v639 = vld [vmem:[#allocation2 + $0xd88] sm:$0xff]
    %v640 = vld [vmem:[#allocation2 + $0xd90] sm:$0xff]
    %v641 = vld [vmem:[#allocation2 + $0xd98] sm:$0xff]
    %v642 = vld [vmem:[#allocation2 + $0xda0] sm:$0xff]
    %v643 = vld [vmem:[#allocation2 + $0xda8] sm:$0xff]
    %v644 = vld [vmem:[#allocation2 + $0xdb0] sm:$0xff]
    %v645 = vld [vmem:[#allocation2 + $0xdb8] sm:$0xff]
    %v646 = vld [vmem:[#allocation2 + $0xdc0] sm:$0xff]
    %v647 = vld [vmem:[#allocation2 + $0xdc8] sm:$0xff]
    %v648 = vld [vmem:[#allocation2 + $0xdd0] sm:$0xff]
    %v649 = vld [vmem:[#allocation2 + $0xdd8] sm:$0xff]
    %v650 = vld [vmem:[#allocation2 + $0xde0] sm:$0xff]
    %v651 = vld [vmem:[#allocation2 + $0xde8] sm:$0xff]
    %v652 = vld [vmem:[#allocation2 + $0xdf0] sm:$0xff]
    %v653 = vld [vmem:[#allocation2 + $0xdf8] sm:$0xff]
    %v654 = vld [vmem:[#allocation2 + $0xe00] sm:$0xff]
    %v655 = vld [vmem:[#allocation2 + $0xe08] sm:$0xff]
    %v656 = vld [vmem:[#allocation2 + $0xe10] sm:$0xff]
    %v657 = vld [vmem:[#allocation2 + $0xe18] sm:$0xff]
    %v658 = vld [vmem:[#allocation2 + $0xe20] sm:$0xff]
    %v659 = vld [vmem:[#allocation2 + $0xe28] sm:$0xff]
    %v660 = vld [vmem:[#allocation2 + $0xe30] sm:$0xff]
    %v661 = vld [vmem:[#allocation2 + $0xe38] sm:$0xff]
    %v662 = vld [vmem:[#allocation2 + $0xe40] sm:$0xff]
    %v663 = vld [vmem:[#allocation2 + $0xe48] sm:$0xff]
    %v664 = vld [vmem:[#allocation2 + $0xe50] sm:$0xff]
    %v665 = vld [vmem:[#allocation2 + $0xe58] sm:$0xff]
    %v666 = vld [vmem:[#allocation2 + $0xe60] sm:$0xff]
    %v667 = vld [vmem:[#allocation2 + $0xe68] sm:$0xff]
    %v668 = vld [vmem:[#allocation2 + $0xe70] sm:$0xff]
    %v669 = vld [vmem:[#allocation2 + $0xe78] sm:$0xff]
    %v670 = vld [vmem:[#allocation2 + $0xe80] sm:$0xff]
    %v671 = vld [vmem:[#allocation2 + $0xe88] sm:$0xff]
    %v672 = vld [vmem:[#allocation2 + $0xe90] sm:$0xff]
    %v673 = vld [vmem:[#allocation2 + $0xe98] sm:$0xff]
    %v674 = vld [vmem:[#allocation2 + $0xea0] sm:$0xff]
    %v675 = vld [vmem:[#allocation2 + $0xea8] sm:$0xff]
    %v676 = vld [vmem:[#allocation2 + $0xeb0] sm:$0xff]
    %v677 = vld [vmem:[#allocation2 + $0xeb8] sm:$0xff]
    %v678 = vld [vmem:[#allocation2 + $0xec0] sm:$0xff]
    %v679 = vld [vmem:[#allocation2 + $0xec8] sm:$0xff]
    %v680 = vld [vmem:[#allocation2 + $0xed0] sm:$0xff]
    %v681 = vld [vmem:[#allocation2 + $0xed8] sm:$0xff]
    %v682 = vld [vmem:[#allocation2 + $0xee0] sm:$0xff]
    %v683 = vld [vmem:[#allocation2 + $0xee8] sm:$0xff]
    %v684 = vld [vmem:[#allocation2 + $0xef0] sm:$0xff]
    %v685 = vld [vmem:[#allocation2 + $0xef8] sm:$0xff]
    %v686 = vld [vmem:[#allocation2 + $0xf00] sm:$0xff]
    %v687 = vld [vmem:[#allocation2 + $0xf08] sm:$0xff]
    %v688 = vld [vmem:[#allocation2 + $0xf10] sm:$0xff]
    %v689 = vld [vmem:[#allocation2 + $0xf18] sm:$0xff]
    %v690 = vld [vmem:[#allocation2 + $0xf20] sm:$0xff]
    %v691 = vld [vmem:[#allocation2 + $0xf28] sm:$0xff]
    %v692 = vld [vmem:[#allocation2 + $0xf30] sm:$0xff]
    %v693 = vld [vmem:[#allocation2 + $0xf38] sm:$0xff]
    %v694 = vld [vmem:[#allocation2 + $0xf40] sm:$0xff]
    %v695 = vld [vmem:[#allocation2 + $0xf48] sm:$0xff]
    %v696 = vld [vmem:[#allocation2 + $0xf50] sm:$0xff]
    %v697 = vld [vmem:[#allocation2 + $0xf58] sm:$0xff]
    %v698 = vld [vmem:[#allocation2 + $0xf60] sm:$0xff]
    %v699 = vld [vmem:[#allocation2 + $0xf68] sm:$0xff]
    %v700 = vld [vmem:[#allocation2 + $0xf70] sm:$0xff]
    %v701 = vld [vmem:[#allocation2 + $0xf78] sm:$0xff]
    %v702 = vld [vmem:[#allocation2 + $0xf80] sm:$0xff]
    %v703 = vld [vmem:[#allocation2 + $0xf88] sm:$0xff]
    %v704 = vld [vmem:[#allocation2 + $0xf90] sm:$0xff]
    %v705 = vld [vmem:[#allocation2 + $0xf98] sm:$0xff]
    %v706 = vld [vmem:[#allocation2 + $0xfa0] sm:$0xff]
    %v707 = vld [vmem:[#allocation2 + $0xfa8] sm:$0xff]
    %v708 = vld [vmem:[#allocation2 + $0xfb0] sm:$0xff]
    %v709 = vld [vmem:[#allocation2 + $0xfb8] sm:$0xff]
    %v710 = vld [vmem:[#allocation2 + $0xfc0] sm:$0xff]
    %v711 = vld [vmem:[#allocation2 + $0xfc8] sm:$0xff]
    %v712 = vld [vmem:[#allocation2 + $0xfd0] sm:$0xff]
    %v713 = vld [vmem:[#allocation2 + $0xfd8] sm:$0xff]
    %v714 = vld [vmem:[#allocation2 + $0xfe0] sm:$0xff]
    %v715 = vld [vmem:[#allocation2 + $0xfe8] sm:$0xff]
    %v716 = vld [vmem:[#allocation2 + $0xff0] sm:$0xff]
    %v717 = vld [vmem:[#allocation2 + $0xff8] sm:$0xff]
    %v718 = vld [vmem:[#allocation5] sm:$0xf]
    %v720 = vperm.slane %v718, 0
    %v721 = vperm.slane %v718, 1
    %v722 = vperm.slane %v718, 2
    %v723 = vperm.slane %v718, 3
    %730 = vst [vmem:[#allocation1] ss:$4 sm:$0xff] %v204
    %s731 = scalar_lea.vmem [#allocation1], 32
    %732 = vst [vmem:[%s731] ss:$4 sm:$0xff] %v205
    %v733 = vld.sshfl [vmem:[#allocation1] sm:$0xff pattern:$0x73625140]
    %v734 = vld.sshfl [vmem:[#allocation1 + $0x8] sm:$0xff pattern:$0x73625140]
    %v735 = vld.sshfl [vmem:[#allocation1 + $0x10] sm:$0xff pattern:$0x73625140]
    %v736 = vld.sshfl [vmem:[#allocation1 + $0x18] sm:$0xff pattern:$0x73625140]
    %v737 = vld.sshfl [vmem:[#allocation1 + $0x20] sm:$0xff pattern:$0x73625140]
    %v738 = vld.sshfl [vmem:[#allocation1 + $0x28] sm:$0xff pattern:$0x73625140]
    %v739 = vld.sshfl [vmem:[#allocation1 + $0x30] sm:$0xff pattern:$0x73625140]
    %v740 = vld.sshfl [vmem:[#allocation1 + $0x38] sm:$0xff pattern:$0x73625140]
    %749 = vmatpush.msra.mxu0 %v266
    %750 = vmatpush.msra.mxu0 %v262
    %751 = vmatpush.msra.mxu0 %v258
    %752 = vmatpush.msra.mxu0 %v254
    %753 = vmatpush.msra.mxu0 %v250
    %754 = vmatpush.msra.mxu0 %v246
    %755 = vmatpush.msra.mxu0 %v242
    %756 = vmatpush.msra.mxu0 %v238
    %757 = vmatpush.msra.mxu0 %v234
    %758 = vmatpush.msra.mxu0 %v230
    %759 = vmatpush.msra.mxu0 %v226
    %760 = vmatpush.msra.mxu0 %v222
    %761 = vmatpush.msra.mxu0 %v218
    %762 = vmatpush.msra.mxu0 %v214
    %763 = vmatpush.msra.mxu0 %v210
    %764 = vmatpush.msra.mxu0 %v206
    %765 = vmatmul.f32.gmra.mxu0 %v733
    %v766 = vpop.f32.mrf.mxu0
    %v767 = vadd.f32 %v720, %v766
    %768 = vdwg.mxu0
    %769 = vmatpush.msra.mxu0 %v330
    %770 = vmatpush.msra.mxu0 %v326
    %771 = vmatpush.msra.mxu0 %v322
    %772 = vmatpush.msra.mxu0 %v318
    %773 = vmatpush.msra.mxu0 %v314
    %774 = vmatpush.msra.mxu0 %v310
    %775 = vmatpush.msra.mxu0 %v306
    %776 = vmatpush.msra.mxu0 %v302
    %777 = vmatpush.msra.mxu0 %v298
    %778 = vmatpush.msra.mxu0 %v294
    %779 = vmatpush.msra.mxu0 %v290
    %780 = vmatpush.msra.mxu0 %v286
    %781 = vmatpush.msra.mxu0 %v282
    %782 = vmatpush.msra.mxu0 %v278
    %783 = vmatpush.msra.mxu0 %v274
    %784 = vmatpush.msra.mxu0 %v270
    %785 = vmatmul.f32.gmra.mxu0 %v734
    %v786 = vpop.f32.mrf.mxu0
    %v787 = vadd.f32 %v767, %v786
    %788 = vdwg.mxu0
    %789 = vmatpush.msra.mxu0 %v394
    %790 = vmatpush.msra.mxu0 %v390
    %791 = vmatpush.msra.mxu0 %v386
    %792 = vmatpush.msra.mxu0 %v382
    %793 = vmatpush.msra.mxu0 %v378
    %794 = vmatpush.msra.mxu0 %v374
    %795 = vmatpush.msra.mxu0 %v370
    %796 = vmatpush.msra.mxu0 %v366
    %797 = vmatpush.msra.mxu0 %v362
    %798 = vmatpush.msra.mxu0 %v358
    %799 = vmatpush.msra.mxu0 %v354
    %800 = vmatpush.msra.mxu0 %v350
    %801 = vmatpush.msra.mxu0 %v346
    %802 = vmatpush.msra.mxu0 %v342
    %803 = vmatpush.msra.mxu0 %v338
    %804 = vmatpush.msra.mxu0 %v334
    %805 = vmatmul.f32.gmra.mxu0 %v735
    %v806 = vpop.f32.mrf.mxu0
    %v807 = vadd.f32 %v787, %v806
    %808 = vdwg.mxu0
    %809 = vmatpush.msra.mxu0 %v458
    %810 = vmatpush.msra.mxu0 %v454
    %811 = vmatpush.msra.mxu0 %v450
    %812 = vmatpush.msra.mxu0 %v446
    %813 = vmatpush.msra.mxu0 %v442
    %814 = vmatpush.msra.mxu0 %v438
    %815 = vmatpush.msra.mxu0 %v434
    %816 = vmatpush.msra.mxu0 %v430
    %817 = vmatpush.msra.mxu0 %v426
    %818 = vmatpush.msra.mxu0 %v422
    %819 = vmatpush.msra.mxu0 %v418
    %820 = vmatpush.msra.mxu0 %v414
    %821 = vmatpush.msra.mxu0 %v410
    %822 = vmatpush.msra.mxu0 %v406
    %823 = vmatpush.msra.mxu0 %v402
    %824 = vmatpush.msra.mxu0 %v398
    %825 = vmatmul.f32.gmra.mxu0 %v736
    %v826 = vpop.f32.mrf.mxu0
    %v827 = vadd.f32 %v807, %v826
    %828 = vdwg.mxu0
    %829 = vmatpush.msra.mxu0 %v522
    %830 = vmatpush.msra.mxu0 %v518
    %831 = vmatpush.msra.mxu0 %v514
    %832 = vmatpush.msra.mxu0 %v510
    %833 = vmatpush.msra.mxu0 %v506
    %834 = vmatpush.msra.mxu0 %v502
    %835 = vmatpush.msra.mxu0 %v498
    %836 = vmatpush.msra.mxu0 %v494
    %837 = vmatpush.msra.mxu0 %v490
    %838 = vmatpush.msra.mxu0 %v486
    %839 = vmatpush.msra.mxu0 %v482
    %840 = vmatpush.msra.mxu0 %v478
    %841 = vmatpush.msra.mxu0 %v474
    %842 = vmatpush.msra.mxu0 %v470
    %843 = vmatpush.msra.mxu0 %v466
    %844 = vmatpush.msra.mxu0 %v462
    %845 = vmatmul.f32.gmra.mxu0 %v737
    %v846 = vpop.f32.mrf.mxu0
    %v847 = vadd.f32 %v827, %v846
    %848 = vdwg.mxu0
    %849 = vmatpush.msra.mxu0 %v586
    %850 = vmatpush.msra.mxu0 %v582
    %851 = vmatpush.msra.mxu0 %v578
    %852 = vmatpush.msra.mxu0 %v574
    %853 = vmatpush.msra.mxu0 %v570
    %854 = vmatpush.msra.mxu0 %v566
    %855 = vmatpush.msra.mxu0 %v562
    %856 = vmatpush.msra.mxu0 %v558
    %857 = vmatpush.msra.mxu0 %v554
    %858 = vmatpush.msra.mxu0 %v550
    %859 = vmatpush.msra.mxu0 %v546
    %860 = vmatpush.msra.mxu0 %v542
    %861 = vmatpush.msra.mxu0 %v538
    %862 = vmatpush.msra.mxu0 %v534
    %863 = vmatpush.msra.mxu0 %v530
    %864 = vmatpush.msra.mxu0 %v526
    %865 = vmatmul.f32.gmra.mxu0 %v738
    %v866 = vpop.f32.mrf.mxu0
    %v867 = vadd.f32 %v847, %v866
    %868 = vdwg.mxu0
    %869 = vmatpush.msra.mxu0 %v650
    %870 = vmatpush.msra.mxu0 %v646
    %871 = vmatpush.msra.mxu0 %v642
    %872 = vmatpush.msra.mxu0 %v638
    %873 = vmatpush.msra.mxu0 %v634
    %874 = vmatpush.msra.mxu0 %v630
    %875 = vmatpush.msra.mxu0 %v626
    %876 = vmatpush.msra.mxu0 %v622
    %877 = vmatpush.msra.mxu0 %v618
    %878 = vmatpush.msra.mxu0 %v614
    %879 = vmatpush.msra.mxu0 %v610
    %880 = vmatpush.msra.mxu0 %v606
    %881 = vmatpush.msra.mxu0 %v602
    %882 = vmatpush.msra.mxu0 %v598
    %883 = vmatpush.msra.mxu0 %v594
    %884 = vmatpush.msra.mxu0 %v590
    %885 = vmatmul.f32.gmra.mxu0 %v739
    %v886 = vpop.f32.mrf.mxu0
    %v887 = vadd.f32 %v867, %v886
    %888 = vdwg.mxu0
    %889 = vmatpush.msra.mxu0 %v714
    %890 = vmatpush.msra.mxu0 %v710
    %891 = vmatpush.msra.mxu0 %v706
    %892 = vmatpush.msra.mxu0 %v702
    %893 = vmatpush.msra.mxu0 %v698
    %894 = vmatpush.msra.mxu0 %v694
    %895 = vmatpush.msra.mxu0 %v690
    %896 = vmatpush.msra.mxu0 %v686
    %897 = vmatpush.msra.mxu0 %v682
    %898 = vmatpush.msra.mxu0 %v678
    %899 = vmatpush.msra.mxu0 %v674
    %900 = vmatpush.msra.mxu0 %v670
    %901 = vmatpush.msra.mxu0 %v666
    %902 = vmatpush.msra.mxu0 %v662
    %903 = vmatpush.msra.mxu0 %v658
    %904 = vmatpush.msra.mxu0 %v654
    %905 = vmatmul.f32.gmra.mxu0 %v740
    %v906 = vpop.f32.mrf.mxu0
    %v907 = vadd.f32 %v887, %v906
    %908 = vdwg.mxu0
    %909 = vmatpush.msra.mxu0 %v267
    %910 = vmatpush.msra.mxu0 %v263
    %911 = vmatpush.msra.mxu0 %v259
    %912 = vmatpush.msra.mxu0 %v255
    %913 = vmatpush.msra.mxu0 %v251
    %914 = vmatpush.msra.mxu0 %v247
    %915 = vmatpush.msra.mxu0 %v243
    %916 = vmatpush.msra.mxu0 %v239
    %917 = vmatpush.msra.mxu0 %v235
    %918 = vmatpush.msra.mxu0 %v231
    %919 = vmatpush.msra.mxu0 %v227
    %920 = vmatpush.msra.mxu0 %v223
    %921 = vmatpush.msra.mxu0 %v219
    %922 = vmatpush.msra.mxu0 %v215
    %923 = vmatpush.msra.mxu0 %v211
    %924 = vmatpush.msra.mxu0 %v207
    %925 = vmatmul.f32.gmra.mxu0 %v733
    %v926 = vpop.f32.mrf.mxu0
    %v927 = vadd.f32 %v721, %v926
    %928 = vdwg.mxu0
    %929 = vmatpush.msra.mxu0 %v331
    %930 = vmatpush.msra.mxu0 %v327
    %931 = vmatpush.msra.mxu0 %v323
    %932 = vmatpush.msra.mxu0 %v319
    %933 = vmatpush.msra.mxu0 %v315
    %934 = vmatpush.msra.mxu0 %v311
    %935 = vmatpush.msra.mxu0 %v307
    %936 = vmatpush.msra.mxu0 %v303
    %937 = vmatpush.msra.mxu0 %v299
    %938 = vmatpush.msra.mxu0 %v295
    %939 = vmatpush.msra.mxu0 %v291
    %940 = vmatpush.msra.mxu0 %v287
    %941 = vmatpush.msra.mxu0 %v283
    %942 = vmatpush.msra.mxu0 %v279
    %943 = vmatpush.msra.mxu0 %v275
    %944 = vmatpush.msra.mxu0 %v271
    %945 = vmatmul.f32.gmra.mxu0 %v734
    %v946 = vpop.f32.mrf.mxu0
    %v947 = vadd.f32 %v927, %v946
    %948 = vdwg.mxu0
    %949 = vmatpush.msra.mxu0 %v395
    %950 = vmatpush.msra.mxu0 %v391
    %951 = vmatpush.msra.mxu0 %v387
    %952 = vmatpush.msra.mxu0 %v383
    %953 = vmatpush.msra.mxu0 %v379
    %954 = vmatpush.msra.mxu0 %v375
    %955 = vmatpush.msra.mxu0 %v371
    %956 = vmatpush.msra.mxu0 %v367
    %957 = vmatpush.msra.mxu0 %v363
    %958 = vmatpush.msra.mxu0 %v359
    %959 = vmatpush.msra.mxu0 %v355
    %960 = vmatpush.msra.mxu0 %v351
    %961 = vmatpush.msra.mxu0 %v347
    %962 = vmatpush.msra.mxu0 %v343
    %963 = vmatpush.msra.mxu0 %v339
    %964 = vmatpush.msra.mxu0 %v335
    %965 = vmatmul.f32.gmra.mxu0 %v735
    %v966 = vpop.f32.mrf.mxu0
    %v967 = vadd.f32 %v947, %v966
    %968 = vdwg.mxu0
    %969 = vmatpush.msra.mxu0 %v459
    %970 = vmatpush.msra.mxu0 %v455
    %971 = vmatpush.msra.mxu0 %v451
    %972 = vmatpush.msra.mxu0 %v447
    %973 = vmatpush.msra.mxu0 %v443
    %974 = vmatpush.msra.mxu0 %v439
    %975 = vmatpush.msra.mxu0 %v435
    %976 = vmatpush.msra.mxu0 %v431
    %977 = vmatpush.msra.mxu0 %v427
    %978 = vmatpush.msra.mxu0 %v423
    %979 = vmatpush.msra.mxu0 %v419
    %980 = vmatpush.msra.mxu0 %v415
    %981 = vmatpush.msra.mxu0 %v411
    %982 = vmatpush.msra.mxu0 %v407
    %983 = vmatpush.msra.mxu0 %v403
    %984 = vmatpush.msra.mxu0 %v399
    %985 = vmatmul.f32.gmra.mxu0 %v736
    %v986 = vpop.f32.mrf.mxu0
    %v987 = vadd.f32 %v967, %v986
    %988 = vdwg.mxu0
    %989 = vmatpush.msra.mxu0 %v523
    %990 = vmatpush.msra.mxu0 %v519
    %991 = vmatpush.msra.mxu0 %v515
    %992 = vmatpush.msra.mxu0 %v511
    %993 = vmatpush.msra.mxu0 %v507
    %994 = vmatpush.msra.mxu0 %v503
    %995 = vmatpush.msra.mxu0 %v499
    %996 = vmatpush.msra.mxu0 %v495
    %997 = vmatpush.msra.mxu0 %v491
    %998 = vmatpush.msra.mxu0 %v487
    %999 = vmatpush.msra.mxu0 %v483
    %1000 = vmatpush.msra.mxu0 %v479
    %1001 = vmatpush.msra.mxu0 %v475
    %1002 = vmatpush.msra.mxu0 %v471
    %1003 = vmatpush.msra.mxu0 %v467
    %1004 = vmatpush.msra.mxu0 %v463
    %1005 = vmatmul.f32.gmra.mxu0 %v737
    %v1006 = vpop.f32.mrf.mxu0
    %v1007 = vadd.f32 %v987, %v1006
    %1008 = vdwg.mxu0
    %1009 = vmatpush.msra.mxu0 %v587
    %1010 = vmatpush.msra.mxu0 %v583
    %1011 = vmatpush.msra.mxu0 %v579
    %1012 = vmatpush.msra.mxu0 %v575
    %1013 = vmatpush.msra.mxu0 %v571
    %1014 = vmatpush.msra.mxu0 %v567
    %1015 = vmatpush.msra.mxu0 %v563
    %1016 = vmatpush.msra.mxu0 %v559
    %1017 = vmatpush.msra.mxu0 %v555
    %1018 = vmatpush.msra.mxu0 %v551
    %1019 = vmatpush.msra.mxu0 %v547
    %1020 = vmatpush.msra.mxu0 %v543
    %1021 = vmatpush.msra.mxu0 %v539
    %1022 = vmatpush.msra.mxu0 %v535
    %1023 = vmatpush.msra.mxu0 %v531
    %1024 = vmatpush.msra.mxu0 %v527
    %1025 = vmatmul.f32.gmra.mxu0 %v738
    %v1026 = vpop.f32.mrf.mxu0
    %v1027 = vadd.f32 %v1007, %v1026
    %1028 = vdwg.mxu0
    %1029 = vmatpush.msra.mxu0 %v651
    %1030 = vmatpush.msra.mxu0 %v647
    %1031 = vmatpush.msra.mxu0 %v643
    %1032 = vmatpush.msra.mxu0 %v639
    %1033 = vmatpush.msra.mxu0 %v635
    %1034 = vmatpush.msra.mxu0 %v631
    %1035 = vmatpush.msra.mxu0 %v627
    %1036 = vmatpush.msra.mxu0 %v623
    %1037 = vmatpush.msra.mxu0 %v619
    %1038 = vmatpush.msra.mxu0 %v615
    %1039 = vmatpush.msra.mxu0 %v611
    %1040 = vmatpush.msra.mxu0 %v607
    %1041 = vmatpush.msra.mxu0 %v603
    %1042 = vmatpush.msra.mxu0 %v599
    %1043 = vmatpush.msra.mxu0 %v595
    %1044 = vmatpush.msra.mxu0 %v591
    %1045 = vmatmul.f32.gmra.mxu0 %v739
    %v1046 = vpop.f32.mrf.mxu0
    %v1047 = vadd.f32 %v1027, %v1046
    %1048 = vdwg.mxu0
    %1049 = vmatpush.msra.mxu0 %v715
    %1050 = vmatpush.msra.mxu0 %v711
    %1051 = vmatpush.msra.mxu0 %v707
    %1052 = vmatpush.msra.mxu0 %v703
    %1053 = vmatpush.msra.mxu0 %v699
    %1054 = vmatpush.msra.mxu0 %v695
    %1055 = vmatpush.msra.mxu0 %v691
    %1056 = vmatpush.msra.mxu0 %v687
    %1057 = vmatpush.msra.mxu0 %v683
    %1058 = vmatpush.msra.mxu0 %v679
    %1059 = vmatpush.msra.mxu0 %v675
    %1060 = vmatpush.msra.mxu0 %v671
    %1061 = vmatpush.msra.mxu0 %v667
    %1062 = vmatpush.msra.mxu0 %v663
    %1063 = vmatpush.msra.mxu0 %v659
    %1064 = vmatpush.msra.mxu0 %v655
    %1065 = vmatmul.f32.gmra.mxu0 %v740
    %v1066 = vpop.f32.mrf.mxu0
    %v1067 = vadd.f32 %v1047, %v1066
    %1068 = vdwg.mxu0
    %1069 = vmatpush.msra.mxu0 %v268
    %1070 = vmatpush.msra.mxu0 %v264
    %1071 = vmatpush.msra.mxu0 %v260
    %1072 = vmatpush.msra.mxu0 %v256
    %1073 = vmatpush.msra.mxu0 %v252
    %1074 = vmatpush.msra.mxu0 %v248
    %1075 = vmatpush.msra.mxu0 %v244
    %1076 = vmatpush.msra.mxu0 %v240
    %1077 = vmatpush.msra.mxu0 %v236
    %1078 = vmatpush.msra.mxu0 %v232
    %1079 = vmatpush.msra.mxu0 %v228
    %1080 = vmatpush.msra.mxu0 %v224
    %1081 = vmatpush.msra.mxu0 %v220
    %1082 = vmatpush.msra.mxu0 %v216
    %1083 = vmatpush.msra.mxu0 %v212
    %1084 = vmatpush.msra.mxu0 %v208
    %1085 = vmatmul.f32.gmra.mxu0 %v733
    %v1086 = vpop.f32.mrf.mxu0
    %v1087 = vadd.f32 %v722, %v1086
    %1088 = vdwg.mxu0
    %1089 = vmatpush.msra.mxu0 %v332
    %1090 = vmatpush.msra.mxu0 %v328
    %1091 = vmatpush.msra.mxu0 %v324
    %1092 = vmatpush.msra.mxu0 %v320
    %1093 = vmatpush.msra.mxu0 %v316
    %1094 = vmatpush.msra.mxu0 %v312
    %1095 = vmatpush.msra.mxu0 %v308
    %1096 = vmatpush.msra.mxu0 %v304
    %1097 = vmatpush.msra.mxu0 %v300
    %1098 = vmatpush.msra.mxu0 %v296
    %1099 = vmatpush.msra.mxu0 %v292
    %1100 = vmatpush.msra.mxu0 %v288
    %1101 = vmatpush.msra.mxu0 %v284
    %1102 = vmatpush.msra.mxu0 %v280
    %1103 = vmatpush.msra.mxu0 %v276
    %1104 = vmatpush.msra.mxu0 %v272
    %1105 = vmatmul.f32.gmra.mxu0 %v734
    %v1106 = vpop.f32.mrf.mxu0
    %v1107 = vadd.f32 %v1087, %v1106
    %1108 = vdwg.mxu0
    %1109 = vmatpush.msra.mxu0 %v396
    %1110 = vmatpush.msra.mxu0 %v392
    %1111 = vmatpush.msra.mxu0 %v388
    %1112 = vmatpush.msra.mxu0 %v384
    %1113 = vmatpush.msra.mxu0 %v380
    %1114 = vmatpush.msra.mxu0 %v376
    %1115 = vmatpush.msra.mxu0 %v372
    %1116 = vmatpush.msra.mxu0 %v368
    %1117 = vmatpush.msra.mxu0 %v364
    %1118 = vmatpush.msra.mxu0 %v360
    %1119 = vmatpush.msra.mxu0 %v356
    %1120 = vmatpush.msra.mxu0 %v352
    %1121 = vmatpush.msra.mxu0 %v348
    %1122 = vmatpush.msra.mxu0 %v344
    %1123 = vmatpush.msra.mxu0 %v340
    %1124 = vmatpush.msra.mxu0 %v336
    %1125 = vmatmul.f32.gmra.mxu0 %v735
    %v1126 = vpop.f32.mrf.mxu0
    %v1127 = vadd.f32 %v1107, %v1126
    %1128 = vdwg.mxu0
    %1129 = vmatpush.msra.mxu0 %v460
    %1130 = vmatpush.msra.mxu0 %v456
    %1131 = vmatpush.msra.mxu0 %v452
    %1132 = vmatpush.msra.mxu0 %v448
    %1133 = vmatpush.msra.mxu0 %v444
    %1134 = vmatpush.msra.mxu0 %v440
    %1135 = vmatpush.msra.mxu0 %v436
    %1136 = vmatpush.msra.mxu0 %v432
    %1137 = vmatpush.msra.mxu0 %v428
    %1138 = vmatpush.msra.mxu0 %v424
    %1139 = vmatpush.msra.mxu0 %v420
    %1140 = vmatpush.msra.mxu0 %v416
    %1141 = vmatpush.msra.mxu0 %v412
    %1142 = vmatpush.msra.mxu0 %v408
    %1143 = vmatpush.msra.mxu0 %v404
    %1144 = vmatpush.msra.mxu0 %v400
    %1145 = vmatmul.f32.gmra.mxu0 %v736
    %v1146 = vpop.f32.mrf.mxu0
    %v1147 = vadd.f32 %v1127, %v1146
    %1148 = vdwg.mxu0
    %1149 = vmatpush.msra.mxu0 %v524
    %1150 = vmatpush.msra.mxu0 %v520
    %1151 = vmatpush.msra.mxu0 %v516
    %1152 = vmatpush.msra.mxu0 %v512
    %1153 = vmatpush.msra.mxu0 %v508
    %1154 = vmatpush.msra.mxu0 %v504
    %1155 = vmatpush.msra.mxu0 %v500
    %1156 = vmatpush.msra.mxu0 %v496
    %1157 = vmatpush.msra.mxu0 %v492
    %1158 = vmatpush.msra.mxu0 %v488
    %1159 = vmatpush.msra.mxu0 %v484
    %1160 = vmatpush.msra.mxu0 %v480
    %1161 = vmatpush.msra.mxu0 %v476
    %1162 = vmatpush.msra.mxu0 %v472
    %1163 = vmatpush.msra.mxu0 %v468
    %1164 = vmatpush.msra.mxu0 %v464
    %1165 = vmatmul.f32.gmra.mxu0 %v737
    %v1166 = vpop.f32.mrf.mxu0
    %v1167 = vadd.f32 %v1147, %v1166
    %1168 = vdwg.mxu0
    %1169 = vmatpush.msra.mxu0 %v588
    %1170 = vmatpush.msra.mxu0 %v584
    %1171 = vmatpush.msra.mxu0 %v580
    %1172 = vmatpush.msra.mxu0 %v576
    %1173 = vmatpush.msra.mxu0 %v572
    %1174 = vmatpush.msra.mxu0 %v568
    %1175 = vmatpush.msra.mxu0 %v564
    %1176 = vmatpush.msra.mxu0 %v560
    %1177 = vmatpush.msra.mxu0 %v556
    %1178 = vmatpush.msra.mxu0 %v552
    %1179 = vmatpush.msra.mxu0 %v548
    %1180 = vmatpush.msra.mxu0 %v544
    %1181 = vmatpush.msra.mxu0 %v540
    %1182 = vmatpush.msra.mxu0 %v536
    %1183 = vmatpush.msra.mxu0 %v532
    %1184 = vmatpush.msra.mxu0 %v528
    %1185 = vmatmul.f32.gmra.mxu0 %v738
    %v1186 = vpop.f32.mrf.mxu0
    %v1187 = vadd.f32 %v1167, %v1186
    %1188 = vdwg.mxu0
    %1189 = vmatpush.msra.mxu0 %v652
    %1190 = vmatpush.msra.mxu0 %v648
    %1191 = vmatpush.msra.mxu0 %v644
    %1192 = vmatpush.msra.mxu0 %v640
    %1193 = vmatpush.msra.mxu0 %v636
    %1194 = vmatpush.msra.mxu0 %v632
    %1195 = vmatpush.msra.mxu0 %v628
    %1196 = vmatpush.msra.mxu0 %v624
    %1197 = vmatpush.msra.mxu0 %v620
    %1198 = vmatpush.msra.mxu0 %v616
    %1199 = vmatpush.msra.mxu0 %v612
    %1200 = vmatpush.msra.mxu0 %v608
    %1201 = vmatpush.msra.mxu0 %v604
    %1202 = vmatpush.msra.mxu0 %v600
    %1203 = vmatpush.msra.mxu0 %v596
    %1204 = vmatpush.msra.mxu0 %v592
    %1205 = vmatmul.f32.gmra.mxu0 %v739
    %v1206 = vpop.f32.mrf.mxu0
    %v1207 = vadd.f32 %v1187, %v1206
    %1208 = vdwg.mxu0
    %1209 = vmatpush.msra.mxu0 %v716
    %1210 = vmatpush.msra.mxu0 %v712
    %1211 = vmatpush.msra.mxu0 %v708
    %1212 = vmatpush.msra.mxu0 %v704
    %1213 = vmatpush.msra.mxu0 %v700
    %1214 = vmatpush.msra.mxu0 %v696
    %1215 = vmatpush.msra.mxu0 %v692
    %1216 = vmatpush.msra.mxu0 %v688
    %1217 = vmatpush.msra.mxu0 %v684
    %1218 = vmatpush.msra.mxu0 %v680
    %1219 = vmatpush.msra.mxu0 %v676
    %1220 = vmatpush.msra.mxu0 %v672
    %1221 = vmatpush.msra.mxu0 %v668
    %1222 = vmatpush.msra.mxu0 %v664
    %1223 = vmatpush.msra.mxu0 %v660
    %1224 = vmatpush.msra.mxu0 %v656
    %1225 = vmatmul.f32.gmra.mxu0 %v740
    %v1226 = vpop.f32.mrf.mxu0
    %v1227 = vadd.f32 %v1207, %v1226
    %1228 = vdwg.mxu0
    %1229 = vmatpush.msra.mxu0 %v269
    %1230 = vmatpush.msra.mxu0 %v265
    %1231 = vmatpush.msra.mxu0 %v261
    %1232 = vmatpush.msra.mxu0 %v257
    %1233 = vmatpush.msra.mxu0 %v253
    %1234 = vmatpush.msra.mxu0 %v249
    %1235 = vmatpush.msra.mxu0 %v245
    %1236 = vmatpush.msra.mxu0 %v241
    %1237 = vmatpush.msra.mxu0 %v237
    %1238 = vmatpush.msra.mxu0 %v233
    %1239 = vmatpush.msra.mxu0 %v229
    %1240 = vmatpush.msra.mxu0 %v225
    %1241 = vmatpush.msra.mxu0 %v221
    %1242 = vmatpush.msra.mxu0 %v217
    %1243 = vmatpush.msra.mxu0 %v213
    %1244 = vmatpush.msra.mxu0 %v209
    %1245 = vmatmul.f32.gmra.mxu0 %v733
    %v1246 = vpop.f32.mrf.mxu0
    %v1247 = vadd.f32 %v723, %v1246
    %1248 = vdwg.mxu0
    %1249 = vmatpush.msra.mxu0 %v333
    %1250 = vmatpush.msra.mxu0 %v329
    %1251 = vmatpush.msra.mxu0 %v325
    %1252 = vmatpush.msra.mxu0 %v321
    %1253 = vmatpush.msra.mxu0 %v317
    %1254 = vmatpush.msra.mxu0 %v313
    %1255 = vmatpush.msra.mxu0 %v309
    %1256 = vmatpush.msra.mxu0 %v305
    %1257 = vmatpush.msra.mxu0 %v301
    %1258 = vmatpush.msra.mxu0 %v297
    %1259 = vmatpush.msra.mxu0 %v293
    %1260 = vmatpush.msra.mxu0 %v289
    %1261 = vmatpush.msra.mxu0 %v285
    %1262 = vmatpush.msra.mxu0 %v281
    %1263 = vmatpush.msra.mxu0 %v277
    %1264 = vmatpush.msra.mxu0 %v273
    %1265 = vmatmul.f32.gmra.mxu0 %v734
    %v1266 = vpop.f32.mrf.mxu0
    %v1267 = vadd.f32 %v1247, %v1266
    %1268 = vdwg.mxu0
    %1269 = vmatpush.msra.mxu0 %v397
    %1270 = vmatpush.msra.mxu0 %v393
    %1271 = vmatpush.msra.mxu0 %v389
    %1272 = vmatpush.msra.mxu0 %v385
    %1273 = vmatpush.msra.mxu0 %v381
    %1274 = vmatpush.msra.mxu0 %v377
    %1275 = vmatpush.msra.mxu0 %v373
    %1276 = vmatpush.msra.mxu0 %v369
    %1277 = vmatpush.msra.mxu0 %v365
    %1278 = vmatpush.msra.mxu0 %v361
    %1279 = vmatpush.msra.mxu0 %v357
    %1280 = vmatpush.msra.mxu0 %v353
    %1281 = vmatpush.msra.mxu0 %v349
    %1282 = vmatpush.msra.mxu0 %v345
    %1283 = vmatpush.msra.mxu0 %v341
    %1284 = vmatpush.msra.mxu0 %v337
    %1285 = vmatmul.f32.gmra.mxu0 %v735
    %v1286 = vpop.f32.mrf.mxu0
    %v1287 = vadd.f32 %v1267, %v1286
    %1288 = vdwg.mxu0
    %1289 = vmatpush.msra.mxu0 %v461
    %1290 = vmatpush.msra.mxu0 %v457
    %1291 = vmatpush.msra.mxu0 %v453
    %1292 = vmatpush.msra.mxu0 %v449
    %1293 = vmatpush.msra.mxu0 %v445
    %1294 = vmatpush.msra.mxu0 %v441
    %1295 = vmatpush.msra.mxu0 %v437
    %1296 = vmatpush.msra.mxu0 %v433
    %1297 = vmatpush.msra.mxu0 %v429
    %1298 = vmatpush.msra.mxu0 %v425
    %1299 = vmatpush.msra.mxu0 %v421
    %1300 = vmatpush.msra.mxu0 %v417
    %1301 = vmatpush.msra.mxu0 %v413
    %1302 = vmatpush.msra.mxu0 %v409
    %1303 = vmatpush.msra.mxu0 %v405
    %1304 = vmatpush.msra.mxu0 %v401
    %1305 = vmatmul.f32.gmra.mxu0 %v736
    %v1306 = vpop.f32.mrf.mxu0
    %v1307 = vadd.f32 %v1287, %v1306
    %1308 = vdwg.mxu0
    %1309 = vmatpush.msra.mxu0 %v525
    %1310 = vmatpush.msra.mxu0 %v521
    %1311 = vmatpush.msra.mxu0 %v517
    %1312 = vmatpush.msra.mxu0 %v513
    %1313 = vmatpush.msra.mxu0 %v509
    %1314 = vmatpush.msra.mxu0 %v505
    %1315 = vmatpush.msra.mxu0 %v501
    %1316 = vmatpush.msra.mxu0 %v497
    %1317 = vmatpush.msra.mxu0 %v493
    %1318 = vmatpush.msra.mxu0 %v489
    %1319 = vmatpush.msra.mxu0 %v485
    %1320 = vmatpush.msra.mxu0 %v481
    %1321 = vmatpush.msra.mxu0 %v477
    %1322 = vmatpush.msra.mxu0 %v473
    %1323 = vmatpush.msra.mxu0 %v469
    %1324 = vmatpush.msra.mxu0 %v465
    %1325 = vmatmul.f32.gmra.mxu0 %v737
    %v1326 = vpop.f32.mrf.mxu0
    %v1327 = vadd.f32 %v1307, %v1326
    %1328 = vdwg.mxu0
    %1329 = vmatpush.msra.mxu0 %v589
    %1330 = vmatpush.msra.mxu0 %v585
    %1331 = vmatpush.msra.mxu0 %v581
    %1332 = vmatpush.msra.mxu0 %v577
    %1333 = vmatpush.msra.mxu0 %v573
    %1334 = vmatpush.msra.mxu0 %v569
    %1335 = vmatpush.msra.mxu0 %v565
    %1336 = vmatpush.msra.mxu0 %v561
    %1337 = vmatpush.msra.mxu0 %v557
    %1338 = vmatpush.msra.mxu0 %v553
    %1339 = vmatpush.msra.mxu0 %v549
    %1340 = vmatpush.msra.mxu0 %v545
    %1341 = vmatpush.msra.mxu0 %v541
    %1342 = vmatpush.msra.mxu0 %v537
    %1343 = vmatpush.msra.mxu0 %v533
    %1344 = vmatpush.msra.mxu0 %v529
    %1345 = vmatmul.f32.gmra.mxu0 %v738
    %v1346 = vpop.f32.mrf.mxu0
    %v1347 = vadd.f32 %v1327, %v1346
    %1348 = vdwg.mxu0
    %1349 = vmatpush.msra.mxu0 %v653
    %1350 = vmatpush.msra.mxu0 %v649
    %1351 = vmatpush.msra.mxu0 %v645
    %1352 = vmatpush.msra.mxu0 %v641
    %1353 = vmatpush.msra.mxu0 %v637
    %1354 = vmatpush.msra.mxu0 %v633
    %1355 = vmatpush.msra.mxu0 %v629
    %1356 = vmatpush.msra.mxu0 %v625
    %1357 = vmatpush.msra.mxu0 %v621
    %1358 = vmatpush.msra.mxu0 %v617
    %1359 = vmatpush.msra.mxu0 %v613
    %1360 = vmatpush.msra.mxu0 %v609
    %1361 = vmatpush.msra.mxu0 %v605
    %1362 = vmatpush.msra.mxu0 %v601
    %1363 = vmatpush.msra.mxu0 %v597
    %1364 = vmatpush.msra.mxu0 %v593
    %1365 = vmatmul.f32.gmra.mxu0 %v739
    %v1366 = vpop.f32.mrf.mxu0
    %v1367 = vadd.f32 %v1347, %v1366
    %1368 = vdwg.mxu0
    %1369 = vmatpush.msra.mxu0 %v717
    %1370 = vmatpush.msra.mxu0 %v713
    %1371 = vmatpush.msra.mxu0 %v709
    %1372 = vmatpush.msra.mxu0 %v705
    %1373 = vmatpush.msra.mxu0 %v701
    %1374 = vmatpush.msra.mxu0 %v697
    %1375 = vmatpush.msra.mxu0 %v693
    %1376 = vmatpush.msra.mxu0 %v689
    %1377 = vmatpush.msra.mxu0 %v685
    %1378 = vmatpush.msra.mxu0 %v681
    %1379 = vmatpush.msra.mxu0 %v677
    %1380 = vmatpush.msra.mxu0 %v673
    %1381 = vmatpush.msra.mxu0 %v669
    %1382 = vmatpush.msra.mxu0 %v665
    %1383 = vmatpush.msra.mxu0 %v661
    %1384 = vmatpush.msra.mxu0 %v657
    %1385 = vmatmul.f32.gmra.mxu0 %v740
    %v1386 = vpop.f32.mrf.mxu0
    %v1387 = vadd.f32 %v1367, %v1386
    %1388 = vdwg.mxu0
    %v1389 = vmul.f32 %v907, 0.5
    %v1390 = vmul.f32 %v1067, 0.5
    %v1391 = vmul.f32 %v1227, 0.5
    %v1392 = vmul.f32 %v1387, 0.5
    %v1393 = vmul.f32 %v907, 0.70710677
    %v1394 = vmul.f32 %v1067, 0.70710677
    %v1395 = vmul.f32 %v1227, 0.70710677
    %v1396 = vmul.f32 %v1387, 0.70710677
    %v1397 = vmax.f32 %v1393, -4.0
    %v1398 = vmax.f32 %v1394, -4.0
    %v1399 = vmax.f32 %v1395, -4.0
    %v1400 = vmax.f32 %v1396, -4.0
    %v1401 = vmin.f32 %v1397, 4.0
    %v1402 = vmin.f32 %v1398, 4.0
    %v1403 = vmin.f32 %v1399, 4.0
    %v1404 = vmin.f32 %v1400, 4.0
    %v1405 = vmul.f32 %v1401, %v1401
    %v1406 = vmul.f32 %v1402, %v1402
    %v1407 = vmul.f32 %v1403, %v1403
    %v1408 = vmul.f32 %v1404, %v1404
    %v1409 = vmul.f32 %v1405, -2.7261424e-10
    %v1410 = vmul.f32 %v1406, -2.7261424e-10
    %v1411 = vmul.f32 %v1407, -2.7261424e-10
    %v1412 = vmul.f32 %v1408, -2.7261424e-10
    %v1413 = vadd.f32 %v1409, 2.7706815e-08
    %v1414 = vadd.f32 %v1410, 2.7706815e-08
    %v1415 = vadd.f32 %v1411, 2.7706815e-08
    %v1416 = vadd.f32 %v1412, 2.7706815e-08
    %v1417 = vmul.f32 %v1413, %v1405
    %v1418 = vmul.f32 %v1414, %v1406
    %v1419 = vmul.f32 %v1415, %v1407
    %v1420 = vmul.f32 %v1416, %v1408
    %v1421 = vadd.f32 %v1417, -2.101024e-06
    %v1422 = vadd.f32 %v1418, -2.101024e-06
    %v1423 = vadd.f32 %v1419, -2.101024e-06
    %v1424 = vadd.f32 %v1420, -2.101024e-06
    %v1425 = vmul.f32 %v1421, %v1405
    %v1426 = vmul.f32 %v1422, %v1406
    %v1427 = vmul.f32 %v1423, %v1407
    %v1428 = vmul.f32 %v1424, %v1408
    %v1429 = vadd.f32 %v1425, -5.6925062e-05
    %v1430 = vadd.f32 %v1426, -5.6925062e-05
    %v1431 = vadd.f32 %v1427, -5.6925062e-05
    %v1432 = vadd.f32 %v1428, -5.6925062e-05
    %v1433 = vmul.f32 %v1429, %v1405
    %v1434 = vmul.f32 %v1430, %v1406
    %v1435 = vmul.f32 %v1431, %v1407
    %v1436 = vmul.f32 %v1432, %v1408
    %v1437 = vadd.f32 %v1433, -0.00073499064
    %v1438 = vadd.f32 %v1434, -0.00073499064
    %v1439 = vadd.f32 %v1435, -0.00073499064
    %v1440 = vadd.f32 %v1436, -0.00073499064
    %v1441 = vmul.f32 %v1437, %v1405
    %v1442 = vmul.f32 %v1438, %v1406
    %v1443 = vmul.f32 %v1439, %v1407
    %v1444 = vmul.f32 %v1440, %v1408
    %v1445 = vadd.f32 %v1441, -0.0029546
    %v1446 = vadd.f32 %v1442, -0.0029546
    %v1447 = vadd.f32 %v1443, -0.0029546
    %v1448 = vadd.f32 %v1444, -0.0029546
    %v1449 = vmul.f32 %v1445, %v1405
    %v1450 = vmul.f32 %v1446, %v1406
    %v1451 = vmul.f32 %v1447, %v1407
    %v1452 = vmul.f32 %v1448, %v1408
    %v1453 = vadd.f32 %v1449, -0.016096033
    %v1454 = vadd.f32 %v1450, -0.016096033
    %v1455 = vadd.f32 %v1451, -0.016096033
    %v1456 = vadd.f32 %v1452, -0.016096033
    %v1457 = vmul.f32 %v1405, -1.45660715e-05
    %v1458 = vmul.f32 %v1406, -1.45660715e-05
    %v1459 = vmul.f32 %v1407, -1.45660715e-05
    %v1460 = vmul.f32 %v1408, -1.45660715e-05
    %v1461 = vadd.f32 %v1457, -0.00021337405
    %v1462 = vadd.f32 %v1458, -0.00021337405
    %v1463 = vadd.f32 %v1459, -0.00021337405
    %v1464 = vadd.f32 %v1460, -0.00021337405
    %v1465 = vmul.f32 %v1461, %v1405
    %v1466 = vmul.f32 %v1462, %v1406
    %v1467 = vmul.f32 %v1463, %v1407
    %v1468 = vmul.f32 %v1464, %v1408
    %v1469 = vadd.f32 %v1465, -0.001682827
    %v1470 = vadd.f32 %v1466, -0.001682827
    %v1471 = vadd.f32 %v1467, -0.001682827
    %v1472 = vadd.f32 %v1468, -0.001682827
    %v1473 = vmul.f32 %v1469, %v1405
    %v1474 = vmul.f32 %v1470, %v1406
    %v1475 = vmul.f32 %v1471, %v1407
    %v1476 = vmul.f32 %v1472, %v1408
    %v1477 = vadd.f32 %v1473, -0.0073733293
    %v1478 = vadd.f32 %v1474, -0.0073733293
    %v1479 = vadd.f32 %v1475, -0.0073733293
    %v1480 = vadd.f32 %v1476, -0.0073733293
    %v1481 = vmul.f32 %v1477, %v1405
    %v1482 = vmul.f32 %v1478, %v1406
    %v1483 = vmul.f32 %v1479, %v1407
    %v1484 = vmul.f32 %v1480, %v1408
    %v1485 = vadd.f32 %v1481, -0.014264739
    %v1486 = vadd.f32 %v1482, -0.014264739
    %v1487 = vadd.f32 %v1483, -0.014264739
    %v1488 = vadd.f32 %v1484, -0.014264739
    %v1489 = vmul.f32 %v1401, %v1453
    %v1490 = vmul.f32 %v1402, %v1454
    %v1491 = vmul.f32 %v1403, %v1455
    %v1492 = vmul.f32 %v1404, %v1456
    %v1493 = vrcp.pop %v1485
    %v1494 = vrcp.pop %v1486
    %v1495 = vrcp.pop %v1487
    %v1496 = vrcp.pop %v1488
    %v1497 = vmul.f32 %v1489, %v1493
    %v1498 = vmul.f32 %v1490, %v1494
    %v1499 = vmul.f32 %v1491, %v1495
    %v1500 = vmul.f32 %v1492, %v1496
    %v1501 = vadd.f32 %v1497, 1.0
    %v1502 = vadd.f32 %v1498, 1.0
    %v1503 = vadd.f32 %v1499, 1.0
    %v1504 = vadd.f32 %v1500, 1.0
    %v1505 = vmul.f32 %v1389, %v1501
    %v1506 = vmul.f32 %v1390, %v1502
    %v1507 = vmul.f32 %v1391, %v1503
    %v1508 = vmul.f32 %v1392, %v1504
    %v1509 = vld [vmem:[#allocation7] sm:$0xff]
    %v1510 = vld [vmem:[#allocation7 + $0x8] sm:$0xff]
    %v1511 = vld [vmem:[#allocation7 + $0x10] sm:$0xff]
    %v1512 = vld [vmem:[#allocation7 + $0x18] sm:$0xff]
    %v1513 = vld [vmem:[#allocation7 + $0x20] sm:$0xff]
    %v1514 = vld [vmem:[#allocation7 + $0x28] sm:$0xff]
    %v1515 = vld [vmem:[#allocation7 + $0x30] sm:$0xff]
    %v1516 = vld [vmem:[#allocation7 + $0x38] sm:$0xff]
    %v1517 = vld [vmem:[#allocation7 + $0x40] sm:$0xff]
    %v1518 = vld [vmem:[#allocation7 + $0x48] sm:$0xff]
    %v1519 = vld [vmem:[#allocation7 + $0x50] sm:$0xff]
    %v1520 = vld [vmem:[#allocation7 + $0x58] sm:$0xff]
    %v1521 = vld [vmem:[#allocation7 + $0x60] sm:$0xff]
    %v1522 = vld [vmem:[#allocation7 + $0x68] sm:$0xff]
    %v1523 = vld [vmem:[#allocation7 + $0x70] sm:$0xff]
    %v1524 = vld [vmem:[#allocation7 + $0x78] sm:$0xff]
    %v1525 = vld [vmem:[#allocation7 + $0x80] sm:$0xff]
    %v1526 = vld [vmem:[#allocation7 + $0x88] sm:$0xff]
    %v1527 = vld [vmem:[#allocation7 + $0x90] sm:$0xff]
    %v1528 = vld [vmem:[#allocation7 + $0x98] sm:$0xff]
    %v1529 = vld [vmem:[#allocation7 + $0xa0] sm:$0xff]
    %v1530 = vld [vmem:[#allocation7 + $0xa8] sm:$0xff]
    %v1531 = vld [vmem:[#allocation7 + $0xb0] sm:$0xff]
    %v1532 = vld [vmem:[#allocation7 + $0xb8] sm:$0xff]
    %v1533 = vld [vmem:[#allocation7 + $0xc0] sm:$0xff]
    %v1534 = vld [vmem:[#allocation7 + $0xc8] sm:$0xff]
    %v1535 = vld [vmem:[#allocation7 + $0xd0] sm:$0xff]
    %v1536 = vld [vmem:[#allocation7 + $0xd8] sm:$0xff]
    %v1537 = vld [vmem:[#allocation7 + $0xe0] sm:$0xff]
    %v1538 = vld [vmem:[#allocation7 + $0xe8] sm:$0xff]
    %v1539 = vld [vmem:[#allocation7 + $0xf0] sm:$0xff]
    %v1540 = vld [vmem:[#allocation7 + $0xf8] sm:$0xff]
    %v1541 = vld [vmem:[#allocation7 + $0x100] sm:$0xff]
    %v1542 = vld [vmem:[#allocation7 + $0x108] sm:$0xff]
    %v1543 = vld [vmem:[#allocation7 + $0x110] sm:$0xff]
    %v1544 = vld [vmem:[#allocation7 + $0x118] sm:$0xff]
    %v1545 = vld [vmem:[#allocation7 + $0x120] sm:$0xff]
    %v1546 = vld [vmem:[#allocation7 + $0x128] sm:$0xff]
    %v1547 = vld [vmem:[#allocation7 + $0x130] sm:$0xff]
    %v1548 = vld [vmem:[#allocation7 + $0x138] sm:$0xff]
    %v1549 = vld [vmem:[#allocation7 + $0x140] sm:$0xff]
    %v1550 = vld [vmem:[#allocation7 + $0x148] sm:$0xff]
    %v1551 = vld [vmem:[#allocation7 + $0x150] sm:$0xff]
    %v1552 = vld [vmem:[#allocation7 + $0x158] sm:$0xff]
    %v1553 = vld [vmem:[#allocation7 + $0x160] sm:$0xff]
    %v1554 = vld [vmem:[#allocation7 + $0x168] sm:$0xff]
    %v1555 = vld [vmem:[#allocation7 + $0x170] sm:$0xff]
    %v1556 = vld [vmem:[#allocation7 + $0x178] sm:$0xff]
    %v1557 = vld [vmem:[#allocation7 + $0x180] sm:$0xff]
    %v1558 = vld [vmem:[#allocation7 + $0x188] sm:$0xff]
    %v1559 = vld [vmem:[#allocation7 + $0x190] sm:$0xff]
    %v1560 = vld [vmem:[#allocation7 + $0x198] sm:$0xff]
    %v1561 = vld [vmem:[#allocation7 + $0x1a0] sm:$0xff]
    %v1562 = vld [vmem:[#allocation7 + $0x1a8] sm:$0xff]
    %v1563 = vld [vmem:[#allocation7 + $0x1b0] sm:$0xff]
    %v1564 = vld [vmem:[#allocation7 + $0x1b8] sm:$0xff]
    %v1565 = vld [vmem:[#allocation7 + $0x1c0] sm:$0xff]
    %v1566 = vld [vmem:[#allocation7 + $0x1c8] sm:$0xff]
    %v1567 = vld [vmem:[#allocation7 + $0x1d0] sm:$0xff]
    %v1568 = vld [vmem:[#allocation7 + $0x1d8] sm:$0xff]
    %v1569 = vld [vmem:[#allocation7 + $0x1e0] sm:$0xff]
    %v1570 = vld [vmem:[#allocation7 + $0x1e8] sm:$0xff]
    %v1571 = vld [vmem:[#allocation7 + $0x1f0] sm:$0xff]
    %v1572 = vld [vmem:[#allocation7 + $0x1f8] sm:$0xff]
    %v1573 = vld [vmem:[#allocation7 + $0x200] sm:$0xff]
    %v1574 = vld [vmem:[#allocation7 + $0x208] sm:$0xff]
    %v1575 = vld [vmem:[#allocation7 + $0x210] sm:$0xff]
    %v1576 = vld [vmem:[#allocation7 + $0x218] sm:$0xff]
    %v1577 = vld [vmem:[#allocation7 + $0x220] sm:$0xff]
    %v1578 = vld [vmem:[#allocation7 + $0x228] sm:$0xff]
    %v1579 = vld [vmem:[#allocation7 + $0x230] sm:$0xff]
    %v1580 = vld [vmem:[#allocation7 + $0x238] sm:$0xff]
    %v1581 = vld [vmem:[#allocation7 + $0x240] sm:$0xff]
    %v1582 = vld [vmem:[#allocation7 + $0x248] sm:$0xff]
    %v1583 = vld [vmem:[#allocation7 + $0x250] sm:$0xff]
    %v1584 = vld [vmem:[#allocation7 + $0x258] sm:$0xff]
    %v1585 = vld [vmem:[#allocation7 + $0x260] sm:$0xff]
    %v1586 = vld [vmem:[#allocation7 + $0x268] sm:$0xff]
    %v1587 = vld [vmem:[#allocation7 + $0x270] sm:$0xff]
    %v1588 = vld [vmem:[#allocation7 + $0x278] sm:$0xff]
    %v1589 = vld [vmem:[#allocation7 + $0x280] sm:$0xff]
    %v1590 = vld [vmem:[#allocation7 + $0x288] sm:$0xff]
    %v1591 = vld [vmem:[#allocation7 + $0x290] sm:$0xff]
    %v1592 = vld [vmem:[#allocation7 + $0x298] sm:$0xff]
    %v1593 = vld [vmem:[#allocation7 + $0x2a0] sm:$0xff]
    %v1594 = vld [vmem:[#allocation7 + $0x2a8] sm:$0xff]
    %v1595 = vld [vmem:[#allocation7 + $0x2b0] sm:$0xff]
    %v1596 = vld [vmem:[#allocation7 + $0x2b8] sm:$0xff]
    %v1597 = vld [vmem:[#allocation7 + $0x2c0] sm:$0xff]
    %v1598 = vld [vmem:[#allocation7 + $0x2c8] sm:$0xff]
    %v1599 = vld [vmem:[#allocation7 + $0x2d0] sm:$0xff]
    %v1600 = vld [vmem:[#allocation7 + $0x2d8] sm:$0xff]
    %v1601 = vld [vmem:[#allocation7 + $0x2e0] sm:$0xff]
    %v1602 = vld [vmem:[#allocation7 + $0x2e8] sm:$0xff]
    %v1603 = vld [vmem:[#allocation7 + $0x2f0] sm:$0xff]
    %v1604 = vld [vmem:[#allocation7 + $0x2f8] sm:$0xff]
    %v1605 = vld [vmem:[#allocation7 + $0x300] sm:$0xff]
    %v1606 = vld [vmem:[#allocation7 + $0x308] sm:$0xff]
    %v1607 = vld [vmem:[#allocation7 + $0x310] sm:$0xff]
    %v1608 = vld [vmem:[#allocation7 + $0x318] sm:$0xff]
    %v1609 = vld [vmem:[#allocation7 + $0x320] sm:$0xff]
    %v1610 = vld [vmem:[#allocation7 + $0x328] sm:$0xff]
    %v1611 = vld [vmem:[#allocation7 + $0x330] sm:$0xff]
    %v1612 = vld [vmem:[#allocation7 + $0x338] sm:$0xff]
    %v1613 = vld [vmem:[#allocation7 + $0x340] sm:$0xff]
    %v1614 = vld [vmem:[#allocation7 + $0x348] sm:$0xff]
    %v1615 = vld [vmem:[#allocation7 + $0x350] sm:$0xff]
    %v1616 = vld [vmem:[#allocation7 + $0x358] sm:$0xff]
    %v1617 = vld [vmem:[#allocation7 + $0x360] sm:$0xff]
    %v1618 = vld [vmem:[#allocation7 + $0x368] sm:$0xff]
    %v1619 = vld [vmem:[#allocation7 + $0x370] sm:$0xff]
    %v1620 = vld [vmem:[#allocation7 + $0x378] sm:$0xff]
    %v1621 = vld [vmem:[#allocation7 + $0x380] sm:$0xff]
    %v1622 = vld [vmem:[#allocation7 + $0x388] sm:$0xff]
    %v1623 = vld [vmem:[#allocation7 + $0x390] sm:$0xff]
    %v1624 = vld [vmem:[#allocation7 + $0x398] sm:$0xff]
    %v1625 = vld [vmem:[#allocation7 + $0x3a0] sm:$0xff]
    %v1626 = vld [vmem:[#allocation7 + $0x3a8] sm:$0xff]
    %v1627 = vld [vmem:[#allocation7 + $0x3b0] sm:$0xff]
    %v1628 = vld [vmem:[#allocation7 + $0x3b8] sm:$0xff]
    %v1629 = vld [vmem:[#allocation7 + $0x3c0] sm:$0xff]
    %v1630 = vld [vmem:[#allocation7 + $0x3c8] sm:$0xff]
    %v1631 = vld [vmem:[#allocation7 + $0x3d0] sm:$0xff]
    %v1632 = vld [vmem:[#allocation7 + $0x3d8] sm:$0xff]
    %v1633 = vld [vmem:[#allocation7 + $0x3e0] sm:$0xff]
    %v1634 = vld [vmem:[#allocation7 + $0x3e8] sm:$0xff]
    %v1635 = vld [vmem:[#allocation7 + $0x3f0] sm:$0xff]
    %v1636 = vld [vmem:[#allocation7 + $0x3f8] sm:$0xff]
    %v1637 = vld [vmem:[#allocation7 + $0x400] sm:$0xff]
    %v1638 = vld [vmem:[#allocation7 + $0x408] sm:$0xff]
    %v1639 = vld [vmem:[#allocation7 + $0x410] sm:$0xff]
    %v1640 = vld [vmem:[#allocation7 + $0x418] sm:$0xff]
    %v1641 = vld [vmem:[#allocation7 + $0x420] sm:$0xff]
    %v1642 = vld [vmem:[#allocation7 + $0x428] sm:$0xff]
    %v1643 = vld [vmem:[#allocation7 + $0x430] sm:$0xff]
    %v1644 = vld [vmem:[#allocation7 + $0x438] sm:$0xff]
    %v1645 = vld [vmem:[#allocation7 + $0x440] sm:$0xff]
    %v1646 = vld [vmem:[#allocation7 + $0x448] sm:$0xff]
    %v1647 = vld [vmem:[#allocation7 + $0x450] sm:$0xff]
    %v1648 = vld [vmem:[#allocation7 + $0x458] sm:$0xff]
    %v1649 = vld [vmem:[#allocation7 + $0x460] sm:$0xff]
    %v1650 = vld [vmem:[#allocation7 + $0x468] sm:$0xff]
    %v1651 = vld [vmem:[#allocation7 + $0x470] sm:$0xff]
    %v1652 = vld [vmem:[#allocation7 + $0x478] sm:$0xff]
    %v1653 = vld [vmem:[#allocation7 + $0x480] sm:$0xff]
    %v1654 = vld [vmem:[#allocation7 + $0x488] sm:$0xff]
    %v1655 = vld [vmem:[#allocation7 + $0x490] sm:$0xff]
    %v1656 = vld [vmem:[#allocation7 + $0x498] sm:$0xff]
    %v1657 = vld [vmem:[#allocation7 + $0x4a0] sm:$0xff]
    %v1658 = vld [vmem:[#allocation7 + $0x4a8] sm:$0xff]
    %v1659 = vld [vmem:[#allocation7 + $0x4b0] sm:$0xff]
    %v1660 = vld [vmem:[#allocation7 + $0x4b8] sm:$0xff]
    %v1661 = vld [vmem:[#allocation7 + $0x4c0] sm:$0xff]
    %v1662 = vld [vmem:[#allocation7 + $0x4c8] sm:$0xff]
    %v1663 = vld [vmem:[#allocation7 + $0x4d0] sm:$0xff]
    %v1664 = vld [vmem:[#allocation7 + $0x4d8] sm:$0xff]
    %v1665 = vld [vmem:[#allocation7 + $0x4e0] sm:$0xff]
    %v1666 = vld [vmem:[#allocation7 + $0x4e8] sm:$0xff]
    %v1667 = vld [vmem:[#allocation7 + $0x4f0] sm:$0xff]
    %v1668 = vld [vmem:[#allocation7 + $0x4f8] sm:$0xff]
    %v1669 = vld [vmem:[#allocation7 + $0x500] sm:$0xff]
    %v1670 = vld [vmem:[#allocation7 + $0x508] sm:$0xff]
    %v1671 = vld [vmem:[#allocation7 + $0x510] sm:$0xff]
    %v1672 = vld [vmem:[#allocation7 + $0x518] sm:$0xff]
    %v1673 = vld [vmem:[#allocation7 + $0x520] sm:$0xff]
    %v1674 = vld [vmem:[#allocation7 + $0x528] sm:$0xff]
    %v1675 = vld [vmem:[#allocation7 + $0x530] sm:$0xff]
    %v1676 = vld [vmem:[#allocation7 + $0x538] sm:$0xff]
    %v1677 = vld [vmem:[#allocation7 + $0x540] sm:$0xff]
    %v1678 = vld [vmem:[#allocation7 + $0x548] sm:$0xff]
    %v1679 = vld [vmem:[#allocation7 + $0x550] sm:$0xff]
    %v1680 = vld [vmem:[#allocation7 + $0x558] sm:$0xff]
    %v1681 = vld [vmem:[#allocation7 + $0x560] sm:$0xff]
    %v1682 = vld [vmem:[#allocation7 + $0x568] sm:$0xff]
    %v1683 = vld [vmem:[#allocation7 + $0x570] sm:$0xff]
    %v1684 = vld [vmem:[#allocation7 + $0x578] sm:$0xff]
    %v1685 = vld [vmem:[#allocation7 + $0x580] sm:$0xff]
    %v1686 = vld [vmem:[#allocation7 + $0x588] sm:$0xff]
    %v1687 = vld [vmem:[#allocation7 + $0x590] sm:$0xff]
    %v1688 = vld [vmem:[#allocation7 + $0x598] sm:$0xff]
    %v1689 = vld [vmem:[#allocation7 + $0x5a0] sm:$0xff]
    %v1690 = vld [vmem:[#allocation7 + $0x5a8] sm:$0xff]
    %v1691 = vld [vmem:[#allocation7 + $0x5b0] sm:$0xff]
    %v1692 = vld [vmem:[#allocation7 + $0x5b8] sm:$0xff]
    %v1693 = vld [vmem:[#allocation7 + $0x5c0] sm:$0xff]
    %v1694 = vld [vmem:[#allocation7 + $0x5c8] sm:$0xff]
    %v1695 = vld [vmem:[#allocation7 + $0x5d0] sm:$0xff]
    %v1696 = vld [vmem:[#allocation7 + $0x5d8] sm:$0xff]
    %v1697 = vld [vmem:[#allocation7 + $0x5e0] sm:$0xff]
    %v1698 = vld [vmem:[#allocation7 + $0x5e8] sm:$0xff]
    %v1699 = vld [vmem:[#allocation7 + $0x5f0] sm:$0xff]
    %v1700 = vld [vmem:[#allocation7 + $0x5f8] sm:$0xff]
    %v1701 = vld [vmem:[#allocation7 + $0x600] sm:$0xff]
    %v1702 = vld [vmem:[#allocation7 + $0x608] sm:$0xff]
    %v1703 = vld [vmem:[#allocation7 + $0x610] sm:$0xff]
    %v1704 = vld [vmem:[#allocation7 + $0x618] sm:$0xff]
    %v1705 = vld [vmem:[#allocation7 + $0x620] sm:$0xff]
    %v1706 = vld [vmem:[#allocation7 + $0x628] sm:$0xff]
    %v1707 = vld [vmem:[#allocation7 + $0x630] sm:$0xff]
    %v1708 = vld [vmem:[#allocation7 + $0x638] sm:$0xff]
    %v1709 = vld [vmem:[#allocation7 + $0x640] sm:$0xff]
    %v1710 = vld [vmem:[#allocation7 + $0x648] sm:$0xff]
    %v1711 = vld [vmem:[#allocation7 + $0x650] sm:$0xff]
    %v1712 = vld [vmem:[#allocation7 + $0x658] sm:$0xff]
    %v1713 = vld [vmem:[#allocation7 + $0x660] sm:$0xff]
    %v1714 = vld [vmem:[#allocation7 + $0x668] sm:$0xff]
    %v1715 = vld [vmem:[#allocation7 + $0x670] sm:$0xff]
    %v1716 = vld [vmem:[#allocation7 + $0x678] sm:$0xff]
    %v1717 = vld [vmem:[#allocation7 + $0x680] sm:$0xff]
    %v1718 = vld [vmem:[#allocation7 + $0x688] sm:$0xff]
    %v1719 = vld [vmem:[#allocation7 + $0x690] sm:$0xff]
    %v1720 = vld [vmem:[#allocation7 + $0x698] sm:$0xff]
    %v1721 = vld [vmem:[#allocation7 + $0x6a0] sm:$0xff]
    %v1722 = vld [vmem:[#allocation7 + $0x6a8] sm:$0xff]
    %v1723 = vld [vmem:[#allocation7 + $0x6b0] sm:$0xff]
    %v1724 = vld [vmem:[#allocation7 + $0x6b8] sm:$0xff]
    %v1725 = vld [vmem:[#allocation7 + $0x6c0] sm:$0xff]
    %v1726 = vld [vmem:[#allocation7 + $0x6c8] sm:$0xff]
    %v1727 = vld [vmem:[#allocation7 + $0x6d0] sm:$0xff]
    %v1728 = vld [vmem:[#allocation7 + $0x6d8] sm:$0xff]
    %v1729 = vld [vmem:[#allocation7 + $0x6e0] sm:$0xff]
    %v1730 = vld [vmem:[#allocation7 + $0x6e8] sm:$0xff]
    %v1731 = vld [vmem:[#allocation7 + $0x6f0] sm:$0xff]
    %v1732 = vld [vmem:[#allocation7 + $0x6f8] sm:$0xff]
    %v1733 = vld [vmem:[#allocation7 + $0x700] sm:$0xff]
    %v1734 = vld [vmem:[#allocation7 + $0x708] sm:$0xff]
    %v1735 = vld [vmem:[#allocation7 + $0x710] sm:$0xff]
    %v1736 = vld [vmem:[#allocation7 + $0x718] sm:$0xff]
    %v1737 = vld [vmem:[#allocation7 + $0x720] sm:$0xff]
    %v1738 = vld [vmem:[#allocation7 + $0x728] sm:$0xff]
    %v1739 = vld [vmem:[#allocation7 + $0x730] sm:$0xff]
    %v1740 = vld [vmem:[#allocation7 + $0x738] sm:$0xff]
    %v1741 = vld [vmem:[#allocation7 + $0x740] sm:$0xff]
    %v1742 = vld [vmem:[#allocation7 + $0x748] sm:$0xff]
    %v1743 = vld [vmem:[#allocation7 + $0x750] sm:$0xff]
    %v1744 = vld [vmem:[#allocation7 + $0x758] sm:$0xff]
    %v1745 = vld [vmem:[#allocation7 + $0x760] sm:$0xff]
    %v1746 = vld [vmem:[#allocation7 + $0x768] sm:$0xff]
    %v1747 = vld [vmem:[#allocation7 + $0x770] sm:$0xff]
    %v1748 = vld [vmem:[#allocation7 + $0x778] sm:$0xff]
    %v1749 = vld [vmem:[#allocation7 + $0x780] sm:$0xff]
    %v1750 = vld [vmem:[#allocation7 + $0x788] sm:$0xff]
    %v1751 = vld [vmem:[#allocation7 + $0x790] sm:$0xff]
    %v1752 = vld [vmem:[#allocation7 + $0x798] sm:$0xff]
    %v1753 = vld [vmem:[#allocation7 + $0x7a0] sm:$0xff]
    %v1754 = vld [vmem:[#allocation7 + $0x7a8] sm:$0xff]
    %v1755 = vld [vmem:[#allocation7 + $0x7b0] sm:$0xff]
    %v1756 = vld [vmem:[#allocation7 + $0x7b8] sm:$0xff]
    %v1757 = vld [vmem:[#allocation7 + $0x7c0] sm:$0xff]
    %v1758 = vld [vmem:[#allocation7 + $0x7c8] sm:$0xff]
    %v1759 = vld [vmem:[#allocation7 + $0x7d0] sm:$0xff]
    %v1760 = vld [vmem:[#allocation7 + $0x7d8] sm:$0xff]
    %v1761 = vld [vmem:[#allocation7 + $0x7e0] sm:$0xff]
    %v1762 = vld [vmem:[#allocation7 + $0x7e8] sm:$0xff]
    %v1763 = vld [vmem:[#allocation7 + $0x7f0] sm:$0xff]
    %v1764 = vld [vmem:[#allocation7 + $0x7f8] sm:$0xff]
    %v1765 = vld [vmem:[#allocation8] sm:$0xf]
    %v1767 = vperm.slane %v1765, 0
    %v1768 = vperm.slane %v1765, 1
    %v1769 = vperm.slane %v1765, 2
    %v1770 = vperm.slane %v1765, 3
    %1775 = vmatpush.msra.mxu0 %v1569
    %1776 = vmatpush.msra.mxu0 %v1565
    %1777 = vmatpush.msra.mxu0 %v1561
    %1778 = vmatpush.msra.mxu0 %v1557
    %1779 = vmatpush.msra.mxu0 %v1553
    %1780 = vmatpush.msra.mxu0 %v1549
    %1781 = vmatpush.msra.mxu0 %v1545
    %1782 = vmatpush.msra.mxu0 %v1541
    %1783 = vmatpush.msra.mxu0 %v1537
    %1784 = vmatpush.msra.mxu0 %v1533
    %1785 = vmatpush.msra.mxu0 %v1529
    %1786 = vmatpush.msra.mxu0 %v1525
    %1787 = vmatpush.msra.mxu0 %v1521
    %1788 = vmatpush.msra.mxu0 %v1517
    %1789 = vmatpush.msra.mxu0 %v1513
    %1790 = vmatpush.msra.mxu0 %v1509
    %1791 = vmatmul.f32.gmra.mxu0 %v1505
    %v1792 = vpop.f32.mrf.mxu0
    %v1793 = vadd.f32 %v1767, %v1792
    %1794 = vdwg.mxu0
    %1795 = vmatpush.msra.mxu0 %v1633
    %1796 = vmatpush.msra.mxu0 %v1629
    %1797 = vmatpush.msra.mxu0 %v1625
    %1798 = vmatpush.msra.mxu0 %v1621
    %1799 = vmatpush.msra.mxu0 %v1617
    %1800 = vmatpush.msra.mxu0 %v1613
    %1801 = vmatpush.msra.mxu0 %v1609
    %1802 = vmatpush.msra.mxu0 %v1605
    %1803 = vmatpush.msra.mxu0 %v1601
    %1804 = vmatpush.msra.mxu0 %v1597
    %1805 = vmatpush.msra.mxu0 %v1593
    %1806 = vmatpush.msra.mxu0 %v1589
    %1807 = vmatpush.msra.mxu0 %v1585
    %1808 = vmatpush.msra.mxu0 %v1581
    %1809 = vmatpush.msra.mxu0 %v1577
    %1810 = vmatpush.msra.mxu0 %v1573
    %1811 = vmatmul.f32.gmra.mxu0 %v1506
    %v1812 = vpop.f32.mrf.mxu0
    %v1813 = vadd.f32 %v1793, %v1812
    %1814 = vdwg.mxu0
    %1815 = vmatpush.msra.mxu0 %v1697
    %1816 = vmatpush.msra.mxu0 %v1693
    %1817 = vmatpush.msra.mxu0 %v1689
    %1818 = vmatpush.msra.mxu0 %v1685
    %1819 = vmatpush.msra.mxu0 %v1681
    %1820 = vmatpush.msra.mxu0 %v1677
    %1821 = vmatpush.msra.mxu0 %v1673
    %1822 = vmatpush.msra.mxu0 %v1669
    %1823 = vmatpush.msra.mxu0 %v1665
    %1824 = vmatpush.msra.mxu0 %v1661
    %1825 = vmatpush.msra.mxu0 %v1657
    %1826 = vmatpush.msra.mxu0 %v1653
    %1827 = vmatpush.msra.mxu0 %v1649
    %1828 = vmatpush.msra.mxu0 %v1645
    %1829 = vmatpush.msra.mxu0 %v1641
    %1830 = vmatpush.msra.mxu0 %v1637
    %1831 = vmatmul.f32.gmra.mxu0 %v1507
    %v1832 = vpop.f32.mrf.mxu0
    %v1833 = vadd.f32 %v1813, %v1832
    %1834 = vdwg.mxu0
    %1835 = vmatpush.msra.mxu0 %v1761
    %1836 = vmatpush.msra.mxu0 %v1757
    %1837 = vmatpush.msra.mxu0 %v1753
    %1838 = vmatpush.msra.mxu0 %v1749
    %1839 = vmatpush.msra.mxu0 %v1745
    %1840 = vmatpush.msra.mxu0 %v1741
    %1841 = vmatpush.msra.mxu0 %v1737
    %1842 = vmatpush.msra.mxu0 %v1733
    %1843 = vmatpush.msra.mxu0 %v1729
    %1844 = vmatpush.msra.mxu0 %v1725
    %1845 = vmatpush.msra.mxu0 %v1721
    %1846 = vmatpush.msra.mxu0 %v1717
    %1847 = vmatpush.msra.mxu0 %v1713
    %1848 = vmatpush.msra.mxu0 %v1709
    %1849 = vmatpush.msra.mxu0 %v1705
    %1850 = vmatpush.msra.mxu0 %v1701
    %1851 = vmatmul.f32.gmra.mxu0 %v1508
    %v1852 = vpop.f32.mrf.mxu0
    %v1853 = vadd.f32 %v1833, %v1852
    %1854 = vdwg.mxu0
    %1855 = vmatpush.msra.mxu0 %v1570
    %1856 = vmatpush.msra.mxu0 %v1566
    %1857 = vmatpush.msra.mxu0 %v1562
    %1858 = vmatpush.msra.mxu0 %v1558
    %1859 = vmatpush.msra.mxu0 %v1554
    %1860 = vmatpush.msra.mxu0 %v1550
    %1861 = vmatpush.msra.mxu0 %v1546
    %1862 = vmatpush.msra.mxu0 %v1542
    %1863 = vmatpush.msra.mxu0 %v1538
    %1864 = vmatpush.msra.mxu0 %v1534
    %1865 = vmatpush.msra.mxu0 %v1530
    %1866 = vmatpush.msra.mxu0 %v1526
    %1867 = vmatpush.msra.mxu0 %v1522
    %1868 = vmatpush.msra.mxu0 %v1518
    %1869 = vmatpush.msra.mxu0 %v1514
    %1870 = vmatpush.msra.mxu0 %v1510
    %1871 = vmatmul.f32.gmra.mxu0 %v1505
    %v1872 = vpop.f32.mrf.mxu0
    %v1873 = vadd.f32 %v1768, %v1872
    %1874 = vdwg.mxu0
    %1875 = vmatpush.msra.mxu0 %v1634
    %1876 = vmatpush.msra.mxu0 %v1630
    %1877 = vmatpush.msra.mxu0 %v1626
    %1878 = vmatpush.msra.mxu0 %v1622
    %1879 = vmatpush.msra.mxu0 %v1618
    %1880 = vmatpush.msra.mxu0 %v1614
    %1881 = vmatpush.msra.mxu0 %v1610
    %1882 = vmatpush.msra.mxu0 %v1606
    %1883 = vmatpush.msra.mxu0 %v1602
    %1884 = vmatpush.msra.mxu0 %v1598
    %1885 = vmatpush.msra.mxu0 %v1594
    %1886 = vmatpush.msra.mxu0 %v1590
    %1887 = vmatpush.msra.mxu0 %v1586
    %1888 = vmatpush.msra.mxu0 %v1582
    %1889 = vmatpush.msra.mxu0 %v1578
    %1890 = vmatpush.msra.mxu0 %v1574
    %1891 = vmatmul.f32.gmra.mxu0 %v1506
    %v1892 = vpop.f32.mrf.mxu0
    %v1893 = vadd.f32 %v1873, %v1892
    %1894 = vdwg.mxu0
    %1895 = vmatpush.msra.mxu0 %v1698
    %1896 = vmatpush.msra.mxu0 %v1694
    %1897 = vmatpush.msra.mxu0 %v1690
    %1898 = vmatpush.msra.mxu0 %v1686
    %1899 = vmatpush.msra.mxu0 %v1682
    %1900 = vmatpush.msra.mxu0 %v1678
    %1901 = vmatpush.msra.mxu0 %v1674
    %1902 = vmatpush.msra.mxu0 %v1670
    %1903 = vmatpush.msra.mxu0 %v1666
    %1904 = vmatpush.msra.mxu0 %v1662
    %1905 = vmatpush.msra.mxu0 %v1658
    %1906 = vmatpush.msra.mxu0 %v1654
    %1907 = vmatpush.msra.mxu0 %v1650
    %1908 = vmatpush.msra.mxu0 %v1646
    %1909 = vmatpush.msra.mxu0 %v1642
    %1910 = vmatpush.msra.mxu0 %v1638
    %1911 = vmatmul.f32.gmra.mxu0 %v1507
    %v1912 = vpop.f32.mrf.mxu0
    %v1913 = vadd.f32 %v1893, %v1912
    %1914 = vdwg.mxu0
    %1915 = vmatpush.msra.mxu0 %v1762
    %1916 = vmatpush.msra.mxu0 %v1758
    %1917 = vmatpush.msra.mxu0 %v1754
    %1918 = vmatpush.msra.mxu0 %v1750
    %1919 = vmatpush.msra.mxu0 %v1746
    %1920 = vmatpush.msra.mxu0 %v1742
    %1921 = vmatpush.msra.mxu0 %v1738
    %1922 = vmatpush.msra.mxu0 %v1734
    %1923 = vmatpush.msra.mxu0 %v1730
    %1924 = vmatpush.msra.mxu0 %v1726
    %1925 = vmatpush.msra.mxu0 %v1722
    %1926 = vmatpush.msra.mxu0 %v1718
    %1927 = vmatpush.msra.mxu0 %v1714
    %1928 = vmatpush.msra.mxu0 %v1710
    %1929 = vmatpush.msra.mxu0 %v1706
    %1930 = vmatpush.msra.mxu0 %v1702
    %1931 = vmatmul.f32.gmra.mxu0 %v1508
    %v1932 = vpop.f32.mrf.mxu0
    %v1933 = vadd.f32 %v1913, %v1932
    %1934 = vdwg.mxu0
    %1935 = vmatpush.msra.mxu0 %v1571
    %1936 = vmatpush.msra.mxu0 %v1567
    %1937 = vmatpush.msra.mxu0 %v1563
    %1938 = vmatpush.msra.mxu0 %v1559
    %1939 = vmatpush.msra.mxu0 %v1555
    %1940 = vmatpush.msra.mxu0 %v1551
    %1941 = vmatpush.msra.mxu0 %v1547
    %1942 = vmatpush.msra.mxu0 %v1543
    %1943 = vmatpush.msra.mxu0 %v1539
    %1944 = vmatpush.msra.mxu0 %v1535
    %1945 = vmatpush.msra.mxu0 %v1531
    %1946 = vmatpush.msra.mxu0 %v1527
    %1947 = vmatpush.msra.mxu0 %v1523
    %1948 = vmatpush.msra.mxu0 %v1519
    %1949 = vmatpush.msra.mxu0 %v1515
    %1950 = vmatpush.msra.mxu0 %v1511
    %1951 = vmatmul.f32.gmra.mxu0 %v1505
    %v1952 = vpop.f32.mrf.mxu0
    %v1953 = vadd.f32 %v1769, %v1952
    %1954 = vdwg.mxu0
    %1955 = vmatpush.msra.mxu0 %v1635
    %1956 = vmatpush.msra.mxu0 %v1631
    %1957 = vmatpush.msra.mxu0 %v1627
    %1958 = vmatpush.msra.mxu0 %v1623
    %1959 = vmatpush.msra.mxu0 %v1619
    %1960 = vmatpush.msra.mxu0 %v1615
    %1961 = vmatpush.msra.mxu0 %v1611
    %1962 = vmatpush.msra.mxu0 %v1607
    %1963 = vmatpush.msra.mxu0 %v1603
    %1964 = vmatpush.msra.mxu0 %v1599
    %1965 = vmatpush.msra.mxu0 %v1595
    %1966 = vmatpush.msra.mxu0 %v1591
    %1967 = vmatpush.msra.mxu0 %v1587
    %1968 = vmatpush.msra.mxu0 %v1583
    %1969 = vmatpush.msra.mxu0 %v1579
    %1970 = vmatpush.msra.mxu0 %v1575
    %1971 = vmatmul.f32.gmra.mxu0 %v1506
    %v1972 = vpop.f32.mrf.mxu0
    %v1973 = vadd.f32 %v1953, %v1972
    %1974 = vdwg.mxu0
    %1975 = vmatpush.msra.mxu0 %v1699
    %1976 = vmatpush.msra.mxu0 %v1695
    %1977 = vmatpush.msra.mxu0 %v1691
    %1978 = vmatpush.msra.mxu0 %v1687
    %1979 = vmatpush.msra.mxu0 %v1683
    %1980 = vmatpush.msra.mxu0 %v1679
    %1981 = vmatpush.msra.mxu0 %v1675
    %1982 = vmatpush.msra.mxu0 %v1671
    %1983 = vmatpush.msra.mxu0 %v1667
    %1984 = vmatpush.msra.mxu0 %v1663
    %1985 = vmatpush.msra.mxu0 %v1659
    %1986 = vmatpush.msra.mxu0 %v1655
    %1987 = vmatpush.msra.mxu0 %v1651
    %1988 = vmatpush.msra.mxu0 %v1647
    %1989 = vmatpush.msra.mxu0 %v1643
    %1990 = vmatpush.msra.mxu0 %v1639
    %1991 = vmatmul.f32.gmra.mxu0 %v1507
    %v1992 = vpop.f32.mrf.mxu0
    %v1993 = vadd.f32 %v1973, %v1992
    %1994 = vdwg.mxu0
    %1995 = vmatpush.msra.mxu0 %v1763
    %1996 = vmatpush.msra.mxu0 %v1759
    %1997 = vmatpush.msra.mxu0 %v1755
    %1998 = vmatpush.msra.mxu0 %v1751
    %1999 = vmatpush.msra.mxu0 %v1747
    %2000 = vmatpush.msra.mxu0 %v1743
    %2001 = vmatpush.msra.mxu0 %v1739
    %2002 = vmatpush.msra.mxu0 %v1735
    %2003 = vmatpush.msra.mxu0 %v1731
    %2004 = vmatpush.msra.mxu0 %v1727
    %2005 = vmatpush.msra.mxu0 %v1723
    %2006 = vmatpush.msra.mxu0 %v1719
    %2007 = vmatpush.msra.mxu0 %v1715
    %2008 = vmatpush.msra.mxu0 %v1711
    %2009 = vmatpush.msra.mxu0 %v1707
    %2010 = vmatpush.msra.mxu0 %v1703
    %2011 = vmatmul.f32.gmra.mxu0 %v1508
    %v2012 = vpop.f32.mrf.mxu0
    %v2013 = vadd.f32 %v1993, %v2012
    %2014 = vdwg.mxu0
    %2015 = vmatpush.msra.mxu0 %v1572
    %2016 = vmatpush.msra.mxu0 %v1568
    %2017 = vmatpush.msra.mxu0 %v1564
    %2018 = vmatpush.msra.mxu0 %v1560
    %2019 = vmatpush.msra.mxu0 %v1556
    %2020 = vmatpush.msra.mxu0 %v1552
    %2021 = vmatpush.msra.mxu0 %v1548
    %2022 = vmatpush.msra.mxu0 %v1544
    %2023 = vmatpush.msra.mxu0 %v1540
    %2024 = vmatpush.msra.mxu0 %v1536
    %2025 = vmatpush.msra.mxu0 %v1532
    %2026 = vmatpush.msra.mxu0 %v1528
    %2027 = vmatpush.msra.mxu0 %v1524
    %2028 = vmatpush.msra.mxu0 %v1520
    %2029 = vmatpush.msra.mxu0 %v1516
    %2030 = vmatpush.msra.mxu0 %v1512
    %2031 = vmatmul.f32.gmra.mxu0 %v1505
    %v2032 = vpop.f32.mrf.mxu0
    %v2033 = vadd.f32 %v1770, %v2032
    %2034 = vdwg.mxu0
    %2035 = vmatpush.msra.mxu0 %v1636
    %2036 = vmatpush.msra.mxu0 %v1632
    %2037 = vmatpush.msra.mxu0 %v1628
    %2038 = vmatpush.msra.mxu0 %v1624
    %2039 = vmatpush.msra.mxu0 %v1620
    %2040 = vmatpush.msra.mxu0 %v1616
    %2041 = vmatpush.msra.mxu0 %v1612
    %2042 = vmatpush.msra.mxu0 %v1608
    %2043 = vmatpush.msra.mxu0 %v1604
    %2044 = vmatpush.msra.mxu0 %v1600
    %2045 = vmatpush.msra.mxu0 %v1596
    %2046 = vmatpush.msra.mxu0 %v1592
    %2047 = vmatpush.msra.mxu0 %v1588
    %2048 = vmatpush.msra.mxu0 %v1584
    %2049 = vmatpush.msra.mxu0 %v1580
    %2050 = vmatpush.msra.mxu0 %v1576
    %2051 = vmatmul.f32.gmra.mxu0 %v1506
    %v2052 = vpop.f32.mrf.mxu0
    %v2053 = vadd.f32 %v2033, %v2052
    %2054 = vdwg.mxu0
    %2055 = vmatpush.msra.mxu0 %v1700
    %2056 = vmatpush.msra.mxu0 %v1696
    %2057 = vmatpush.msra.mxu0 %v1692
    %2058 = vmatpush.msra.mxu0 %v1688
    %2059 = vmatpush.msra.mxu0 %v1684
    %2060 = vmatpush.msra.mxu0 %v1680
    %2061 = vmatpush.msra.mxu0 %v1676
    %2062 = vmatpush.msra.mxu0 %v1672
    %2063 = vmatpush.msra.mxu0 %v1668
    %2064 = vmatpush.msra.mxu0 %v1664
    %2065 = vmatpush.msra.mxu0 %v1660
    %2066 = vmatpush.msra.mxu0 %v1656
    %2067 = vmatpush.msra.mxu0 %v1652
    %2068 = vmatpush.msra.mxu0 %v1648
    %2069 = vmatpush.msra.mxu0 %v1644
    %2070 = vmatpush.msra.mxu0 %v1640
    %2071 = vmatmul.f32.gmra.mxu0 %v1507
    %v2072 = vpop.f32.mrf.mxu0
    %v2073 = vadd.f32 %v2053, %v2072
    %2074 = vdwg.mxu0
    %2075 = vmatpush.msra.mxu0 %v1764
    %2076 = vmatpush.msra.mxu0 %v1760
    %2077 = vmatpush.msra.mxu0 %v1756
    %2078 = vmatpush.msra.mxu0 %v1752
    %2079 = vmatpush.msra.mxu0 %v1748
    %2080 = vmatpush.msra.mxu0 %v1744
    %2081 = vmatpush.msra.mxu0 %v1740
    %2082 = vmatpush.msra.mxu0 %v1736
    %2083 = vmatpush.msra.mxu0 %v1732
    %2084 = vmatpush.msra.mxu0 %v1728
    %2085 = vmatpush.msra.mxu0 %v1724
    %2086 = vmatpush.msra.mxu0 %v1720
    %2087 = vmatpush.msra.mxu0 %v1716
    %2088 = vmatpush.msra.mxu0 %v1712
    %2089 = vmatpush.msra.mxu0 %v1708
    %2090 = vmatpush.msra.mxu0 %v1704
    %2091 = vmatmul.f32.gmra.mxu0 %v1508
    %v2092 = vpop.f32.mrf.mxu0
    %v2093 = vadd.f32 %v2073, %v2092
    %2094 = vdwg.mxu0
    %v2095 = vmul.f32 %v1853, 0.5
    %v2096 = vmul.f32 %v1933, 0.5
    %v2097 = vmul.f32 %v2013, 0.5
    %v2098 = vmul.f32 %v2093, 0.5
    %v2099 = vmul.f32 %v1853, 0.70710677
    %v2100 = vmul.f32 %v1933, 0.70710677
    %v2101 = vmul.f32 %v2013, 0.70710677
    %v2102 = vmul.f32 %v2093, 0.70710677
    %v2103 = vmax.f32 %v2099, -4.0
    %v2104 = vmax.f32 %v2100, -4.0
    %v2105 = vmax.f32 %v2101, -4.0
    %v2106 = vmax.f32 %v2102, -4.0
    %v2107 = vmin.f32 %v2103, 4.0
    %v2108 = vmin.f32 %v2104, 4.0
    %v2109 = vmin.f32 %v2105, 4.0
    %v2110 = vmin.f32 %v2106, 4.0
    %v2111 = vmul.f32 %v2107, %v2107
    %v2112 = vmul.f32 %v2108, %v2108
    %v2113 = vmul.f32 %v2109, %v2109
    %v2114 = vmul.f32 %v2110, %v2110
    %v2115 = vmul.f32 %v2111, -2.7261424e-10
    %v2116 = vmul.f32 %v2112, -2.7261424e-10
    %v2117 = vmul.f32 %v2113, -2.7261424e-10
    %v2118 = vmul.f32 %v2114, -2.7261424e-10
    %v2119 = vadd.f32 %v2115, 2.7706815e-08
    %v2120 = vadd.f32 %v2116, 2.7706815e-08
    %v2121 = vadd.f32 %v2117, 2.7706815e-08
    %v2122 = vadd.f32 %v2118, 2.7706815e-08
    %v2123 = vmul.f32 %v2119, %v2111
    %v2124 = vmul.f32 %v2120, %v2112
    %v2125 = vmul.f32 %v2121, %v2113
    %v2126 = vmul.f32 %v2122, %v2114
    %v2127 = vadd.f32 %v2123, -2.101024e-06
    %v2128 = vadd.f32 %v2124, -2.101024e-06
    %v2129 = vadd.f32 %v2125, -2.101024e-06
    %v2130 = vadd.f32 %v2126, -2.101024e-06
    %v2131 = vmul.f32 %v2127, %v2111
    %v2132 = vmul.f32 %v2128, %v2112
    %v2133 = vmul.f32 %v2129, %v2113
    %v2134 = vmul.f32 %v2130, %v2114
    %v2135 = vadd.f32 %v2131, -5.6925062e-05
    %v2136 = vadd.f32 %v2132, -5.6925062e-05
    %v2137 = vadd.f32 %v2133, -5.6925062e-05
    %v2138 = vadd.f32 %v2134, -5.6925062e-05
    %v2139 = vmul.f32 %v2135, %v2111
    %v2140 = vmul.f32 %v2136, %v2112
    %v2141 = vmul.f32 %v2137, %v2113
    %v2142 = vmul.f32 %v2138, %v2114
    %v2143 = vadd.f32 %v2139, -0.00073499064
    %v2144 = vadd.f32 %v2140, -0.00073499064
    %v2145 = vadd.f32 %v2141, -0.00073499064
    %v2146 = vadd.f32 %v2142, -0.00073499064
    %v2147 = vmul.f32 %v2143, %v2111
    %v2148 = vmul.f32 %v2144, %v2112
    %v2149 = vmul.f32 %v2145, %v2113
    %v2150 = vmul.f32 %v2146, %v2114
    %v2151 = vadd.f32 %v2147, -0.0029546
    %v2152 = vadd.f32 %v2148, -0.0029546
    %v2153 = vadd.f32 %v2149, -0.0029546
    %v2154 = vadd.f32 %v2150, -0.0029546
    %v2155 = vmul.f32 %v2151, %v2111
    %v2156 = vmul.f32 %v2152, %v2112
    %v2157 = vmul.f32 %v2153, %v2113
    %v2158 = vmul.f32 %v2154, %v2114
    %v2159 = vadd.f32 %v2155, -0.016096033
    %v2160 = vadd.f32 %v2156, -0.016096033
    %v2161 = vadd.f32 %v2157, -0.016096033
    %v2162 = vadd.f32 %v2158, -0.016096033
    %v2163 = vmul.f32 %v2111, -1.45660715e-05
    %v2164 = vmul.f32 %v2112, -1.45660715e-05
    %v2165 = vmul.f32 %v2113, -1.45660715e-05
    %v2166 = vmul.f32 %v2114, -1.45660715e-05
    %v2167 = vadd.f32 %v2163, -0.00021337405
    %v2168 = vadd.f32 %v2164, -0.00021337405
    %v2169 = vadd.f32 %v2165, -0.00021337405
    %v2170 = vadd.f32 %v2166, -0.00021337405
    %v2171 = vmul.f32 %v2167, %v2111
    %v2172 = vmul.f32 %v2168, %v2112
    %v2173 = vmul.f32 %v2169, %v2113
    %v2174 = vmul.f32 %v2170, %v2114
    %v2175 = vadd.f32 %v2171, -0.001682827
    %v2176 = vadd.f32 %v2172, -0.001682827
    %v2177 = vadd.f32 %v2173, -0.001682827
    %v2178 = vadd.f32 %v2174, -0.001682827
    %v2179 = vmul.f32 %v2175, %v2111
    %v2180 = vmul.f32 %v2176, %v2112
    %v2181 = vmul.f32 %v2177, %v2113
    %v2182 = vmul.f32 %v2178, %v2114
    %v2183 = vadd.f32 %v2179, -0.0073733293
    %v2184 = vadd.f32 %v2180, -0.0073733293
    %v2185 = vadd.f32 %v2181, -0.0073733293
    %v2186 = vadd.f32 %v2182, -0.0073733293
    %v2187 = vmul.f32 %v2183, %v2111
    %v2188 = vmul.f32 %v2184, %v2112
    %v2189 = vmul.f32 %v2185, %v2113
    %v2190 = vmul.f32 %v2186, %v2114
    %v2191 = vadd.f32 %v2187, -0.014264739
    %v2192 = vadd.f32 %v2188, -0.014264739
    %v2193 = vadd.f32 %v2189, -0.014264739
    %v2194 = vadd.f32 %v2190, -0.014264739
    %v2195 = vmul.f32 %v2107, %v2159
    %v2196 = vmul.f32 %v2108, %v2160
    %v2197 = vmul.f32 %v2109, %v2161
    %v2198 = vmul.f32 %v2110, %v2162
    %v2199 = vrcp.pop %v2191
    %v2200 = vrcp.pop %v2192
    %v2201 = vrcp.pop %v2193
    %v2202 = vrcp.pop %v2194
    %v2203 = vmul.f32 %v2195, %v2199
    %v2204 = vmul.f32 %v2196, %v2200
    %v2205 = vmul.f32 %v2197, %v2201
    %v2206 = vmul.f32 %v2198, %v2202
    %v2207 = vadd.f32 %v2203, 1.0
    %v2208 = vadd.f32 %v2204, 1.0
    %v2209 = vadd.f32 %v2205, 1.0
    %v2210 = vadd.f32 %v2206, 1.0
    %v2211 = vmul.f32 %v2095, %v2207
    %v2212 = vmul.f32 %v2096, %v2208
    %v2213 = vmul.f32 %v2097, %v2209
    %v2214 = vmul.f32 %v2098, %v2210
    %v2215 = vld [vmem:[#allocation10] sm:$0xff]
    %v2216 = vld [vmem:[#allocation10 + $0x8] sm:$0xff]
    %v2217 = vld [vmem:[#allocation10 + $0x10] sm:$0xff]
    %v2218 = vld [vmem:[#allocation10 + $0x18] sm:$0xff]
    %v2219 = vld [vmem:[#allocation10 + $0x20] sm:$0xff]
    %v2220 = vld [vmem:[#allocation10 + $0x28] sm:$0xff]
    %v2221 = vld [vmem:[#allocation10 + $0x30] sm:$0xff]
    %v2222 = vld [vmem:[#allocation10 + $0x38] sm:$0xff]
    %v2223 = vld [vmem:[#allocation10 + $0x40] sm:$0xff]
    %v2224 = vld [vmem:[#allocation10 + $0x48] sm:$0xff]
    %v2225 = vld [vmem:[#allocation10 + $0x50] sm:$0xff]
    %v2226 = vld [vmem:[#allocation10 + $0x58] sm:$0xff]
    %v2227 = vld [vmem:[#allocation10 + $0x60] sm:$0xff]
    %v2228 = vld [vmem:[#allocation10 + $0x68] sm:$0xff]
    %v2229 = vld [vmem:[#allocation10 + $0x70] sm:$0xff]
    %v2230 = vld [vmem:[#allocation10 + $0x78] sm:$0xff]
    %v2231 = vld [vmem:[#allocation10 + $0x80] sm:$0xff]
    %v2232 = vld [vmem:[#allocation10 + $0x88] sm:$0xff]
    %v2233 = vld [vmem:[#allocation10 + $0x90] sm:$0xff]
    %v2234 = vld [vmem:[#allocation10 + $0x98] sm:$0xff]
    %v2235 = vld [vmem:[#allocation10 + $0xa0] sm:$0xff]
    %v2236 = vld [vmem:[#allocation10 + $0xa8] sm:$0xff]
    %v2237 = vld [vmem:[#allocation10 + $0xb0] sm:$0xff]
    %v2238 = vld [vmem:[#allocation10 + $0xb8] sm:$0xff]
    %v2239 = vld [vmem:[#allocation10 + $0xc0] sm:$0xff]
    %v2240 = vld [vmem:[#allocation10 + $0xc8] sm:$0xff]
    %v2241 = vld [vmem:[#allocation10 + $0xd0] sm:$0xff]
    %v2242 = vld [vmem:[#allocation10 + $0xd8] sm:$0xff]
    %v2243 = vld [vmem:[#allocation10 + $0xe0] sm:$0xff]
    %v2244 = vld [vmem:[#allocation10 + $0xe8] sm:$0xff]
    %v2245 = vld [vmem:[#allocation10 + $0xf0] sm:$0xff]
    %v2246 = vld [vmem:[#allocation10 + $0xf8] sm:$0xff]
    %v2247 = vld [vmem:[#allocation10 + $0x100] sm:$0xff]
    %v2248 = vld [vmem:[#allocation10 + $0x108] sm:$0xff]
    %v2249 = vld [vmem:[#allocation10 + $0x110] sm:$0xff]
    %v2250 = vld [vmem:[#allocation10 + $0x118] sm:$0xff]
    %v2251 = vld [vmem:[#allocation10 + $0x120] sm:$0xff]
    %v2252 = vld [vmem:[#allocation10 + $0x128] sm:$0xff]
    %v2253 = vld [vmem:[#allocation10 + $0x130] sm:$0xff]
    %v2254 = vld [vmem:[#allocation10 + $0x138] sm:$0xff]
    %v2255 = vld [vmem:[#allocation10 + $0x140] sm:$0xff]
    %v2256 = vld [vmem:[#allocation10 + $0x148] sm:$0xff]
    %v2257 = vld [vmem:[#allocation10 + $0x150] sm:$0xff]
    %v2258 = vld [vmem:[#allocation10 + $0x158] sm:$0xff]
    %v2259 = vld [vmem:[#allocation10 + $0x160] sm:$0xff]
    %v2260 = vld [vmem:[#allocation10 + $0x168] sm:$0xff]
    %v2261 = vld [vmem:[#allocation10 + $0x170] sm:$0xff]
    %v2262 = vld [vmem:[#allocation10 + $0x178] sm:$0xff]
    %v2263 = vld [vmem:[#allocation10 + $0x180] sm:$0xff]
    %v2264 = vld [vmem:[#allocation10 + $0x188] sm:$0xff]
    %v2265 = vld [vmem:[#allocation10 + $0x190] sm:$0xff]
    %v2266 = vld [vmem:[#allocation10 + $0x198] sm:$0xff]
    %v2267 = vld [vmem:[#allocation10 + $0x1a0] sm:$0xff]
    %v2268 = vld [vmem:[#allocation10 + $0x1a8] sm:$0xff]
    %v2269 = vld [vmem:[#allocation10 + $0x1b0] sm:$0xff]
    %v2270 = vld [vmem:[#allocation10 + $0x1b8] sm:$0xff]
    %v2271 = vld [vmem:[#allocation10 + $0x1c0] sm:$0xff]
    %v2272 = vld [vmem:[#allocation10 + $0x1c8] sm:$0xff]
    %v2273 = vld [vmem:[#allocation10 + $0x1d0] sm:$0xff]
    %v2274 = vld [vmem:[#allocation10 + $0x1d8] sm:$0xff]
    %v2275 = vld [vmem:[#allocation10 + $0x1e0] sm:$0xff]
    %v2276 = vld [vmem:[#allocation10 + $0x1e8] sm:$0xff]
    %v2277 = vld [vmem:[#allocation10 + $0x1f0] sm:$0xff]
    %v2278 = vld [vmem:[#allocation10 + $0x1f8] sm:$0xff]
    %v2279 = vld [vmem:[#allocation10 + $0x200] sm:$0xff]
    %v2280 = vld [vmem:[#allocation10 + $0x208] sm:$0xff]
    %v2281 = vld [vmem:[#allocation10 + $0x210] sm:$0xff]
    %v2282 = vld [vmem:[#allocation10 + $0x218] sm:$0xff]
    %v2283 = vld [vmem:[#allocation10 + $0x220] sm:$0xff]
    %v2284 = vld [vmem:[#allocation10 + $0x228] sm:$0xff]
    %v2285 = vld [vmem:[#allocation10 + $0x230] sm:$0xff]
    %v2286 = vld [vmem:[#allocation10 + $0x238] sm:$0xff]
    %v2287 = vld [vmem:[#allocation10 + $0x240] sm:$0xff]
    %v2288 = vld [vmem:[#allocation10 + $0x248] sm:$0xff]
    %v2289 = vld [vmem:[#allocation10 + $0x250] sm:$0xff]
    %v2290 = vld [vmem:[#allocation10 + $0x258] sm:$0xff]
    %v2291 = vld [vmem:[#allocation10 + $0x260] sm:$0xff]
    %v2292 = vld [vmem:[#allocation10 + $0x268] sm:$0xff]
    %v2293 = vld [vmem:[#allocation10 + $0x270] sm:$0xff]
    %v2294 = vld [vmem:[#allocation10 + $0x278] sm:$0xff]
    %v2295 = vld [vmem:[#allocation10 + $0x280] sm:$0xff]
    %v2296 = vld [vmem:[#allocation10 + $0x288] sm:$0xff]
    %v2297 = vld [vmem:[#allocation10 + $0x290] sm:$0xff]
    %v2298 = vld [vmem:[#allocation10 + $0x298] sm:$0xff]
    %v2299 = vld [vmem:[#allocation10 + $0x2a0] sm:$0xff]
    %v2300 = vld [vmem:[#allocation10 + $0x2a8] sm:$0xff]
    %v2301 = vld [vmem:[#allocation10 + $0x2b0] sm:$0xff]
    %v2302 = vld [vmem:[#allocation10 + $0x2b8] sm:$0xff]
    %v2303 = vld [vmem:[#allocation10 + $0x2c0] sm:$0xff]
    %v2304 = vld [vmem:[#allocation10 + $0x2c8] sm:$0xff]
    %v2305 = vld [vmem:[#allocation10 + $0x2d0] sm:$0xff]
    %v2306 = vld [vmem:[#allocation10 + $0x2d8] sm:$0xff]
    %v2307 = vld [vmem:[#allocation10 + $0x2e0] sm:$0xff]
    %v2308 = vld [vmem:[#allocation10 + $0x2e8] sm:$0xff]
    %v2309 = vld [vmem:[#allocation10 + $0x2f0] sm:$0xff]
    %v2310 = vld [vmem:[#allocation10 + $0x2f8] sm:$0xff]
    %v2311 = vld [vmem:[#allocation10 + $0x300] sm:$0xff]
    %v2312 = vld [vmem:[#allocation10 + $0x308] sm:$0xff]
    %v2313 = vld [vmem:[#allocation10 + $0x310] sm:$0xff]
    %v2314 = vld [vmem:[#allocation10 + $0x318] sm:$0xff]
    %v2315 = vld [vmem:[#allocation10 + $0x320] sm:$0xff]
    %v2316 = vld [vmem:[#allocation10 + $0x328] sm:$0xff]
    %v2317 = vld [vmem:[#allocation10 + $0x330] sm:$0xff]
    %v2318 = vld [vmem:[#allocation10 + $0x338] sm:$0xff]
    %v2319 = vld [vmem:[#allocation10 + $0x340] sm:$0xff]
    %v2320 = vld [vmem:[#allocation10 + $0x348] sm:$0xff]
    %v2321 = vld [vmem:[#allocation10 + $0x350] sm:$0xff]
    %v2322 = vld [vmem:[#allocation10 + $0x358] sm:$0xff]
    %v2323 = vld [vmem:[#allocation10 + $0x360] sm:$0xff]
    %v2324 = vld [vmem:[#allocation10 + $0x368] sm:$0xff]
    %v2325 = vld [vmem:[#allocation10 + $0x370] sm:$0xff]
    %v2326 = vld [vmem:[#allocation10 + $0x378] sm:$0xff]
    %v2327 = vld [vmem:[#allocation10 + $0x380] sm:$0xff]
    %v2328 = vld [vmem:[#allocation10 + $0x388] sm:$0xff]
    %v2329 = vld [vmem:[#allocation10 + $0x390] sm:$0xff]
    %v2330 = vld [vmem:[#allocation10 + $0x398] sm:$0xff]
    %v2331 = vld [vmem:[#allocation10 + $0x3a0] sm:$0xff]
    %v2332 = vld [vmem:[#allocation10 + $0x3a8] sm:$0xff]
    %v2333 = vld [vmem:[#allocation10 + $0x3b0] sm:$0xff]
    %v2334 = vld [vmem:[#allocation10 + $0x3b8] sm:$0xff]
    %v2335 = vld [vmem:[#allocation10 + $0x3c0] sm:$0xff]
    %v2336 = vld [vmem:[#allocation10 + $0x3c8] sm:$0xff]
    %v2337 = vld [vmem:[#allocation10 + $0x3d0] sm:$0xff]
    %v2338 = vld [vmem:[#allocation10 + $0x3d8] sm:$0xff]
    %v2339 = vld [vmem:[#allocation10 + $0x3e0] sm:$0xff]
    %v2340 = vld [vmem:[#allocation10 + $0x3e8] sm:$0xff]
    %v2341 = vld [vmem:[#allocation10 + $0x3f0] sm:$0xff]
    %v2342 = vld [vmem:[#allocation10 + $0x3f8] sm:$0xff]
    %v2343 = vld [vmem:[#allocation11] sm:$0x3]
    %v2345 = vperm.slane %v2343, 0
    %v2346 = vperm.slane %v2343, 1
    %2349 = vmatpush.msra.mxu0 %v2245
    %2350 = vmatpush.msra.mxu0 %v2243
    %2351 = vmatpush.msra.mxu0 %v2241
    %2352 = vmatpush.msra.mxu0 %v2239
    %2353 = vmatpush.msra.mxu0 %v2237
    %2354 = vmatpush.msra.mxu0 %v2235
    %2355 = vmatpush.msra.mxu0 %v2233
    %2356 = vmatpush.msra.mxu0 %v2231
    %2357 = vmatpush.msra.mxu0 %v2229
    %2358 = vmatpush.msra.mxu0 %v2227
    %2359 = vmatpush.msra.mxu0 %v2225
    %2360 = vmatpush.msra.mxu0 %v2223
    %2361 = vmatpush.msra.mxu0 %v2221
    %2362 = vmatpush.msra.mxu0 %v2219
    %2363 = vmatpush.msra.mxu0 %v2217
    %2364 = vmatpush.msra.mxu0 %v2215
    %2365 = vmatmul.f32.gmra.mxu0 %v2211
    %v2366 = vpop.f32.mrf.mxu0
    %v2367 = vadd.f32 %v2345, %v2366
    %2368 = vdwg.mxu0
    %2369 = vmatpush.msra.mxu0 %v2277
    %2370 = vmatpush.msra.mxu0 %v2275
    %2371 = vmatpush.msra.mxu0 %v2273
    %2372 = vmatpush.msra.mxu0 %v2271
    %2373 = vmatpush.msra.mxu0 %v2269
    %2374 = vmatpush.msra.mxu0 %v2267
    %2375 = vmatpush.msra.mxu0 %v2265
    %2376 = vmatpush.msra.mxu0 %v2263
    %2377 = vmatpush.msra.mxu0 %v2261
    %2378 = vmatpush.msra.mxu0 %v2259
    %2379 = vmatpush.msra.mxu0 %v2257
    %2380 = vmatpush.msra.mxu0 %v2255
    %2381 = vmatpush.msra.mxu0 %v2253
    %2382 = vmatpush.msra.mxu0 %v2251
    %2383 = vmatpush.msra.mxu0 %v2249
    %2384 = vmatpush.msra.mxu0 %v2247
    %2385 = vmatmul.f32.gmra.mxu0 %v2212
    %v2386 = vpop.f32.mrf.mxu0
    %v2387 = vadd.f32 %v2367, %v2386
    %2388 = vdwg.mxu0
    %2389 = vmatpush.msra.mxu0 %v2309
    %2390 = vmatpush.msra.mxu0 %v2307
    %2391 = vmatpush.msra.mxu0 %v2305
    %2392 = vmatpush.msra.mxu0 %v2303
    %2393 = vmatpush.msra.mxu0 %v2301
    %2394 = vmatpush.msra.mxu0 %v2299
    %2395 = vmatpush.msra.mxu0 %v2297
    %2396 = vmatpush.msra.mxu0 %v2295
    %2397 = vmatpush.msra.mxu0 %v2293
    %2398 = vmatpush.msra.mxu0 %v2291
    %2399 = vmatpush.msra.mxu0 %v2289
    %2400 = vmatpush.msra.mxu0 %v2287
    %2401 = vmatpush.msra.mxu0 %v2285
    %2402 = vmatpush.msra.mxu0 %v2283
    %2403 = vmatpush.msra.mxu0 %v2281
    %2404 = vmatpush.msra.mxu0 %v2279
    %2405 = vmatmul.f32.gmra.mxu0 %v2213
    %v2406 = vpop.f32.mrf.mxu0
    %v2407 = vadd.f32 %v2387, %v2406
    %2408 = vdwg.mxu0
    %2409 = vmatpush.msra.mxu0 %v2341
    %2410 = vmatpush.msra.mxu0 %v2339
    %2411 = vmatpush.msra.mxu0 %v2337
    %2412 = vmatpush.msra.mxu0 %v2335
    %2413 = vmatpush.msra.mxu0 %v2333
    %2414 = vmatpush.msra.mxu0 %v2331
    %2415 = vmatpush.msra.mxu0 %v2329
    %2416 = vmatpush.msra.mxu0 %v2327
    %2417 = vmatpush.msra.mxu0 %v2325
    %2418 = vmatpush.msra.mxu0 %v2323
    %2419 = vmatpush.msra.mxu0 %v2321
    %2420 = vmatpush.msra.mxu0 %v2319
    %2421 = vmatpush.msra.mxu0 %v2317
    %2422 = vmatpush.msra.mxu0 %v2315
    %2423 = vmatpush.msra.mxu0 %v2313
    %2424 = vmatpush.msra.mxu0 %v2311
    %2425 = vmatmul.f32.gmra.mxu0 %v2214
    %v2426 = vpop.f32.mrf.mxu0
    %v2427 = vadd.f32 %v2407, %v2426
    %2428 = vdwg.mxu0
    %2429 = vmatpush.msra.mxu0 %v2246
    %2430 = vmatpush.msra.mxu0 %v2244
    %2431 = vmatpush.msra.mxu0 %v2242
    %2432 = vmatpush.msra.mxu0 %v2240
    %2433 = vmatpush.msra.mxu0 %v2238
    %2434 = vmatpush.msra.mxu0 %v2236
    %2435 = vmatpush.msra.mxu0 %v2234
    %2436 = vmatpush.msra.mxu0 %v2232
    %2437 = vmatpush.msra.mxu0 %v2230
    %2438 = vmatpush.msra.mxu0 %v2228
    %2439 = vmatpush.msra.mxu0 %v2226
    %2440 = vmatpush.msra.mxu0 %v2224
    %2441 = vmatpush.msra.mxu0 %v2222
    %2442 = vmatpush.msra.mxu0 %v2220
    %2443 = vmatpush.msra.mxu0 %v2218
    %2444 = vmatpush.msra.mxu0 %v2216
    %2445 = vmatmul.f32.gmra.mxu0 %v2211
    %v2446 = vpop.f32.mrf.mxu0
    %v2447 = vadd.f32 %v2346, %v2446
    %2448 = vdwg.mxu0
    %2449 = vmatpush.msra.mxu0 %v2278
    %2450 = vmatpush.msra.mxu0 %v2276
    %2451 = vmatpush.msra.mxu0 %v2274
    %2452 = vmatpush.msra.mxu0 %v2272
    %2453 = vmatpush.msra.mxu0 %v2270
    %2454 = vmatpush.msra.mxu0 %v2268
    %2455 = vmatpush.msra.mxu0 %v2266
    %2456 = vmatpush.msra.mxu0 %v2264
    %2457 = vmatpush.msra.mxu0 %v2262
    %2458 = vmatpush.msra.mxu0 %v2260
    %2459 = vmatpush.msra.mxu0 %v2258
    %2460 = vmatpush.msra.mxu0 %v2256
    %2461 = vmatpush.msra.mxu0 %v2254
    %2462 = vmatpush.msra.mxu0 %v2252
    %2463 = vmatpush.msra.mxu0 %v2250
    %2464 = vmatpush.msra.mxu0 %v2248
    %2465 = vmatmul.f32.gmra.mxu0 %v2212
    %v2466 = vpop.f32.mrf.mxu0
    %v2467 = vadd.f32 %v2447, %v2466
    %2468 = vdwg.mxu0
    %2469 = vmatpush.msra.mxu0 %v2310
    %2470 = vmatpush.msra.mxu0 %v2308
    %2471 = vmatpush.msra.mxu0 %v2306
    %2472 = vmatpush.msra.mxu0 %v2304
    %2473 = vmatpush.msra.mxu0 %v2302
    %2474 = vmatpush.msra.mxu0 %v2300
    %2475 = vmatpush.msra.mxu0 %v2298
    %2476 = vmatpush.msra.mxu0 %v2296
    %2477 = vmatpush.msra.mxu0 %v2294
    %2478 = vmatpush.msra.mxu0 %v2292
    %2479 = vmatpush.msra.mxu0 %v2290
    %2480 = vmatpush.msra.mxu0 %v2288
    %2481 = vmatpush.msra.mxu0 %v2286
    %2482 = vmatpush.msra.mxu0 %v2284
    %2483 = vmatpush.msra.mxu0 %v2282
    %2484 = vmatpush.msra.mxu0 %v2280
    %2485 = vmatmul.f32.gmra.mxu0 %v2213
    %v2486 = vpop.f32.mrf.mxu0
    %v2487 = vadd.f32 %v2467, %v2486
    %2488 = vdwg.mxu0
    %2489 = vmatpush.msra.mxu0 %v2342
    %2490 = vmatpush.msra.mxu0 %v2340
    %2491 = vmatpush.msra.mxu0 %v2338
    %2492 = vmatpush.msra.mxu0 %v2336
    %2493 = vmatpush.msra.mxu0 %v2334
    %2494 = vmatpush.msra.mxu0 %v2332
    %2495 = vmatpush.msra.mxu0 %v2330
    %2496 = vmatpush.msra.mxu0 %v2328
    %2497 = vmatpush.msra.mxu0 %v2326
    %2498 = vmatpush.msra.mxu0 %v2324
    %2499 = vmatpush.msra.mxu0 %v2322
    %2500 = vmatpush.msra.mxu0 %v2320
    %2501 = vmatpush.msra.mxu0 %v2318
    %2502 = vmatpush.msra.mxu0 %v2316
    %2503 = vmatpush.msra.mxu0 %v2314
    %2504 = vmatpush.msra.mxu0 %v2312
    %2505 = vmatmul.f32.gmra.mxu0 %v2214
    %v2506 = vpop.f32.mrf.mxu0
    %v2507 = vadd.f32 %v2487, %v2506
    %2508 = vdwg.mxu0
    %v2509 = vmul.f32 %v2427, 0.5
    %v2510 = vmul.f32 %v2507, 0.5
    %v2511 = vmul.f32 %v2427, 0.70710677
    %v2512 = vmul.f32 %v2507, 0.70710677
    %v2513 = vmax.f32 %v2511, -4.0
    %v2514 = vmax.f32 %v2512, -4.0
    %v2515 = vmin.f32 %v2513, 4.0
    %v2516 = vmin.f32 %v2514, 4.0
    %v2517 = vmul.f32 %v2515, %v2515
    %v2518 = vmul.f32 %v2516, %v2516
    %v2519 = vmul.f32 %v2517, -2.7261424e-10
    %v2520 = vmul.f32 %v2518, -2.7261424e-10
    %v2521 = vadd.f32 %v2519, 2.7706815e-08
    %v2522 = vadd.f32 %v2520, 2.7706815e-08
    %v2523 = vmul.f32 %v2521, %v2517
    %v2524 = vmul.f32 %v2522, %v2518
    %v2525 = vadd.f32 %v2523, -2.101024e-06
    %v2526 = vadd.f32 %v2524, -2.101024e-06
    %v2527 = vmul.f32 %v2525, %v2517
    %v2528 = vmul.f32 %v2526, %v2518
    %v2529 = vadd.f32 %v2527, -5.6925062e-05
    %v2530 = vadd.f32 %v2528, -5.6925062e-05
    %v2531 = vmul.f32 %v2529, %v2517
    %v2532 = vmul.f32 %v2530, %v2518
    %v2533 = vadd.f32 %v2531, -0.00073499064
    %v2534 = vadd.f32 %v2532, -0.00073499064
    %v2535 = vmul.f32 %v2533, %v2517
    %v2536 = vmul.f32 %v2534, %v2518
    %v2537 = vadd.f32 %v2535, -0.0029546
    %v2538 = vadd.f32 %v2536, -0.0029546
    %v2539 = vmul.f32 %v2537, %v2517
    %v2540 = vmul.f32 %v2538, %v2518
    %v2541 = vadd.f32 %v2539, -0.016096033
    %v2542 = vadd.f32 %v2540, -0.016096033
    %v2543 = vmul.f32 %v2517, -1.45660715e-05
    %v2544 = vmul.f32 %v2518, -1.45660715e-05
    %v2545 = vadd.f32 %v2543, -0.00021337405
    %v2546 = vadd.f32 %v2544, -0.00021337405
    %v2547 = vmul.f32 %v2545, %v2517
    %v2548 = vmul.f32 %v2546, %v2518
    %v2549 = vadd.f32 %v2547, -0.001682827
    %v2550 = vadd.f32 %v2548, -0.001682827
    %v2551 = vmul.f32 %v2549, %v2517
    %v2552 = vmul.f32 %v2550, %v2518
    %v2553 = vadd.f32 %v2551, -0.0073733293
    %v2554 = vadd.f32 %v2552, -0.0073733293
    %v2555 = vmul.f32 %v2553, %v2517
    %v2556 = vmul.f32 %v2554, %v2518
    %v2557 = vadd.f32 %v2555, -0.014264739
    %v2558 = vadd.f32 %v2556, -0.014264739
    %v2559 = vmul.f32 %v2515, %v2541
    %v2560 = vmul.f32 %v2516, %v2542
    %v2561 = vrcp.pop %v2557
    %v2562 = vrcp.pop %v2558
    %v2563 = vmul.f32 %v2559, %v2561
    %v2564 = vmul.f32 %v2560, %v2562
    %v2565 = vadd.f32 %v2563, 1.0
    %v2566 = vadd.f32 %v2564, 1.0
    %v2567 = vmul.f32 %v2509, %v2565
    %v2568 = vmul.f32 %v2510, %v2566
    %v2569 = vld [vmem:[#allocation13] sm:$0xff]
    %v2570 = vld [vmem:[#allocation13 + $0x8] sm:$0xff]
    %v2571 = vld [vmem:[#allocation13 + $0x10] sm:$0xff]
    %v2572 = vld [vmem:[#allocation13 + $0x18] sm:$0xff]
    %v2573 = vld [vmem:[#allocation13 + $0x20] sm:$0xff]
    %v2574 = vld [vmem:[#allocation13 + $0x28] sm:$0xff]
    %v2575 = vld [vmem:[#allocation13 + $0x30] sm:$0xff]
    %v2576 = vld [vmem:[#allocation13 + $0x38] sm:$0xff]
    %v2577 = vld [vmem:[#allocation13 + $0x40] sm:$0xff]
    %v2578 = vld [vmem:[#allocation13 + $0x48] sm:$0xff]
    %v2579 = vld [vmem:[#allocation13 + $0x50] sm:$0xff]
    %v2580 = vld [vmem:[#allocation13 + $0x58] sm:$0xff]
    %v2581 = vld [vmem:[#allocation13 + $0x60] sm:$0xff]
    %v2582 = vld [vmem:[#allocation13 + $0x68] sm:$0xff]
    %v2583 = vld [vmem:[#allocation13 + $0x70] sm:$0xff]
    %v2584 = vld [vmem:[#allocation13 + $0x78] sm:$0xff]
    %v2585 = vld [vmem:[#allocation13 + $0x80] sm:$0xff]
    %v2586 = vld [vmem:[#allocation13 + $0x88] sm:$0xff]
    %v2587 = vld [vmem:[#allocation13 + $0x90] sm:$0xff]
    %v2588 = vld [vmem:[#allocation13 + $0x98] sm:$0xff]
    %v2589 = vld [vmem:[#allocation13 + $0xa0] sm:$0xff]
    %v2590 = vld [vmem:[#allocation13 + $0xa8] sm:$0xff]
    %v2591 = vld [vmem:[#allocation13 + $0xb0] sm:$0xff]
    %v2592 = vld [vmem:[#allocation13 + $0xb8] sm:$0xff]
    %v2593 = vld [vmem:[#allocation13 + $0xc0] sm:$0xff]
    %v2594 = vld [vmem:[#allocation13 + $0xc8] sm:$0xff]
    %v2595 = vld [vmem:[#allocation13 + $0xd0] sm:$0xff]
    %v2596 = vld [vmem:[#allocation13 + $0xd8] sm:$0xff]
    %v2597 = vld [vmem:[#allocation13 + $0xe0] sm:$0xff]
    %v2598 = vld [vmem:[#allocation13 + $0xe8] sm:$0xff]
    %v2599 = vld [vmem:[#allocation13 + $0xf0] sm:$0xff]
    %v2600 = vld [vmem:[#allocation13 + $0xf8] sm:$0xff]
    %v2601 = vld [vmem:[#allocation13 + $0x100] sm:$0xff]
    %v2602 = vld [vmem:[#allocation13 + $0x108] sm:$0xff]
    %v2603 = vld [vmem:[#allocation13 + $0x110] sm:$0xff]
    %v2604 = vld [vmem:[#allocation13 + $0x118] sm:$0xff]
    %v2605 = vld [vmem:[#allocation13 + $0x120] sm:$0xff]
    %v2606 = vld [vmem:[#allocation13 + $0x128] sm:$0xff]
    %v2607 = vld [vmem:[#allocation13 + $0x130] sm:$0xff]
    %v2608 = vld [vmem:[#allocation13 + $0x138] sm:$0xff]
    %v2609 = vld [vmem:[#allocation13 + $0x140] sm:$0xff]
    %v2610 = vld [vmem:[#allocation13 + $0x148] sm:$0xff]
    %v2611 = vld [vmem:[#allocation13 + $0x150] sm:$0xff]
    %v2612 = vld [vmem:[#allocation13 + $0x158] sm:$0xff]
    %v2613 = vld [vmem:[#allocation13 + $0x160] sm:$0xff]
    %v2614 = vld [vmem:[#allocation13 + $0x168] sm:$0xff]
    %v2615 = vld [vmem:[#allocation13 + $0x170] sm:$0xff]
    %v2616 = vld [vmem:[#allocation13 + $0x178] sm:$0xff]
    %v2617 = vld [vmem:[#allocation13 + $0x180] sm:$0xff]
    %v2618 = vld [vmem:[#allocation13 + $0x188] sm:$0xff]
    %v2619 = vld [vmem:[#allocation13 + $0x190] sm:$0xff]
    %v2620 = vld [vmem:[#allocation13 + $0x198] sm:$0xff]
    %v2621 = vld [vmem:[#allocation13 + $0x1a0] sm:$0xff]
    %v2622 = vld [vmem:[#allocation13 + $0x1a8] sm:$0xff]
    %v2623 = vld [vmem:[#allocation13 + $0x1b0] sm:$0xff]
    %v2624 = vld [vmem:[#allocation13 + $0x1b8] sm:$0xff]
    %v2625 = vld [vmem:[#allocation13 + $0x1c0] sm:$0xff]
    %v2626 = vld [vmem:[#allocation13 + $0x1c8] sm:$0xff]
    %v2627 = vld [vmem:[#allocation13 + $0x1d0] sm:$0xff]
    %v2628 = vld [vmem:[#allocation13 + $0x1d8] sm:$0xff]
    %v2629 = vld [vmem:[#allocation13 + $0x1e0] sm:$0xff]
    %v2630 = vld [vmem:[#allocation13 + $0x1e8] sm:$0xff]
    %v2631 = vld [vmem:[#allocation13 + $0x1f0] sm:$0xff]
    %v2632 = vld [vmem:[#allocation13 + $0x1f8] sm:$0xff]
    %v2633 = vld [vmem:[#allocation14] sm:$0x3]
    %v2635 = vperm.slane %v2633, 0
    %v2636 = vperm.slane %v2633, 1
    %2639 = vmatpush.msra.mxu0 %v2599
    %2640 = vmatpush.msra.mxu0 %v2597
    %2641 = vmatpush.msra.mxu0 %v2595
    %2642 = vmatpush.msra.mxu0 %v2593
    %2643 = vmatpush.msra.mxu0 %v2591
    %2644 = vmatpush.msra.mxu0 %v2589
    %2645 = vmatpush.msra.mxu0 %v2587
    %2646 = vmatpush.msra.mxu0 %v2585
    %2647 = vmatpush.msra.mxu0 %v2583
    %2648 = vmatpush.msra.mxu0 %v2581
    %2649 = vmatpush.msra.mxu0 %v2579
    %2650 = vmatpush.msra.mxu0 %v2577
    %2651 = vmatpush.msra.mxu0 %v2575
    %2652 = vmatpush.msra.mxu0 %v2573
    %2653 = vmatpush.msra.mxu0 %v2571
    %2654 = vmatpush.msra.mxu0 %v2569
    %2655 = vmatmul.f32.gmra.mxu0 %v2567
    %v2656 = vpop.f32.mrf.mxu0
    %v2657 = vadd.f32 %v2635, %v2656
    %2658 = vdwg.mxu0
    %2659 = vmatpush.msra.mxu0 %v2631
    %2660 = vmatpush.msra.mxu0 %v2629
    %2661 = vmatpush.msra.mxu0 %v2627
    %2662 = vmatpush.msra.mxu0 %v2625
    %2663 = vmatpush.msra.mxu0 %v2623
    %2664 = vmatpush.msra.mxu0 %v2621
    %2665 = vmatpush.msra.mxu0 %v2619
    %2666 = vmatpush.msra.mxu0 %v2617
    %2667 = vmatpush.msra.mxu0 %v2615
    %2668 = vmatpush.msra.mxu0 %v2613
    %2669 = vmatpush.msra.mxu0 %v2611
    %2670 = vmatpush.msra.mxu0 %v2609
    %2671 = vmatpush.msra.mxu0 %v2607
    %2672 = vmatpush.msra.mxu0 %v2605
    %2673 = vmatpush.msra.mxu0 %v2603
    %2674 = vmatpush.msra.mxu0 %v2601
    %2675 = vmatmul.f32.gmra.mxu0 %v2568
    %v2676 = vpop.f32.mrf.mxu0
    %v2677 = vadd.f32 %v2657, %v2676
    %2678 = vdwg.mxu0
    %2679 = vmatpush.msra.mxu0 %v2600
    %2680 = vmatpush.msra.mxu0 %v2598
    %2681 = vmatpush.msra.mxu0 %v2596
    %2682 = vmatpush.msra.mxu0 %v2594
    %2683 = vmatpush.msra.mxu0 %v2592
    %2684 = vmatpush.msra.mxu0 %v2590
    %2685 = vmatpush.msra.mxu0 %v2588
    %2686 = vmatpush.msra.mxu0 %v2586
    %2687 = vmatpush.msra.mxu0 %v2584
    %2688 = vmatpush.msra.mxu0 %v2582
    %2689 = vmatpush.msra.mxu0 %v2580
    %2690 = vmatpush.msra.mxu0 %v2578
    %2691 = vmatpush.msra.mxu0 %v2576
    %2692 = vmatpush.msra.mxu0 %v2574
    %2693 = vmatpush.msra.mxu0 %v2572
    %2694 = vmatpush.msra.mxu0 %v2570
    %2695 = vmatmul.f32.gmra.mxu0 %v2567
    %v2696 = vpop.f32.mrf.mxu0
    %v2697 = vadd.f32 %v2636, %v2696
    %2698 = vdwg.mxu0
    %2699 = vmatpush.msra.mxu0 %v2632
    %2700 = vmatpush.msra.mxu0 %v2630
    %2701 = vmatpush.msra.mxu0 %v2628
    %2702 = vmatpush.msra.mxu0 %v2626
    %2703 = vmatpush.msra.mxu0 %v2624
    %2704 = vmatpush.msra.mxu0 %v2622
    %2705 = vmatpush.msra.mxu0 %v2620
    %2706 = vmatpush.msra.mxu0 %v2618
    %2707 = vmatpush.msra.mxu0 %v2616
    %2708 = vmatpush.msra.mxu0 %v2614
    %2709 = vmatpush.msra.mxu0 %v2612
    %2710 = vmatpush.msra.mxu0 %v2610
    %2711 = vmatpush.msra.mxu0 %v2608
    %2712 = vmatpush.msra.mxu0 %v2606
    %2713 = vmatpush.msra.mxu0 %v2604
    %2714 = vmatpush.msra.mxu0 %v2602
    %2715 = vmatmul.f32.gmra.mxu0 %v2568
    %v2716 = vpop.f32.mrf.mxu0
    %v2717 = vadd.f32 %v2697, %v2716
    %2718 = vdwg.mxu0
    %v2719 = vmul.f32 %v2677, 0.5
    %v2720 = vmul.f32 %v2717, 0.5
    %v2721 = vmul.f32 %v2677, 0.70710677
    %v2722 = vmul.f32 %v2717, 0.70710677
    %v2723 = vmax.f32 %v2721, -4.0
    %v2724 = vmax.f32 %v2722, -4.0
    %v2725 = vmin.f32 %v2723, 4.0
    %v2726 = vmin.f32 %v2724, 4.0
    %v2727 = vmul.f32 %v2725, %v2725
    %v2728 = vmul.f32 %v2726, %v2726
    %v2729 = vmul.f32 %v2727, -2.7261424e-10
    %v2730 = vmul.f32 %v2728, -2.7261424e-10
    %v2731 = vadd.f32 %v2729, 2.7706815e-08
    %v2732 = vadd.f32 %v2730, 2.7706815e-08
    %v2733 = vmul.f32 %v2731, %v2727
    %v2734 = vmul.f32 %v2732, %v2728
    %v2735 = vadd.f32 %v2733, -2.101024e-06
    %v2736 = vadd.f32 %v2734, -2.101024e-06
    %v2737 = vmul.f32 %v2735, %v2727
    %v2738 = vmul.f32 %v2736, %v2728
    %v2739 = vadd.f32 %v2737, -5.6925062e-05
    %v2740 = vadd.f32 %v2738, -5.6925062e-05
    %v2741 = vmul.f32 %v2739, %v2727
    %v2742 = vmul.f32 %v2740, %v2728
    %v2743 = vadd.f32 %v2741, -0.00073499064
    %v2744 = vadd.f32 %v2742, -0.00073499064
    %v2745 = vmul.f32 %v2743, %v2727
    %v2746 = vmul.f32 %v2744, %v2728
    %v2747 = vadd.f32 %v2745, -0.0029546
    %v2748 = vadd.f32 %v2746, -0.0029546
    %v2749 = vmul.f32 %v2747, %v2727
    %v2750 = vmul.f32 %v2748, %v2728
    %v2751 = vadd.f32 %v2749, -0.016096033
    %v2752 = vadd.f32 %v2750, -0.016096033
    %v2753 = vmul.f32 %v2727, -1.45660715e-05
    %v2754 = vmul.f32 %v2728, -1.45660715e-05
    %v2755 = vadd.f32 %v2753, -0.00021337405
    %v2756 = vadd.f32 %v2754, -0.00021337405
    %v2757 = vmul.f32 %v2755, %v2727
    %v2758 = vmul.f32 %v2756, %v2728
    %v2759 = vadd.f32 %v2757, -0.001682827
    %v2760 = vadd.f32 %v2758, -0.001682827
    %v2761 = vmul.f32 %v2759, %v2727
    %v2762 = vmul.f32 %v2760, %v2728
    %v2763 = vadd.f32 %v2761, -0.0073733293
    %v2764 = vadd.f32 %v2762, -0.0073733293
    %v2765 = vmul.f32 %v2763, %v2727
    %v2766 = vmul.f32 %v2764, %v2728
    %v2767 = vadd.f32 %v2765, -0.014264739
    %v2768 = vadd.f32 %v2766, -0.014264739
    %v2769 = vmul.f32 %v2725, %v2751
    %v2770 = vmul.f32 %v2726, %v2752
    %v2771 = vrcp.pop %v2767
    %v2772 = vrcp.pop %v2768
    %v2773 = vmul.f32 %v2769, %v2771
    %v2774 = vmul.f32 %v2770, %v2772
    %v2775 = vadd.f32 %v2773, 1.0
    %v2776 = vadd.f32 %v2774, 1.0
    %v2777 = vmul.f32 %v2719, %v2775
    %v2778 = vmul.f32 %v2720, %v2776
    %v2779 = vld [vmem:[%s9] sm:$0xff]
    %v2780 = vld [vmem:[%s9 + $0x8] sm:$0xff]
    %v2781 = vld [vmem:[%s9 + $0x10] sm:$0xff]
    %v2782 = vld [vmem:[%s9 + $0x18] sm:$0xff]
    %v2783 = vld [vmem:[%s9 + $0x20] sm:$0xff]
    %v2784 = vld [vmem:[%s9 + $0x28] sm:$0xff]
    %v2785 = vld [vmem:[%s9 + $0x30] sm:$0xff]
    %v2786 = vld [vmem:[%s9 + $0x38] sm:$0xff]
    %v2787 = vld [vmem:[%s9 + $0x40] sm:$0xff]
    %v2788 = vld [vmem:[%s9 + $0x48] sm:$0xff]
    %v2789 = vld [vmem:[%s9 + $0x50] sm:$0xff]
    %v2790 = vld [vmem:[%s9 + $0x58] sm:$0xff]
    %v2791 = vld [vmem:[%s9 + $0x60] sm:$0xff]
    %v2792 = vld [vmem:[%s9 + $0x68] sm:$0xff]
    %v2793 = vld [vmem:[%s9 + $0x70] sm:$0xff]
    %v2794 = vld [vmem:[%s9 + $0x78] sm:$0xff]
    %v2795 = vld [vmem:[%s9 + $0x80] sm:$0xff]
    %v2796 = vld [vmem:[%s9 + $0x88] sm:$0xff]
    %v2797 = vld [vmem:[%s9 + $0x90] sm:$0xff]
    %v2798 = vld [vmem:[%s9 + $0x98] sm:$0xff]
    %v2799 = vld [vmem:[%s9 + $0xa0] sm:$0xff]
    %v2800 = vld [vmem:[%s9 + $0xa8] sm:$0xff]
    %v2801 = vld [vmem:[%s9 + $0xb0] sm:$0xff]
    %v2802 = vld [vmem:[%s9 + $0xb8] sm:$0xff]
    %v2803 = vld [vmem:[%s9 + $0xc0] sm:$0xff]
    %v2804 = vld [vmem:[%s9 + $0xc8] sm:$0xff]
    %v2805 = vld [vmem:[%s9 + $0xd0] sm:$0xff]
    %v2806 = vld [vmem:[%s9 + $0xd8] sm:$0xff]
    %v2807 = vld [vmem:[%s9 + $0xe0] sm:$0xff]
    %v2808 = vld [vmem:[%s9 + $0xe8] sm:$0xff]
    %v2809 = vld [vmem:[%s9 + $0xf0] sm:$0xff]
    %v2810 = vld [vmem:[%s9 + $0xf8] sm:$0xff]
    %v2811 = vld [vmem:[#allocation16] sm:$0x1]
    %v2813 = vperm.slane %v2811, 0
    %2815 = vmatpush.msra.mxu0 %v2794
    %2816 = vmatpush.msra.mxu0 %v2793
    %2817 = vmatpush.msra.mxu0 %v2792
    %2818 = vmatpush.msra.mxu0 %v2791
    %2819 = vmatpush.msra.mxu0 %v2790
    %2820 = vmatpush.msra.mxu0 %v2789
    %2821 = vmatpush.msra.mxu0 %v2788
    %2822 = vmatpush.msra.mxu0 %v2787
    %2823 = vmatpush.msra.mxu0 %v2786
    %2824 = vmatpush.msra.mxu0 %v2785
    %2825 = vmatpush.msra.mxu0 %v2784
    %2826 = vmatpush.msra.mxu0 %v2783
    %2827 = vmatpush.msra.mxu0 %v2782
    %2828 = vmatpush.msra.mxu0 %v2781
    %2829 = vmatpush.msra.mxu0 %v2780
    %2830 = vmatpush.msra.mxu0 %v2779
    %2831 = vmatmul.f32.gmra.mxu0 %v2777
    %v2832 = vpop.f32.mrf.mxu0
    %v2833 = vadd.f32 %v2813, %v2832
    %2834 = vdwg.mxu0
    %2835 = vmatpush.msra.mxu0 %v2810
    %2836 = vmatpush.msra.mxu0 %v2809
    %2837 = vmatpush.msra.mxu0 %v2808
    %2838 = vmatpush.msra.mxu0 %v2807
    %2839 = vmatpush.msra.mxu0 %v2806
    %2840 = vmatpush.msra.mxu0 %v2805
    %2841 = vmatpush.msra.mxu0 %v2804
    %2842 = vmatpush.msra.mxu0 %v2803
    %2843 = vmatpush.msra.mxu0 %v2802
    %2844 = vmatpush.msra.mxu0 %v2801
    %2845 = vmatpush.msra.mxu0 %v2800
    %2846 = vmatpush.msra.mxu0 %v2799
    %2847 = vmatpush.msra.mxu0 %v2798
    %2848 = vmatpush.msra.mxu0 %v2797
    %2849 = vmatpush.msra.mxu0 %v2796
    %2850 = vmatpush.msra.mxu0 %v2795
    %2851 = vmatmul.f32.gmra.mxu0 %v2778
    %v2852 = vpop.f32.mrf.mxu0
    %v2853 = vadd.f32 %v2833, %v2852
    %2854 = vdwg.mxu0
    %v2855 = vmul.f32 %v2853, 0.5
    %v2856 = vmul.f32 %v2853, 0.70710677
    %v2857 = vmax.f32 %v2856, -4.0
    %v2858 = vmin.f32 %v2857, 4.0
    %v2859 = vmul.f32 %v2858, %v2858
    %v2860 = vmul.f32 %v2859, -2.7261424e-10
    %v2861 = vadd.f32 %v2860, 2.7706815e-08
    %v2862 = vmul.f32 %v2861, %v2859
    %v2863 = vadd.f32 %v2862, -2.101024e-06
    %v2864 = vmul.f32 %v2863, %v2859
    %v2865 = vadd.f32 %v2864, -5.6925062e-05
    %v2866 = vmul.f32 %v2865, %v2859
    %v2867 = vadd.f32 %v2866, -0.00073499064
    %v2868 = vmul.f32 %v2867, %v2859
    %v2869 = vadd.f32 %v2868, -0.0029546
    %v2870 = vmul.f32 %v2869, %v2859
    %v2871 = vadd.f32 %v2870, -0.016096033
    %v2872 = vmul.f32 %v2859, -1.45660715e-05
    %v2873 = vadd.f32 %v2872, -0.00021337405
    %v2874 = vmul.f32 %v2873, %v2859
    %v2875 = vadd.f32 %v2874, -0.001682827
    %v2876 = vmul.f32 %v2875, %v2859
    %v2877 = vadd.f32 %v2876, -0.0073733293
    %v2878 = vmul.f32 %v2877, %v2859
    %v2879 = vadd.f32 %v2878, -0.014264739
    %v2880 = vmul.f32 %v2858, %v2871
    %v2881 = vrcp.pop %v2879
    %v2882 = vmul.f32 %v2880, %v2881
    %v2883 = vadd.f32 %v2882, 1.0
    %v2884 = vmul.f32 %v2855, %v2883
    %v2885 = vld [vmem:[#allocation17] sm:$0xff]
    %v2886 = vld [vmem:[#allocation17 + $0x8] sm:$0xff]
    %v2887 = vld [vmem:[#allocation17 + $0x10] sm:$0xff]
    %v2888 = vld [vmem:[#allocation17 + $0x18] sm:$0xff]
    %v2889 = vld [vmem:[#allocation17 + $0x20] sm:$0xff]
    %v2890 = vld [vmem:[#allocation17 + $0x28] sm:$0xff]
    %v2891 = vld [vmem:[#allocation17 + $0x30] sm:$0xff]
    %v2892 = vld [vmem:[#allocation17 + $0x38] sm:$0xff]
    %v2893 = vld [vmem:[#allocation19] sm:$0x1]
    %v2895 = vperm.slane %v2893, 0
    %vm2897 = vcmask 523264
    %v2899 = vsel %vm2897, %v2884, 0
    %2901 = vmatpush.msra.mxu0 0.0
    %2902 = vmatpush.msra.mxu0 0.0
    %2903 = vmatpush.msra.mxu0 0.0
    %2904 = vmatpush.msra.mxu0 0.0
    %2905 = vmatpush.msra.mxu0 0.0
    %2906 = vmatpush.msra.mxu0 0.0
    %2907 = vmatpush.msra.mxu0 0.0
    %2908 = vmatpush.msra.mxu0 0.0
    %2909 = vmatpush.msra.mxu0 %v2892
    %2910 = vmatpush.msra.mxu0 %v2891
    %2911 = vmatpush.msra.mxu0 %v2890
    %2912 = vmatpush.msra.mxu0 %v2889
    %2913 = vmatpush.msra.mxu0 %v2888
    %2914 = vmatpush.msra.mxu0 %v2887
    %2915 = vmatpush.msra.mxu0 %v2886
    %2916 = vmatpush.msra.mxu0 %v2885
    %2917 = vmatmul.f32.gmra.mxu0 %v2899
    %v2918 = vpop.f32.mrf.mxu0
    %v2919 = vadd.f32 %v2895, %v2918
    %2920 = vdwg.mxu0
    %2921 = vst [vmem:[#allocation20] sm:$0x3] %v2919
    // Predicated region
    $region98: #{encoder_forward.1} parent=1 // pred_check
      _
    $region99: #{encoder_forward.1} parent=1 // pred_check_branch
      %2923 = sbr.rel (0) target = $region101
    $region100: #{encoder_forward.1} parent=1 // pred_region
      %2925 = vsyncadd [#allocation4], 0
      %s2927 = sshll.u32 [#allocation20], 4
      %s2928 = int_to_ptr.vmem [resolvable:$true] %s2927
      %s2929 = sshll.u32 %s13, 4
      %s2930 = int_to_ptr.hbm [resolvable:$true] %s2929
      %2932 = dma.vmem_to_hbm [thread:$0]  %s2928, 32, %s2930, [#allocation4]
    $region101: #{encoder_forward.1} parent=1 // pred_fallthru
      _
    // Predicated region
    $region102: #{encoder_forward.1} parent=1 // pred_check
      _
    $region103: #{encoder_forward.1} parent=1 // pred_check_branch
      %2934 = sbr.rel (0) target = $region105
    $region104: #{encoder_forward.1} parent=1 // pred_region
      %2936 = dma.done [#allocation4], 32
    $region105: #{encoder_forward.1} parent=1 // pred_fallthru
      _
    %2937 = vsyncpa [#allocation3], 1
    %2938 = vsyncpa [#allocation6], 1
    %2939 = vsyncpa [#allocation9], 1
    %2940 = vsyncpa [#allocation12], 1
    %2941 = vsyncpa [#allocation15], 1
    %2942 = vsyncpa [#allocation18], 1
    %2943 = vsyncpa [#allocation4], 1

</llo_original>
